<compile_context>
chip_gen: v7x
topology: tpu7x:2x2x1
jax: 0.10.0
libtpu: 0.0.40
codegen_flags: <defaults>
</compile_context>

<pallas_src>
import functools

import jax
import jax.numpy as jnp
from jax import lax
from jax.experimental import pallas as pl
from jax.experimental.pallas import tpu as pltpu

_BN_EPS = 1e-5


def _pick_row_tile(m):
    for cand in (256, 128):
        if m > cand and m % cand == 0:
            return cand
    return m


# ----------------------------------------------------------------------------
# Kernel: y = act(x @ w + b)   (row-tiled, bf16 MXU inputs, f32 accumulate)
# ----------------------------------------------------------------------------
def _matmul_bias_kernel(x_ref, w_ref, b_ref, o_ref, *, activation):
    acc = jnp.dot(x_ref[...], w_ref[...], preferred_element_type=jnp.float32)
    acc = acc + b_ref[...]
    if activation == "relu":
        acc = jnp.maximum(acc, 0.0)
    elif activation == "tanh":
        acc = jnp.tanh(acc)
    o_ref[...] = acc.astype(o_ref.dtype)


def matmul_bias(x, w, b, activation="none", out_dtype=jnp.float32):
    M, K = x.shape
    _, N = w.shape
    tm = _pick_row_tile(M)
    kernel = functools.partial(_matmul_bias_kernel, activation=activation)
    return pl.pallas_call(
        kernel,
        out_shape=jax.ShapeDtypeStruct((M, N), out_dtype),
        grid=(M // tm,),
        in_specs=[
            pl.BlockSpec((tm, K), lambda i: (i, 0)),
            pl.BlockSpec((K, N), lambda i: (0, 0)),
            pl.BlockSpec((1, N), lambda i: (0, 0)),
        ],
        out_specs=pl.BlockSpec((tm, N), lambda i: (i, 0)),
        compiler_params=pltpu.CompilerParams(dimension_semantics=("parallel",)),
    )(x.astype(jnp.bfloat16), w.astype(jnp.bfloat16),
      b.reshape(1, N).astype(jnp.float32))


# ----------------------------------------------------------------------------
# Kernel: fused conv-as-matmul + bias + BatchNorm(train) + ReLU
# ----------------------------------------------------------------------------
def _matmul_bn_relu_kernel(x_ref, w_ref, b_ref, g_ref, be_ref, o_ref):
    acc = jnp.dot(x_ref[...], w_ref[...], preferred_element_type=jnp.float32)
    acc = acc + b_ref[...]
    mean = jnp.mean(acc, axis=0, keepdims=True)
    var = jnp.mean(jnp.square(acc - mean), axis=0, keepdims=True)
    scale = g_ref[...] * lax.rsqrt(var + _BN_EPS)
    shift = be_ref[...] - mean * scale
    o_ref[...] = jnp.maximum(acc * scale + shift, 0.0).astype(o_ref.dtype)


def matmul_bn_relu(x, w, b, gamma, beta, out_dtype=jnp.bfloat16):
    # Single full block: BN batch stats need every row of this layer.
    M, K = x.shape
    _, N = w.shape
    return pl.pallas_call(
        _matmul_bn_relu_kernel,
        out_shape=jax.ShapeDtypeStruct((M, N), out_dtype),
        grid=(1,),
        in_specs=[
            pl.BlockSpec((M, K), lambda i: (0, 0)),
            pl.BlockSpec((K, N), lambda i: (0, 0)),
            pl.BlockSpec((1, N), lambda i: (0, 0)),
            pl.BlockSpec((1, N), lambda i: (0, 0)),
            pl.BlockSpec((1, N), lambda i: (0, 0)),
        ],
        out_specs=pl.BlockSpec((M, N), lambda i: (0, 0)),
    )(x.astype(jnp.bfloat16), w.astype(jnp.bfloat16),
      b.reshape(1, N).astype(jnp.float32),
      gamma.reshape(1, N).astype(jnp.float32),
      beta.reshape(1, N).astype(jnp.float32))


# ----------------------------------------------------------------------------
# Kernel: fused sub-pixel ConvTranspose (4 output phases) + bias + BN + ReLU,
# optionally followed by a fused 1x1 conv + tanh (final decoder layer).
# ----------------------------------------------------------------------------
def _convt_bn_relu_kernel(x_ref, w0_ref, w1_ref, w2_ref, w3_ref,
                          b_ref, g_ref, be_ref, *rest, fuse_out):
    if fuse_out:
        wo_ref, bo_ref, o_ref = rest
    else:
        (o_ref,) = rest
    xb = x_ref[...]
    bias = b_ref[...]
    accs = []
    for wr in (w0_ref, w1_ref, w2_ref, w3_ref):
        accs.append(jnp.dot(xb, wr[...], preferred_element_type=jnp.float32) + bias)
    n_total = 4.0 * accs[0].shape[0]          # all output pixels of this layer
    mean = (jnp.sum(accs[0], axis=0, keepdims=True)
            + jnp.sum(accs[1], axis=0, keepdims=True)
            + jnp.sum(accs[2], axis=0, keepdims=True)
            + jnp.sum(accs[3], axis=0, keepdims=True)) / n_total
    var = (jnp.sum(jnp.square(accs[0] - mean), axis=0, keepdims=True)
           + jnp.sum(jnp.square(accs[1] - mean), axis=0, keepdims=True)
           + jnp.sum(jnp.square(accs[2] - mean), axis=0, keepdims=True)
           + jnp.sum(jnp.square(accs[3] - mean), axis=0, keepdims=True)) / n_total
    scale = g_ref[...] * lax.rsqrt(var + _BN_EPS)
    shift = be_ref[...] - mean * scale
    for i in range(4):
        y = jnp.maximum(accs[i] * scale + shift, 0.0)
        if fuse_out:
            y = jnp.tanh(jnp.dot(y.astype(jnp.bfloat16), wo_ref[...],
                                 preferred_element_type=jnp.float32) + bo_ref[...])
        o_ref[i, :, :] = y.astype(o_ref.dtype)


def conv_transpose_bn_relu(x_nhwc, w_t, b, gamma, beta,
                           out_w=None, out_b=None, out_dtype=jnp.bfloat16):
    """ConvTranspose2d(k=4, s=2, p=1) + BN + ReLU; w_t is torch [Cin, Cout, 4, 4].

    If out_w/out_b (torch Conv2d [3, Cout, 1, 1] weight + bias) are given, the
    final 1x1 conv + tanh is fused into the same kernel.
    """
    B, H, W, Cin = x_nhwc.shape
    Cout = w_t.shape[1]
    fuse_out = out_w is not None
    xp = jnp.pad(x_nhwc.astype(jnp.bfloat16), ((0, 0), (1, 1), (1, 1), (0, 0)))
    # 9 contiguous (unit-stride) shifted slices of the padded input.
    taps = [xp[:, r:r + H, c:c + W, :] for r in range(3) for c in range(3)]
    patches = jnp.concatenate(taps, axis=-1).reshape(B * H * W, 9 * Cin)
    # Per-phase equivalent weights (zero for the taps a phase does not use).
    w_phases = []
    for ph in range(2):
        for pw in range(2):
            wp = jnp.zeros((3, 3, Cin, Cout), jnp.float32)
            for kh in range(4):
                if kh % 2 != (ph + 1) % 2:
                    continue
                o_r = (ph + 1 - kh) // 2 + 1
                for kw in range(4):
                    if kw % 2 != (pw + 1) % 2:
                        continue
                    o_c = (pw + 1 - kw) // 2 + 1
                    wp = wp.at[o_r, o_c].set(w_t[:, :, kh, kw])
            w_phases.append(wp.reshape(9 * Cin, Cout).astype(jnp.bfloat16))
    rows = B * H * W
    C_final = 3 if fuse_out else Cout
    in_specs = [
        pl.BlockSpec((rows, 9 * Cin), lambda i: (0, 0)),
        pl.BlockSpec((9 * Cin, Cout), lambda i: (0, 0)),
        pl.BlockSpec((9 * Cin, Cout), lambda i: (0, 0)),
        pl.BlockSpec((9 * Cin, Cout), lambda i: (0, 0)),
        pl.BlockSpec((9 * Cin, Cout), lambda i: (0, 0)),
        pl.BlockSpec((1, Cout), lambda i: (0, 0)),
        pl.BlockSpec((1, Cout), lambda i: (0, 0)),
        pl.BlockSpec((1, Cout), lambda i: (0, 0)),
    ]
    args = [patches, *w_phases,
            b.reshape(1, Cout).astype(jnp.float32),
            gamma.reshape(1, Cout).astype(jnp.float32),
            beta.reshape(1, Cout).astype(jnp.float32)]
    if fuse_out:
        in_specs += [pl.BlockSpec((Cout, 3), lambda i: (0, 0)),
                     pl.BlockSpec((1, 3), lambda i: (0, 0))]
        args += [out_w.reshape(3, Cout).T.astype(jnp.bfloat16),
                 out_b.reshape(1, 3).astype(jnp.float32)]
    kernel = functools.partial(_convt_bn_relu_kernel, fuse_out=fuse_out)
    out = pl.pallas_call(
        kernel,
        out_shape=jax.ShapeDtypeStruct((4, rows, C_final), out_dtype),
        grid=(1,),
        in_specs=in_specs,
        out_specs=pl.BlockSpec((4, rows, C_final), lambda i: (0, 0, 0)),
    )(*args)
    # Interleave the 4 phases: out[ph, pw, b, oy, ox, c] -> y[b, 2oy+ph, 2ox+pw, c]
    y = out.reshape(2, 2, B, H, W, C_final)
    y = jnp.transpose(y, (2, 3, 0, 4, 1, 5)).reshape(B, 2 * H, 2 * W, C_final)
    return y


# ----------------------------------------------------------------------------
# Kernels: fused MLP heads
# ----------------------------------------------------------------------------
def _encoder_head_kernel(x_ref, w1_ref, b1_ref, wmu_ref, bmu_ref,
                         ws_ref, bs_ref, eps_ref, z_ref, kld_ref):
    h = jnp.dot(x_ref[...], w1_ref[...], preferred_element_type=jnp.float32) + b1_ref[...]
    h = jnp.maximum(h, 0.0).astype(jnp.bfloat16)
    mu = jnp.dot(h, wmu_ref[...], preferred_element_type=jnp.float32) + bmu_ref[...]
    s = jnp.dot(h, ws_ref[...], preferred_element_type=jnp.float32) + bs_ref[...]
    sigma = jnp.exp(s)
    z_ref[...] = mu + eps_ref[...] * sigma
    # log(sigma^2) == 2*s  (avoids exp-then-log overflow)
    kld_ref[...] = 0.5 * (sigma * sigma + mu * mu - 2.0 * s - 1.0)


def encoder_head(x, w1, b1, wmu, bmu, ws, bs, eps):
    Bm, K = x.shape
    HID = w1.shape[1]
    L = wmu.shape[1]
    return pl.pallas_call(
        _encoder_head_kernel,
        out_shape=(jax.ShapeDtypeStruct((Bm, L), jnp.float32),
                   jax.ShapeDtypeStruct((Bm, L), jnp.float32)),
        grid=(1,),
        in_specs=[
            pl.BlockSpec((Bm, K), lambda i: (0, 0)),
            pl.BlockSpec((K, HID), lambda i: (0, 0)),
            pl.BlockSpec((1, HID), lambda i: (0, 0)),
            pl.BlockSpec((HID, L), lambda i: (0, 0)),
            pl.BlockSpec((1, L), lambda i: (0, 0)),
            pl.BlockSpec((HID, L), lambda i: (0, 0)),
            pl.BlockSpec((1, L), lambda i: (0, 0)),
            pl.BlockSpec((Bm, L), lambda i: (0, 0)),
        ],
        out_specs=(pl.BlockSpec((Bm, L), lambda i: (0, 0)),
                   pl.BlockSpec((Bm, L), lambda i: (0, 0))),
    )(x.astype(jnp.bfloat16), w1.astype(jnp.bfloat16),
      b1.reshape(1, HID).astype(jnp.float32),
      wmu.astype(jnp.bfloat16), bmu.reshape(1, L).astype(jnp.float32),
      ws.astype(jnp.bfloat16), bs.reshape(1, L).astype(jnp.float32),
      eps.astype(jnp.float32))


def _decoder_head_kernel(z_ref, w1_ref, b1_ref, w2_ref, b2_ref, o_ref):
    h = jnp.dot(z_ref[...], w1_ref[...], preferred_element_type=jnp.float32) + b1_ref[...]
    h = jnp.maximum(h, 0.0).astype(jnp.bfloat16)
    acc = jnp.dot(h, w2_ref[...], preferred_element_type=jnp.float32) + b2_ref[...]
    o_ref[...] = acc.astype(o_ref.dtype)


def decoder_head(z, w1, b1, w2, b2, out_dtype=jnp.bfloat16):
    Bm, L = z.shape
    HID = w1.shape[1]
    N = w2.shape[1]
    return pl.pallas_call(
        _decoder_head_kernel,
        out_shape=jax.ShapeDtypeStruct((Bm, N), out_dtype),
        grid=(1,),
        in_specs=[
            pl.BlockSpec((Bm, L), lambda i: (0, 0)),
            pl.BlockSpec((L, HID), lambda i: (0, 0)),
            pl.BlockSpec((1, HID), lambda i: (0, 0)),
            pl.BlockSpec((HID, N), lambda i: (0, 0)),
            pl.BlockSpec((1, N), lambda i: (0, 0)),
        ],
        out_specs=pl.BlockSpec((Bm, N), lambda i: (0, 0)),
    )(z.astype(jnp.bfloat16), w1.astype(jnp.bfloat16),
      b1.reshape(1, HID).astype(jnp.float32),
      w2.astype(jnp.bfloat16), b2.reshape(1, N).astype(jnp.float32))


# ----------------------------------------------------------------------------
# Layer wrappers (channel-last; plain JAX here is reshape/pad/slice only)
# ----------------------------------------------------------------------------
def conv1x1(x_nhwc, w, b, activation="none", out_dtype=jnp.bfloat16):
    B, H, W, C = x_nhwc.shape
    Cout = w.shape[0]
    y = matmul_bias(x_nhwc.reshape(B * H * W, C), w.reshape(Cout, C).T, b,
                    activation, out_dtype)
    return y.reshape(B, H, W, Cout)


def conv2d_bn_relu(x_nhwc, w, b, gamma, beta):
    """Conv2d(k=3, s=2, p=1) + BN + ReLU; w is torch [Cout, Cin, 3, 3]."""
    B, H, W, Cin = x_nhwc.shape
    Cout = w.shape[0]
    Ho = (H + 2 - 3) // 2 + 1
    Wo = (W + 2 - 3) // 2 + 1
    xp = jnp.pad(x_nhwc.astype(jnp.bfloat16), ((0, 0), (1, 1), (1, 1), (0, 0)))
    taps = []
    for ki in range(3):
        for kj in range(3):
            taps.append(xp[:, ki:ki + 2 * (Ho - 1) + 1:2,
                           kj:kj + 2 * (Wo - 1) + 1:2, :])
    patches = jnp.concatenate(taps, axis=-1).reshape(B * Ho * Wo, 9 * Cin)
    w_eq = jnp.transpose(w, (2, 3, 1, 0)).reshape(9 * Cin, Cout)
    y = matmul_bn_relu(patches, w_eq, b, gamma, beta)
    return y.reshape(B, Ho, Wo, Cout)


# ----------------------------------------------------------------------------
# VAE forward (matches torch module semantics; returns (x_pred, kld))
# ----------------------------------------------------------------------------
def vae_forward(params, x, eps, *, img_size, downsamplings, latent, up_channels):
    p = params
    B = x.shape[0]
    h = jnp.transpose(x, (0, 2, 3, 1))                    # NCHW -> NHWC (once)

    # ---- Encoder ----
    h = conv1x1(h, p["enc_cnn_w"], p["enc_cnn_b"])
    for i in range(downsamplings):
        h = conv2d_bn_relu(h, p[f"enc_conv{i}_w"], p[f"enc_conv{i}_b"],
                           p[f"enc_bn{i}_g"], p[f"enc_bn{i}_b"])
    _, Hh, Wh, Ch = h.shape
    hflat = h.reshape(B, Hh * Wh * Ch)                    # NHWC-flat (free reshape)
    # Re-order fc1 rows from torch's (C,H,W) flatten order to our (H,W,C) order.
    fc1_w = (p["enc_fc1_w"].reshape(Ch, Hh, Wh, -1)
             .transpose(1, 2, 0, 3).reshape(Hh * Wh * Ch, -1))
    w2, b2 = p["enc_fc2_w"], p["enc_fc2_b"]
    # TODO(synk): torch.randn_like draws torch RNG noise; here a fixed JAX normal
    # sample `eps` is supplied (same distribution, different stream).
    z, kld = encoder_head(hflat, fc1_w, p["enc_fc1_b"],
                          w2[:, :latent], b2[:latent],
                          w2[:, latent:], b2[latent:], eps)

    # ---- Decoder ----
    c = up_channels * 2 ** downsamplings
    s0 = img_size // 2 ** downsamplings
    # Re-order fc2 output columns from torch's (c, s0, s0) unflatten order to NHWC.
    dw2 = (p["dec_fc2_w"].reshape(-1, c, s0, s0)
           .transpose(0, 2, 3, 1).reshape(-1, s0 * s0 * c))
    db2 = p["dec_fc2_b"].reshape(c, s0, s0).transpose(1, 2, 0).reshape(s0 * s0 * c)
    d = decoder_head(z, p["dec_fc1_w"], p["dec_fc1_b"], dw2, db2)
    d = d.reshape(B, s0, s0, c)                           # NHWC
    for i in range(downsamplings):
        last = (i == downsamplings - 1)
        if last:
            # Final ConvTranspose+BN+ReLU with the 1x1 Conv + Tanh fused in.
            d = conv_transpose_bn_relu(
                d, p[f"dec_convt{i}_w"], p[f"dec_convt{i}_b"],
                p[f"dec_bn{i}_g"], p[f"dec_bn{i}_b"],
                out_w=p["dec_cnn_w"], out_b=p["dec_cnn_b"],
                out_dtype=jnp.float32)
        else:
            d = conv_transpose_bn_relu(d, p[f"dec_convt{i}_w"], p[f"dec_convt{i}_b"],
                                       p[f"dec_bn{i}_g"], p[f"dec_bn{i}_b"])
    if downsamplings == 0:
        d = conv1x1(d, p["dec_cnn_w"], p["dec_cnn_b"], activation="tanh",
                    out_dtype=jnp.float32)
    x_pred = jnp.transpose(d, (0, 3, 1, 2))               # NHWC -> NCHW (once)
    return x_pred, kld


# ----------------------------------------------------------------------------
# Deterministic parameter init (shapes follow the torch module __init__)
# ----------------------------------------------------------------------------
def init_params(key, img_size, downsamplings, hidden, latent, dc, uc):
    params = {}
    keys = iter(jax.random.split(key, 64))

    def unif(shape, fan_in):
        bound = 1.0 / float(fan_in) ** 0.5
        return jax.random.uniform(next(keys), shape, jnp.float32, -bound, bound)

    # Encoder
    params["enc_cnn_w"] = unif((dc, 3, 1, 1), 3)
    params["enc_cnn_b"] = unif((dc,), 3)
    for i in range(downsamplings):
        ci = dc * 2 ** i
        params[f"enc_conv{i}_w"] = unif((2 * ci, ci, 3, 3), ci * 9)
        params[f"enc_conv{i}_b"] = unif((2 * ci,), ci * 9)
        params[f"enc_bn{i}_g"] = jnp.ones((2 * ci,), jnp.float32)
        params[f"enc_bn{i}_b"] = jnp.zeros((2 * ci,), jnp.float32)
    flat_in = dc * img_size ** 2 // 2 ** downsamplings
    params["enc_fc1_w"] = unif((flat_in, hidden), flat_in)
    params["enc_fc1_b"] = unif((hidden,), flat_in)
    params["enc_fc2_w"] = unif((hidden, 2 * latent), hidden)
    params["enc_fc2_b"] = unif((2 * latent,), hidden)

    # Decoder (hidden_size = 2 * linear_hidden_size per the torch module)
    dec_hidden = hidden * 2
    c = uc * 2 ** downsamplings
    s0 = img_size // 2 ** downsamplings
    params["dec_fc1_w"] = unif((latent, dec_hidden), latent)
    params["dec_fc1_b"] = unif((dec_hidden,), latent)
    params["dec_fc2_w"] = unif((dec_hidden, c * s0 * s0), dec_hidden)
    params["dec_fc2_b"] = unif((c * s0 * s0,), dec_hidden)
    for i in range(downsamplings):
        ci = c // 2 ** i
        params[f"dec_convt{i}_w"] = unif((ci, ci // 2, 4, 4), ci * 16)
        params[f"dec_convt{i}_b"] = unif((ci // 2,), ci * 16)
        params[f"dec_bn{i}_g"] = jnp.ones((ci // 2,), jnp.float32)
        params[f"dec_bn{i}_b"] = jnp.zeros((ci // 2,), jnp.float32)
    params["dec_cnn_w"] = unif((3, uc, 1, 1), uc)
    params["dec_cnn_b"] = unif((3,), uc)
    return params


if __name__ == "__main__":
    # Small config consistent with the module: VAE(img_size=16, downsamplings=2,
    # linear_hidden_size=32, latent_size=32, down_channels=4, up_channels=4)
    IMG, DS, HID, LAT, DC, UC = 16, 2, 32, 32, 4, 4
    B = 2

    key = jax.random.PRNGKey(0)
    pkey, xkey, nkey = jax.random.split(key, 3)
    params = init_params(pkey, IMG, DS, HID, LAT, DC, UC)
    x = jax.random.normal(xkey, (B, 3, IMG, IMG), jnp.float32)
    eps = jax.random.normal(nkey, (B, LAT), jnp.float32)

    fwd = jax.jit(functools.partial(
        vae_forward, img_size=IMG, downsamplings=DS, latent=LAT, up_channels=UC))
    x_pred, kld = fwd(params, x, eps)
    jax.block_until_ready((x_pred, kld))

    assert x_pred.shape == (B, 3, IMG, IMG), x_pred.shape
    assert kld.shape == (B, LAT), kld.shape
    assert bool(jnp.all(jnp.isfinite(x_pred))) and bool(jnp.all(jnp.isfinite(kld)))
    assert bool(jnp.all(jnp.abs(x_pred) <= 1.0))  # tanh output range
    print("KERNEL_OK")
</pallas_src>

<mosaic_0001>
module attributes {stable_mosaic.version = 11 : i64} {
  func.func @_matmul_bias_kernel(%arg0: i32, %arg1: memref<256x3xbf16, #tpu.memory_space<vmem>>, %arg2: memref<3x4xbf16, #tpu.memory_space<vmem>>, %arg3: memref<1x4xf32, #tpu.memory_space<vmem>>, %arg4: memref<256x4xbf16, #tpu.memory_space<vmem>>) attributes {dimension_semantics = [#tpu.dimension_semantics<parallel>], iteration_bounds = array<i64: 2>, scalar_prefetch = 0 : i64, scratch_operands = 0 : i64, tpu.core_type = #tpu.core_type<tc>, window_params = [{transform_indices = @transform_0, window_bounds = array<i64: 256, 3>}, {pipeline_mode = #tpu.pipeline_mode<synchronous>, transform_indices = @transform_1, window_bounds = array<i64: 3, 4>}, {pipeline_mode = #tpu.pipeline_mode<synchronous>, transform_indices = @transform_2, window_bounds = array<i64: 1, 4>}, {transform_indices = @transform_3, window_bounds = array<i64: 256, 4>}]} {
    %c0 = arith.constant 0 : index
    %c0_0 = arith.constant 0 : index
    %0 = vector.load %arg1[%c0, %c0_0] : memref<256x3xbf16, #tpu.memory_space<vmem>>, vector<256x3xbf16>
    %c0_1 = arith.constant 0 : index
    %c0_2 = arith.constant 0 : index
    %1 = vector.load %arg2[%c0_1, %c0_2] : memref<3x4xbf16, #tpu.memory_space<vmem>>, vector<3x4xbf16>
    %cst = arith.constant dense<0.000000e+00> : vector<256x4xf32>
    %2 = tpu.matmul %0, %1, %cst {dimension_numbers = #tpu.dot_dimension_numbers<[1], [0], [0], [1], [0, 0, 1, 1], [], []>} : vector<256x3xbf16>, vector<3x4xbf16>, vector<256x4xf32> -> vector<256x4xf32>
    %c0_3 = arith.constant 0 : index
    %c0_4 = arith.constant 0 : index
    %3 = vector.load %arg3[%c0_3, %c0_4] : memref<1x4xf32, #tpu.memory_space<vmem>>, vector<1x4xf32>
    %4 = vector.broadcast %3 : vector<1x4xf32> to vector<256x4xf32>
    %5 = arith.addf %2, %4 : vector<256x4xf32>
    %6 = arith.truncf %5 : vector<256x4xf32> to vector<256x4xbf16>
    %c0_5 = arith.constant 0 : index
    %c0_6 = arith.constant 0 : index
    %7 = vector.load %arg4[%c0_5, %c0_6] : memref<256x4xbf16, #tpu.memory_space<vmem>>, vector<256x4xbf16>
    tpu.vector_store %arg4[%c0_5, %c0_6], %6 {strides = array<i32>} : memref<256x4xbf16, #tpu.memory_space<vmem>>, vector<256x4xbf16>,
    return
  }
  func.func @transform_0(%arg0: i32) -> (i32, i32) {
    %c0_i32 = arith.constant 0 : i32
    %c0_i32_0 = arith.constant 0 : i32
    return %arg0, %c0_i32 : i32, i32
  }
  func.func @transform_1(%arg0: i32) -> (i32, i32) {
    %c0_i32 = arith.constant 0 : i32
    %c0_i32_0 = arith.constant 0 : i32
    %c0_i32_1 = arith.constant 0 : i32
    return %c0_i32, %c0_i32_0 : i32, i32
  }
  func.func @transform_2(%arg0: i32) -> (i32, i32) {
    %c0_i32 = arith.constant 0 : i32
    %c0_i32_0 = arith.constant 0 : i32
    %c0_i32_1 = arith.constant 0 : i32
    return %c0_i32, %c0_i32_0 : i32, i32
  }
  func.func @transform_3(%arg0: i32) -> (i32, i32) {
    %c0_i32 = arith.constant 0 : i32
    %c0_i32_0 = arith.constant 0 : i32
    return %arg0, %c0_i32 : i32, i32
  }
}

module attributes {stable_mosaic.version = 11 : i64} {
  func.func @_matmul_bn_relu_kernel(%arg0: i32, %arg1: memref<128x36xbf16, #tpu.memory_space<vmem>>, %arg2: memref<36x8xbf16, #tpu.memory_space<vmem>>, %arg3: memref<1x8xf32, #tpu.memory_space<vmem>>, %arg4: memref<1x8xf32, #tpu.memory_space<vmem>>, %arg5: memref<1x8xf32, #tpu.memory_space<vmem>>, %arg6: memref<128x8xbf16, #tpu.memory_space<vmem>>) attributes {dimension_semantics = [#tpu.dimension_semantics<arbitrary>], iteration_bounds = array<i64: 1>, scalar_prefetch = 0 : i64, scratch_operands = 0 : i64, tpu.core_type = #tpu.core_type<tc>, window_params = [{pipeline_mode = #tpu.pipeline_mode<synchronous>, transform_indices = @transform_0, window_bounds = array<i64: 128, 36>}, {pipeline_mode = #tpu.pipeline_mode<synchronous>, transform_indices = @transform_1, window_bounds = array<i64: 36, 8>}, {pipeline_mode = #tpu.pipeline_mode<synchronous>, transform_indices = @transform_2, window_bounds = array<i64: 1, 8>}, {pipeline_mode = #tpu.pipeline_mode<synchronous>, transform_indices = @transform_3, window_bounds = array<i64: 1, 8>}, {pipeline_mode = #tpu.pipeline_mode<synchronous>, transform_indices = @transform_4, window_bounds = array<i64: 1, 8>}, {pipeline_mode = #tpu.pipeline_mode<synchronous>, transform_indices = @transform_5, window_bounds = array<i64: 128, 8>}]} {
    %c0 = arith.constant 0 : index
    %c0_0 = arith.constant 0 : index
    %0 = vector.load %arg1[%c0, %c0_0] : memref<128x36xbf16, #tpu.memory_space<vmem>>, vector<128x36xbf16>
    %c0_1 = arith.constant 0 : index
    %c0_2 = arith.constant 0 : index
    %1 = vector.load %arg2[%c0_1, %c0_2] : memref<36x8xbf16, #tpu.memory_space<vmem>>, vector<36x8xbf16>
    %cst = arith.constant dense<0.000000e+00> : vector<128x8xf32>
    %2 = tpu.matmul %0, %1, %cst {dimension_numbers = #tpu.dot_dimension_numbers<[1], [0], [0], [1], [0, 0, 1, 1], [], []>} : vector<128x36xbf16>, vector<36x8xbf16>, vector<128x8xf32> -> vector<128x8xf32>
    %c0_3 = arith.constant 0 : index
    %c0_4 = arith.constant 0 : index
    %3 = vector.load %arg3[%c0_3, %c0_4] : memref<1x8xf32, #tpu.memory_space<vmem>>, vector<1x8xf32>
    %4 = vector.broadcast %3 : vector<1x8xf32> to vector<128x8xf32>
    %5 = arith.addf %2, %4 : vector<128x8xf32>
    %cst_5 = arith.constant dense<0.000000e+00> : vector<8xf32>
    %6 = vector.multi_reduction <add>, %5, %cst_5 [0] : vector<128x8xf32> to vector<8xf32>
    %7 = vector.shape_cast %6 : vector<8xf32> to vector<1x8xf32>
    %cst_6 = arith.constant 1.280000e+02 : f32
    %8 = vector.broadcast %cst_6 : f32 to vector<1x8xf32>
    %9 = arith.divf %7, %8 : vector<1x8xf32>
    %10 = vector.broadcast %9 : vector<1x8xf32> to vector<128x8xf32>
    %11 = arith.subf %5, %10 : vector<128x8xf32>
    %12 = arith.mulf %11, %11 : vector<128x8xf32>
    %cst_7 = arith.constant dense<0.000000e+00> : vector<8xf32>
    %13 = vector.multi_reduction <add>, %12, %cst_7 [0] : vector<128x8xf32> to vector<8xf32>
    %14 = vector.shape_cast %13 : vector<8xf32> to vector<1x8xf32>
    %cst_8 = arith.constant 1.280000e+02 : f32
    %15 = vector.broadcast %cst_8 : f32 to vector<1x8xf32>
    %16 = arith.divf %14, %15 : vector<1x8xf32>
    %c0_9 = arith.constant 0 : index
    %c0_10 = arith.constant 0 : index
    %17 = vector.load %arg4[%c0_9, %c0_10] : memref<1x8xf32, #tpu.memory_space<vmem>>, vector<1x8xf32>
    %cst_11 = arith.constant 9.99999974E-6 : f32
    %18 = vector.broadcast %cst_11 : f32 to vector<1x8xf32>
    %19 = arith.addf %16, %18 : vector<1x8xf32>
    %20 = math.rsqrt %19 : vector<1x8xf32>
    %21 = arith.mulf %17, %20 : vector<1x8xf32>
    %c0_12 = arith.constant 0 : index
    %c0_13 = arith.constant 0 : index
    %22 = vector.load %arg5[%c0_12, %c0_13] : memref<1x8xf32, #tpu.memory_space<vmem>>, vector<1x8xf32>
    %23 = arith.mulf %9, %21 : vector<1x8xf32>
    %24 = arith.subf %22, %23 : vector<1x8xf32>
    %25 = vector.broadcast %21 : vector<1x8xf32> to vector<128x8xf32>
    %26 = arith.mulf %5, %25 : vector<128x8xf32>
    %27 = vector.broadcast %24 : vector<1x8xf32> to vector<128x8xf32>
    %28 = arith.addf %26, %27 : vector<128x8xf32>
    %cst_14 = arith.constant 0.000000e+00 : f32
    %29 = vector.broadcast %cst_14 : f32 to vector<128x8xf32>
    %30 = arith.maximumf %28, %29 : vector<128x8xf32>
    %31 = arith.truncf %30 : vector<128x8xf32> to vector<128x8xbf16>
    %c0_15 = arith.constant 0 : index
    %c0_16 = arith.constant 0 : index
    %32 = vector.load %arg6[%c0_15, %c0_16] : memref<128x8xbf16, #tpu.memory_space<vmem>>, vector<128x8xbf16>
    tpu.vector_store %arg6[%c0_15, %c0_16], %31 {strides = array<i32>} : memref<128x8xbf16, #tpu.memory_space<vmem>>, vector<128x8xbf16>,
    return
  }
  func.func @transform_0(%arg0: i32) -> (i32, i32) {
    %c0_i32 = arith.constant 0 : i32
    %c0_i32_0 = arith.constant 0 : i32
    %c0_i32_1 = arith.constant 0 : i32
    return %c0_i32, %c0_i32_0 : i32, i32
  }
  func.func @transform_1(%arg0: i32) -> (i32, i32) {
    %c0_i32 = arith.constant 0 : i32
    %c0_i32_0 = arith.constant 0 : i32
    %c0_i32_1 = arith.constant 0 : i32
    return %c0_i32, %c0_i32_0 : i32, i32
  }
  func.func @transform_2(%arg0: i32) -> (i32, i32) {
    %c0_i32 = arith.constant 0 : i32
    %c0_i32_0 = arith.constant 0 : i32
    %c0_i32_1 = arith.constant 0 : i32
    return %c0_i32, %c0_i32_0 : i32, i32
  }
  func.func @transform_3(%arg0: i32) -> (i32, i32) {
    %c0_i32 = arith.constant 0 : i32
    %c0_i32_0 = arith.constant 0 : i32
    %c0_i32_1 = arith.constant 0 : i32
    return %c0_i32, %c0_i32_0 : i32, i32
  }
  func.func @transform_4(%arg0: i32) -> (i32, i32) {
    %c0_i32 = arith.constant 0 : i32
    %c0_i32_0 = arith.constant 0 : i32
    %c0_i32_1 = arith.constant 0 : i32
    return %c0_i32, %c0_i32_0 : i32, i32
  }
  func.func @transform_5(%arg0: i32) -> (i32, i32) {
    %c0_i32 = arith.constant 0 : i32
    %c0_i32_0 = arith.constant 0 : i32
    %c0_i32_1 = arith.constant 0 : i32
    return %c0_i32, %c0_i32_0 : i32, i32
  }
}

module attributes {stable_mosaic.version = 11 : i64} {
  func.func @_matmul_bn_relu_kernel(%arg0: i32, %arg1: memref<32x72xbf16, #tpu.memory_space<vmem>>, %arg2: memref<72x16xbf16, #tpu.memory_space<vmem>>, %arg3: memref<1x16xf32, #tpu.memory_space<vmem>>, %arg4: memref<1x16xf32, #tpu.memory_space<vmem>>, %arg5: memref<1x16xf32, #tpu.memory_space<vmem>>, %arg6: memref<32x16xbf16, #tpu.memory_space<vmem>>) attributes {dimension_semantics = [#tpu.dimension_semantics<arbitrary>], iteration_bounds = array<i64: 1>, scalar_prefetch = 0 : i64, scratch_operands = 0 : i64, tpu.core_type = #tpu.core_type<tc>, window_params = [{pipeline_mode = #tpu.pipeline_mode<synchronous>, transform_indices = @transform_0, window_bounds = array<i64: 32, 72>}, {pipeline_mode = #tpu.pipeline_mode<synchronous>, transform_indices = @transform_1, window_bounds = array<i64: 72, 16>}, {pipeline_mode = #tpu.pipeline_mode<synchronous>, transform_indices = @transform_2, window_bounds = array<i64: 1, 16>}, {pipeline_mode = #tpu.pipeline_mode<synchronous>, transform_indices = @transform_3, window_bounds = array<i64: 1, 16>}, {pipeline_mode = #tpu.pipeline_mode<synchronous>, transform_indices = @transform_4, window_bounds = array<i64: 1, 16>}, {pipeline_mode = #tpu.pipeline_mode<synchronous>, transform_indices = @transform_5, window_bounds = array<i64: 32, 16>}]} {
    %c0 = arith.constant 0 : index
    %c0_0 = arith.constant 0 : index
    %0 = vector.load %arg1[%c0, %c0_0] : memref<32x72xbf16, #tpu.memory_space<vmem>>, vector<32x72xbf16>
    %c0_1 = arith.constant 0 : index
    %c0_2 = arith.constant 0 : index
    %1 = vector.load %arg2[%c0_1, %c0_2] : memref<72x16xbf16, #tpu.memory_space<vmem>>, vector<72x16xbf16>
    %cst = arith.constant dense<0.000000e+00> : vector<32x16xf32>
    %2 = tpu.matmul %0, %1, %cst {dimension_numbers = #tpu.dot_dimension_numbers<[1], [0], [0], [1], [0, 0, 1, 1], [], []>} : vector<32x72xbf16>, vector<72x16xbf16>, vector<32x16xf32> -> vector<32x16xf32>
    %c0_3 = arith.constant 0 : index
    %c0_4 = arith.constant 0 : index
    %3 = vector.load %arg3[%c0_3, %c0_4] : memref<1x16xf32, #tpu.memory_space<vmem>>, vector<1x16xf32>
    %4 = vector.broadcast %3 : vector<1x16xf32> to vector<32x16xf32>
    %5 = arith.addf %2, %4 : vector<32x16xf32>
    %cst_5 = arith.constant dense<0.000000e+00> : vector<16xf32>
    %6 = vector.multi_reduction <add>, %5, %cst_5 [0] : vector<32x16xf32> to vector<16xf32>
    %7 = vector.shape_cast %6 : vector<16xf32> to vector<1x16xf32>
    %cst_6 = arith.constant 3.200000e+01 : f32
    %8 = vector.broadcast %cst_6 : f32 to vector<1x16xf32>
    %9 = arith.divf %7, %8 : vector<1x16xf32>
    %10 = vector.broadcast %9 : vector<1x16xf32> to vector<32x16xf32>
    %11 = arith.subf %5, %10 : vector<32x16xf32>
    %12 = arith.mulf %11, %11 : vector<32x16xf32>
    %cst_7 = arith.constant dense<0.000000e+00> : vector<16xf32>
    %13 = vector.multi_reduction <add>, %12, %cst_7 [0] : vector<32x16xf32> to vector<16xf32>
    %14 = vector.shape_cast %13 : vector<16xf32> to vector<1x16xf32>
    %cst_8 = arith.constant 3.200000e+01 : f32
    %15 = vector.broadcast %cst_8 : f32 to vector<1x16xf32>
    %16 = arith.divf %14, %15 : vector<1x16xf32>
    %c0_9 = arith.constant 0 : index
    %c0_10 = arith.constant 0 : index
    %17 = vector.load %arg4[%c0_9, %c0_10] : memref<1x16xf32, #tpu.memory_space<vmem>>, vector<1x16xf32>
    %cst_11 = arith.constant 9.99999974E-6 : f32
    %18 = vector.broadcast %cst_11 : f32 to vector<1x16xf32>
    %19 = arith.addf %16, %18 : vector<1x16xf32>
    %20 = math.rsqrt %19 : vector<1x16xf32>
    %21 = arith.mulf %17, %20 : vector<1x16xf32>
    %c0_12 = arith.constant 0 : index
    %c0_13 = arith.constant 0 : index
    %22 = vector.load %arg5[%c0_12, %c0_13] : memref<1x16xf32, #tpu.memory_space<vmem>>, vector<1x16xf32>
    %23 = arith.mulf %9, %21 : vector<1x16xf32>
    %24 = arith.subf %22, %23 : vector<1x16xf32>
    %25 = vector.broadcast %21 : vector<1x16xf32> to vector<32x16xf32>
    %26 = arith.mulf %5, %25 : vector<32x16xf32>
    %27 = vector.broadcast %24 : vector<1x16xf32> to vector<32x16xf32>
    %28 = arith.addf %26, %27 : vector<32x16xf32>
    %cst_14 = arith.constant 0.000000e+00 : f32
    %29 = vector.broadcast %cst_14 : f32 to vector<32x16xf32>
    %30 = arith.maximumf %28, %29 : vector<32x16xf32>
    %31 = arith.truncf %30 : vector<32x16xf32> to vector<32x16xbf16>
    %c0_15 = arith.constant 0 : index
    %c0_16 = arith.constant 0 : index
    %32 = vector.load %arg6[%c0_15, %c0_16] : memref<32x16xbf16, #tpu.memory_space<vmem>>, vector<32x16xbf16>
    tpu.vector_store %arg6[%c0_15, %c0_16], %31 {strides = array<i32>} : memref<32x16xbf16, #tpu.memory_space<vmem>>, vector<32x16xbf16>,
    return
  }
  func.func @transform_0(%arg0: i32) -> (i32, i32) {
    %c0_i32 = arith.constant 0 : i32
    %c0_i32_0 = arith.constant 0 : i32
    %c0_i32_1 = arith.constant 0 : i32
    return %c0_i32, %c0_i32_0 : i32, i32
  }
  func.func @transform_1(%arg0: i32) -> (i32, i32) {
    %c0_i32 = arith.constant 0 : i32
    %c0_i32_0 = arith.constant 0 : i32
    %c0_i32_1 = arith.constant 0 : i32
    return %c0_i32, %c0_i32_0 : i32, i32
  }
  func.func @transform_2(%arg0: i32) -> (i32, i32) {
    %c0_i32 = arith.constant 0 : i32
    %c0_i32_0 = arith.constant 0 : i32
    %c0_i32_1 = arith.constant 0 : i32
    return %c0_i32, %c0_i32_0 : i32, i32
  }
  func.func @transform_3(%arg0: i32) -> (i32, i32) {
    %c0_i32 = arith.constant 0 : i32
    %c0_i32_0 = arith.constant 0 : i32
    %c0_i32_1 = arith.constant 0 : i32
    return %c0_i32, %c0_i32_0 : i32, i32
  }
  func.func @transform_4(%arg0: i32) -> (i32, i32) {
    %c0_i32 = arith.constant 0 : i32
    %c0_i32_0 = arith.constant 0 : i32
    %c0_i32_1 = arith.constant 0 : i32
    return %c0_i32, %c0_i32_0 : i32, i32
  }
  func.func @transform_5(%arg0: i32) -> (i32, i32) {
    %c0_i32 = arith.constant 0 : i32
    %c0_i32_0 = arith.constant 0 : i32
    %c0_i32_1 = arith.constant 0 : i32
    return %c0_i32, %c0_i32_0 : i32, i32
  }
}

module attributes {stable_mosaic.version = 11 : i64} {
  func.func @_encoder_head_kernel(%arg0: i32, %arg1: memref<2x256xbf16, #tpu.memory_space<vmem>>, %arg2: memref<256x32xbf16, #tpu.memory_space<vmem>>, %arg3: memref<1x32xf32, #tpu.memory_space<vmem>>, %arg4: memref<32x32xbf16, #tpu.memory_space<vmem>>, %arg5: memref<1x32xf32, #tpu.memory_space<vmem>>, %arg6: memref<32x32xbf16, #tpu.memory_space<vmem>>, %arg7: memref<1x32xf32, #tpu.memory_space<vmem>>, %arg8: memref<2x32xf32, #tpu.memory_space<vmem>>, %arg9: memref<2x32xf32, #tpu.memory_space<vmem>>, %arg10: memref<2x32xf32, #tpu.memory_space<vmem>>) attributes {dimension_semantics = [#tpu.dimension_semantics<arbitrary>], iteration_bounds = array<i64: 1>, scalar_prefetch = 0 : i64, scratch_operands = 0 : i64, tpu.core_type = #tpu.core_type<tc>, window_params = [{pipeline_mode = #tpu.pipeline_mode<synchronous>, transform_indices = @transform_0, window_bounds = array<i64: 2, 256>}, {pipeline_mode = #tpu.pipeline_mode<synchronous>, transform_indices = @transform_1, window_bounds = array<i64: 256, 32>}, {pipeline_mode = #tpu.pipeline_mode<synchronous>, transform_indices = @transform_2, window_bounds = array<i64: 1, 32>}, {pipeline_mode = #tpu.pipeline_mode<synchronous>, transform_indices = @transform_3, window_bounds = array<i64: 32, 32>}, {pipeline_mode = #tpu.pipeline_mode<synchronous>, transform_indices = @transform_4, window_bounds = array<i64: 1, 32>}, {pipeline_mode = #tpu.pipeline_mode<synchronous>, transform_indices = @transform_5, window_bounds = array<i64: 32, 32>}, {pipeline_mode = #tpu.pipeline_mode<synchronous>, transform_indices = @transform_6, window_bounds = array<i64: 1, 32>}, {pipeline_mode = #tpu.pipeline_mode<synchronous>, transform_indices = @transform_7, window_bounds = array<i64: 2, 32>}, {pipeline_mode = #tpu.pipeline_mode<synchronous>, transform_indices = @transform_8, window_bounds = array<i64: 2, 32>}, {pipeline_mode = #tpu.pipeline_mode<synchronous>, transform_indices = @transform_9, window_bounds = array<i64: 2, 32>}]} {
    %c0 = arith.constant 0 : index
    %c0_0 = arith.constant 0 : index
    %0 = vector.load %arg1[%c0, %c0_0] : memref<2x256xbf16, #tpu.memory_space<vmem>>, vector<2x256xbf16>
    %c0_1 = arith.constant 0 : index
    %c0_2 = arith.constant 0 : index
    %1 = vector.load %arg2[%c0_1, %c0_2] : memref<256x32xbf16, #tpu.memory_space<vmem>>, vector<256x32xbf16>
    %cst = arith.constant dense<0.000000e+00> : vector<2x32xf32>
    %2 = tpu.matmul %0, %1, %cst {dimension_numbers = #tpu.dot_dimension_numbers<[1], [0], [0], [1], [0, 0, 1, 1], [], []>} : vector<2x256xbf16>, vector<256x32xbf16>, vector<2x32xf32> -> vector<2x32xf32>
    %c0_3 = arith.constant 0 : index
    %c0_4 = arith.constant 0 : index
    %3 = vector.load %arg3[%c0_3, %c0_4] : memref<1x32xf32, #tpu.memory_space<vmem>>, vector<1x32xf32>
    %4 = vector.broadcast %3 : vector<1x32xf32> to vector<2x32xf32>
    %5 = arith.addf %2, %4 : vector<2x32xf32>
    %cst_5 = arith.constant 0.000000e+00 : f32
    %6 = vector.broadcast %cst_5 : f32 to vector<2x32xf32>
    %7 = arith.maximumf %5, %6 : vector<2x32xf32>
    %8 = arith.truncf %7 : vector<2x32xf32> to vector<2x32xbf16>
    %c0_6 = arith.constant 0 : index
    %c0_7 = arith.constant 0 : index
    %9 = vector.load %arg4[%c0_6, %c0_7] : memref<32x32xbf16, #tpu.memory_space<vmem>>, vector<32x32xbf16>
    %cst_8 = arith.constant dense<0.000000e+00> : vector<2x32xf32>
    %10 = tpu.matmul %8, %9, %cst_8 {dimension_numbers = #tpu.dot_dimension_numbers<[1], [0], [0], [1], [0, 0, 1, 1], [], []>} : vector<2x32xbf16>, vector<32x32xbf16>, vector<2x32xf32> -> vector<2x32xf32>
    %c0_9 = arith.constant 0 : index
    %c0_10 = arith.constant 0 : index
    %11 = vector.load %arg5[%c0_9, %c0_10] : memref<1x32xf32, #tpu.memory_space<vmem>>, vector<1x32xf32>
    %12 = vector.broadcast %11 : vector<1x32xf32> to vector<2x32xf32>
    %13 = arith.addf %10, %12 : vector<2x32xf32>
    %c0_11 = arith.constant 0 : index
    %c0_12 = arith.constant 0 : index
    %14 = vector.load %arg6[%c0_11, %c0_12] : memref<32x32xbf16, #tpu.memory_space<vmem>>, vector<32x32xbf16>
    %cst_13 = arith.constant dense<0.000000e+00> : vector<2x32xf32>
    %15 = tpu.matmul %8, %14, %cst_13 {dimension_numbers = #tpu.dot_dimension_numbers<[1], [0], [0], [1], [0, 0, 1, 1], [], []>} : vector<2x32xbf16>, vector<32x32xbf16>, vector<2x32xf32> -> vector<2x32xf32>
    %c0_14 = arith.constant 0 : index
    %c0_15 = arith.constant 0 : index
    %16 = vector.load %arg7[%c0_14, %c0_15] : memref<1x32xf32, #tpu.memory_space<vmem>>, vector<1x32xf32>
    %17 = vector.broadcast %16 : vector<1x32xf32> to vector<2x32xf32>
    %18 = arith.addf %15, %17 : vector<2x32xf32>
    %19 = math.exp %18 : vector<2x32xf32>
    %c0_16 = arith.constant 0 : index
    %c0_17 = arith.constant 0 : index
    %20 = vector.load %arg8[%c0_16, %c0_17] : memref<2x32xf32, #tpu.memory_space<vmem>>, vector<2x32xf32>
    %21 = arith.mulf %20, %19 : vector<2x32xf32>
    %22 = arith.addf %13, %21 : vector<2x32xf32>
    %c0_18 = arith.constant 0 : index
    %c0_19 = arith.constant 0 : index
    %23 = vector.load %arg9[%c0_18, %c0_19] : memref<2x32xf32, #tpu.memory_space<vmem>>, vector<2x32xf32>
    tpu.vector_store %arg9[%c0_18, %c0_19], %22 {strides = array<i32>} : memref<2x32xf32, #tpu.memory_space<vmem>>, vector<2x32xf32>,
    %24 = arith.mulf %19, %19 : vector<2x32xf32>
    %25 = arith.mulf %13, %13 : vector<2x32xf32>
    %26 = arith.addf %24, %25 : vector<2x32xf32>
    %cst_20 = arith.constant 2.000000e+00 : f32
    %27 = vector.broadcast %cst_20 : f32 to vector<2x32xf32>
    %28 = arith.mulf %27, %18 : vector<2x32xf32>
    %29 = arith.subf %26, %28 : vector<2x32xf32>
    %cst_21 = arith.constant 1.000000e+00 : f32
    %30 = vector.broadcast %cst_21 : f32 to vector<2x32xf32>
    %31 = arith.subf %29, %30 : vector<2x32xf32>
    %cst_22 = arith.constant 5.000000e-01 : f32
    %32 = vector.broadcast %cst_22 : f32 to vector<2x32xf32>
    %33 = arith.mulf %32, %31 : vector<2x32xf32>
    %c0_23 = arith.constant 0 : index
    %c0_24 = arith.constant 0 : index
    %34 = vector.load %arg10[%c0_23, %c0_24] : memref<2x32xf32, #tpu.memory_space<vmem>>, vector<2x32xf32>
    tpu.vector_store %arg10[%c0_23, %c0_24], %33 {strides = array<i32>} : memref<2x32xf32, #tpu.memory_space<vmem>>, vector<2x32xf32>,
    return
  }
  func.func @transform_0(%arg0: i32) -> (i32, i32) {
    %c0_i32 = arith.constant 0 : i32
    %c0_i32_0 = arith.constant 0 : i32
    %c0_i32_1 = arith.constant 0 : i32
    return %c0_i32, %c0_i32_0 : i32, i32
  }
  func.func @transform_1(%arg0: i32) -> (i32, i32) {
    %c0_i32 = arith.constant 0 : i32
    %c0_i32_0 = arith.constant 0 : i32
    %c0_i32_1 = arith.constant 0 : i32
    return %c0_i32, %c0_i32_0 : i32, i32
  }
  func.func @transform_2(%arg0: i32) -> (i32, i32) {
    %c0_i32 = arith.constant 0 : i32
    %c0_i32_0 = arith.constant 0 : i32
    %c0_i32_1 = arith.constant 0 : i32
    return %c0_i32, %c0_i32_0 : i32, i32
  }
  func.func @transform_3(%arg0: i32) -> (i32, i32) {
    %c0_i32 = arith.constant 0 : i32
    %c0_i32_0 = arith.constant 0 : i32
    %c0_i32_1 = arith.constant 0 : i32
    return %c0_i32, %c0_i32_0 : i32, i32
  }
  func.func @transform_4(%arg0: i32) -> (i32, i32) {
    %c0_i32 = arith.constant 0 : i32
    %c0_i32_0 = arith.constant 0 : i32
    %c0_i32_1 = arith.constant 0 : i32
    return %c0_i32, %c0_i32_0 : i32, i32
  }
  func.func @transform_5(%arg0: i32) -> (i32, i32) {
    %c0_i32 = arith.constant 0 : i32
    %c0_i32_0 = arith.constant 0 : i32
    %c0_i32_1 = arith.constant 0 : i32
    return %c0_i32, %c0_i32_0 : i32, i32
  }
  func.func @transform_6(%arg0: i32) -> (i32, i32) {
    %c0_i32 = arith.constant 0 : i32
    %c0_i32_0 = arith.constant 0 : i32
    %c0_i32_1 = arith.constant 0 : i32
    return %c0_i32, %c0_i32_0 : i32, i32
  }
  func.func @transform_7(%arg0: i32) -> (i32, i32) {
    %c0_i32 = arith.constant 0 : i32
    %c0_i32_0 = arith.constant 0 : i32
    %c0_i32_1 = arith.constant 0 : i32
    return %c0_i32, %c0_i32_0 : i32, i32
  }
  func.func @transform_8(%arg0: i32) -> (i32, i32) {
    %c0_i32 = arith.constant 0 : i32
    %c0_i32_0 = arith.constant 0 : i32
    %c0_i32_1 = arith.constant 0 : i32
    return %c0_i32, %c0_i32_0 : i32, i32
  }
  func.func @transform_9(%arg0: i32) -> (i32, i32) {
    %c0_i32 = arith.constant 0 : i32
    %c0_i32_0 = arith.constant 0 : i32
    %c0_i32_1 = arith.constant 0 : i32
    return %c0_i32, %c0_i32_0 : i32, i32
  }
}

module attributes {stable_mosaic.version = 11 : i64} {
  func.func @_decoder_head_kernel(%arg0: i32, %arg1: memref<2x32xbf16, #tpu.memory_space<vmem>>, %arg2: memref<32x64xbf16, #tpu.memory_space<vmem>>, %arg3: memref<1x64xf32, #tpu.memory_space<vmem>>, %arg4: memref<64x256xbf16, #tpu.memory_space<vmem>>, %arg5: memref<1x256xf32, #tpu.memory_space<vmem>>, %arg6: memref<2x256xbf16, #tpu.memory_space<vmem>>) attributes {dimension_semantics = [#tpu.dimension_semantics<arbitrary>], iteration_bounds = array<i64: 1>, scalar_prefetch = 0 : i64, scratch_operands = 0 : i64, tpu.core_type = #tpu.core_type<tc>, window_params = [{pipeline_mode = #tpu.pipeline_mode<synchronous>, transform_indices = @transform_0, window_bounds = array<i64: 2, 32>}, {pipeline_mode = #tpu.pipeline_mode<synchronous>, transform_indices = @transform_1, window_bounds = array<i64: 32, 64>}, {pipeline_mode = #tpu.pipeline_mode<synchronous>, transform_indices = @transform_2, window_bounds = array<i64: 1, 64>}, {pipeline_mode = #tpu.pipeline_mode<synchronous>, transform_indices = @transform_3, window_bounds = array<i64: 64, 256>}, {pipeline_mode = #tpu.pipeline_mode<synchronous>, transform_indices = @transform_4, window_bounds = array<i64: 1, 256>}, {pipeline_mode = #tpu.pipeline_mode<synchronous>, transform_indices = @transform_5, window_bounds = array<i64: 2, 256>}]} {
    %c0 = arith.constant 0 : index
    %c0_0 = arith.constant 0 : index
    %0 = vector.load %arg1[%c0, %c0_0] : memref<2x32xbf16, #tpu.memory_space<vmem>>, vector<2x32xbf16>
    %c0_1 = arith.constant 0 : index
    %c0_2 = arith.constant 0 : index
    %1 = vector.load %arg2[%c0_1, %c0_2] : memref<32x64xbf16, #tpu.memory_space<vmem>>, vector<32x64xbf16>
    %cst = arith.constant dense<0.000000e+00> : vector<2x64xf32>
    %2 = tpu.matmul %0, %1, %cst {dimension_numbers = #tpu.dot_dimension_numbers<[1], [0], [0], [1], [0, 0, 1, 1], [], []>} : vector<2x32xbf16>, vector<32x64xbf16>, vector<2x64xf32> -> vector<2x64xf32>
    %c0_3 = arith.constant 0 : index
    %c0_4 = arith.constant 0 : index
    %3 = vector.load %arg3[%c0_3, %c0_4] : memref<1x64xf32, #tpu.memory_space<vmem>>, vector<1x64xf32>
    %4 = vector.broadcast %3 : vector<1x64xf32> to vector<2x64xf32>
    %5 = arith.addf %2, %4 : vector<2x64xf32>
    %cst_5 = arith.constant 0.000000e+00 : f32
    %6 = vector.broadcast %cst_5 : f32 to vector<2x64xf32>
    %7 = arith.maximumf %5, %6 : vector<2x64xf32>
    %8 = arith.truncf %7 : vector<2x64xf32> to vector<2x64xbf16>
    %c0_6 = arith.constant 0 : index
    %c0_7 = arith.constant 0 : index
    %9 = vector.load %arg4[%c0_6, %c0_7] : memref<64x256xbf16, #tpu.memory_space<vmem>>, vector<64x256xbf16>
    %cst_8 = arith.constant dense<0.000000e+00> : vector<2x256xf32>
    %10 = tpu.matmul %8, %9, %cst_8 {dimension_numbers = #tpu.dot_dimension_numbers<[1], [0], [0], [1], [0, 0, 1, 1], [], []>} : vector<2x64xbf16>, vector<64x256xbf16>, vector<2x256xf32> -> vector<2x256xf32>
    %c0_9 = arith.constant 0 : index
    %c0_10 = arith.constant 0 : index
    %11 = vector.load %arg5[%c0_9, %c0_10] : memref<1x256xf32, #tpu.memory_space<vmem>>, vector<1x256xf32>
    %12 = vector.broadcast %11 : vector<1x256xf32> to vector<2x256xf32>
    %13 = arith.addf %10, %12 : vector<2x256xf32>
    %14 = arith.truncf %13 : vector<2x256xf32> to vector<2x256xbf16>
    %c0_11 = arith.constant 0 : index
    %c0_12 = arith.constant 0 : index
    %15 = vector.load %arg6[%c0_11, %c0_12] : memref<2x256xbf16, #tpu.memory_space<vmem>>, vector<2x256xbf16>
    tpu.vector_store %arg6[%c0_11, %c0_12], %14 {strides = array<i32>} : memref<2x256xbf16, #tpu.memory_space<vmem>>, vector<2x256xbf16>,
    return
  }
  func.func @transform_0(%arg0: i32) -> (i32, i32) {
    %c0_i32 = arith.constant 0 : i32
    %c0_i32_0 = arith.constant 0 : i32
    %c0_i32_1 = arith.constant 0 : i32
    return %c0_i32, %c0_i32_0 : i32, i32
  }
  func.func @transform_1(%arg0: i32) -> (i32, i32) {
    %c0_i32 = arith.constant 0 : i32
    %c0_i32_0 = arith.constant 0 : i32
    %c0_i32_1 = arith.constant 0 : i32
    return %c0_i32, %c0_i32_0 : i32, i32
  }
  func.func @transform_2(%arg0: i32) -> (i32, i32) {
    %c0_i32 = arith.constant 0 : i32
    %c0_i32_0 = arith.constant 0 : i32
    %c0_i32_1 = arith.constant 0 : i32
    return %c0_i32, %c0_i32_0 : i32, i32
  }
  func.func @transform_3(%arg0: i32) -> (i32, i32) {
    %c0_i32 = arith.constant 0 : i32
    %c0_i32_0 = arith.constant 0 : i32
    %c0_i32_1 = arith.constant 0 : i32
    return %c0_i32, %c0_i32_0 : i32, i32
  }
  func.func @transform_4(%arg0: i32) -> (i32, i32) {
    %c0_i32 = arith.constant 0 : i32
    %c0_i32_0 = arith.constant 0 : i32
    %c0_i32_1 = arith.constant 0 : i32
    return %c0_i32, %c0_i32_0 : i32, i32
  }
  func.func @transform_5(%arg0: i32) -> (i32, i32) {
    %c0_i32 = arith.constant 0 : i32
    %c0_i32_0 = arith.constant 0 : i32
    %c0_i32_1 = arith.constant 0 : i32
    return %c0_i32, %c0_i32_0 : i32, i32
  }
}

module attributes {stable_mosaic.version = 11 : i64} {
  func.func @_convt_bn_relu_kernel(%arg0: i32, %arg1: memref<32x144xbf16, #tpu.memory_space<vmem>>, %arg2: memref<144x8xbf16, #tpu.memory_space<vmem>>, %arg3: memref<144x8xbf16, #tpu.memory_space<vmem>>, %arg4: memref<144x8xbf16, #tpu.memory_space<vmem>>, %arg5: memref<144x8xbf16, #tpu.memory_space<vmem>>, %arg6: memref<1x8xf32, #tpu.memory_space<vmem>>, %arg7: memref<1x8xf32, #tpu.memory_space<vmem>>, %arg8: memref<1x8xf32, #tpu.memory_space<vmem>>, %arg9: memref<4x32x8xbf16, #tpu.memory_space<vmem>>) attributes {dimension_semantics = [#tpu.dimension_semantics<arbitrary>], iteration_bounds = array<i64: 1>, scalar_prefetch = 0 : i64, scratch_operands = 0 : i64, tpu.core_type = #tpu.core_type<tc>, window_params = [{pipeline_mode = #tpu.pipeline_mode<synchronous>, transform_indices = @transform_0, window_bounds = array<i64: 32, 144>}, {pipeline_mode = #tpu.pipeline_mode<synchronous>, transform_indices = @transform_1, window_bounds = array<i64: 144, 8>}, {pipeline_mode = #tpu.pipeline_mode<synchronous>, transform_indices = @transform_2, window_bounds = array<i64: 144, 8>}, {pipeline_mode = #tpu.pipeline_mode<synchronous>, transform_indices = @transform_3, window_bounds = array<i64: 144, 8>}, {pipeline_mode = #tpu.pipeline_mode<synchronous>, transform_indices = @transform_4, window_bounds = array<i64: 144, 8>}, {pipeline_mode = #tpu.pipeline_mode<synchronous>, transform_indices = @transform_5, window_bounds = array<i64: 1, 8>}, {pipeline_mode = #tpu.pipeline_mode<synchronous>, transform_indices = @transform_6, window_bounds = array<i64: 1, 8>}, {pipeline_mode = #tpu.pipeline_mode<synchronous>, transform_indices = @transform_7, window_bounds = array<i64: 1, 8>}, {pipeline_mode = #tpu.pipeline_mode<synchronous>, transform_indices = @transform_8, window_bounds = array<i64: 4, 32, 8>}]} {
    %c0 = arith.constant 0 : index
    %c0_0 = arith.constant 0 : index
    %0 = vector.load %arg1[%c0, %c0_0] : memref<32x144xbf16, #tpu.memory_space<vmem>>, vector<32x144xbf16>
    %c0_1 = arith.constant 0 : index
    %c0_2 = arith.constant 0 : index
    %1 = vector.load %arg6[%c0_1, %c0_2] : memref<1x8xf32, #tpu.memory_space<vmem>>, vector<1x8xf32>
    %c0_3 = arith.constant 0 : index
    %c0_4 = arith.constant 0 : index
    %2 = vector.load %arg2[%c0_3, %c0_4] : memref<144x8xbf16, #tpu.memory_space<vmem>>, vector<144x8xbf16>
    %cst = arith.constant dense<0.000000e+00> : vector<32x8xf32>
    %3 = tpu.matmul %0, %2, %cst {dimension_numbers = #tpu.dot_dimension_numbers<[1], [0], [0], [1], [0, 0, 1, 1], [], []>} : vector<32x144xbf16>, vector<144x8xbf16>, vector<32x8xf32> -> vector<32x8xf32>
    %4 = vector.broadcast %1 : vector<1x8xf32> to vector<32x8xf32>
    %5 = arith.addf %3, %4 : vector<32x8xf32>
    %c0_5 = arith.constant 0 : index
    %c0_6 = arith.constant 0 : index
    %6 = vector.load %arg3[%c0_5, %c0_6] : memref<144x8xbf16, #tpu.memory_space<vmem>>, vector<144x8xbf16>
    %cst_7 = arith.constant dense<0.000000e+00> : vector<32x8xf32>
    %7 = tpu.matmul %0, %6, %cst_7 {dimension_numbers = #tpu.dot_dimension_numbers<[1], [0], [0], [1], [0, 0, 1, 1], [], []>} : vector<32x144xbf16>, vector<144x8xbf16>, vector<32x8xf32> -> vector<32x8xf32>
    %8 = vector.broadcast %1 : vector<1x8xf32> to vector<32x8xf32>
    %9 = arith.addf %7, %8 : vector<32x8xf32>
    %c0_8 = arith.constant 0 : index
    %c0_9 = arith.constant 0 : index
    %10 = vector.load %arg4[%c0_8, %c0_9] : memref<144x8xbf16, #tpu.memory_space<vmem>>, vector<144x8xbf16>
    %cst_10 = arith.constant dense<0.000000e+00> : vector<32x8xf32>
    %11 = tpu.matmul %0, %10, %cst_10 {dimension_numbers = #tpu.dot_dimension_numbers<[1], [0], [0], [1], [0, 0, 1, 1], [], []>} : vector<32x144xbf16>, vector<144x8xbf16>, vector<32x8xf32> -> vector<32x8xf32>
    %12 = vector.broadcast %1 : vector<1x8xf32> to vector<32x8xf32>
    %13 = arith.addf %11, %12 : vector<32x8xf32>
    %c0_11 = arith.constant 0 : index
    %c0_12 = arith.constant 0 : index
    %14 = vector.load %arg5[%c0_11, %c0_12] : memref<144x8xbf16, #tpu.memory_space<vmem>>, vector<144x8xbf16>
    %cst_13 = arith.constant dense<0.000000e+00> : vector<32x8xf32>
    %15 = tpu.matmul %0, %14, %cst_13 {dimension_numbers = #tpu.dot_dimension_numbers<[1], [0], [0], [1], [0, 0, 1, 1], [], []>} : vector<32x144xbf16>, vector<144x8xbf16>, vector<32x8xf32> -> vector<32x8xf32>
    %16 = vector.broadcast %1 : vector<1x8xf32> to vector<32x8xf32>
    %17 = arith.addf %15, %16 : vector<32x8xf32>
    %cst_14 = arith.constant dense<0.000000e+00> : vector<8xf32>
    %18 = vector.multi_reduction <add>, %5, %cst_14 [0] : vector<32x8xf32> to vector<8xf32>
    %19 = vector.shape_cast %18 : vector<8xf32> to vector<1x8xf32>
    %cst_15 = arith.constant dense<0.000000e+00> : vector<8xf32>
    %20 = vector.multi_reduction <add>, %9, %cst_15 [0] : vector<32x8xf32> to vector<8xf32>
    %21 = vector.shape_cast %20 : vector<8xf32> to vector<1x8xf32>
    %22 = arith.addf %19, %21 : vector<1x8xf32>
    %cst_16 = arith.constant dense<0.000000e+00> : vector<8xf32>
    %23 = vector.multi_reduction <add>, %13, %cst_16 [0] : vector<32x8xf32> to vector<8xf32>
    %24 = vector.shape_cast %23 : vector<8xf32> to vector<1x8xf32>
    %25 = arith.addf %22, %24 : vector<1x8xf32>
    %cst_17 = arith.constant dense<0.000000e+00> : vector<8xf32>
    %26 = vector.multi_reduction <add>, %17, %cst_17 [0] : vector<32x8xf32> to vector<8xf32>
    %27 = vector.shape_cast %26 : vector<8xf32> to vector<1x8xf32>
    %28 = arith.addf %25, %27 : vector<1x8xf32>
    %cst_18 = arith.constant 1.280000e+02 : f32
    %29 = vector.broadcast %cst_18 : f32 to vector<1x8xf32>
    %30 = arith.divf %28, %29 : vector<1x8xf32>
    %31 = vector.broadcast %30 : vector<1x8xf32> to vector<32x8xf32>
    %32 = arith.subf %5, %31 : vector<32x8xf32>
    %33 = arith.mulf %32, %32 : vector<32x8xf32>
    %cst_19 = arith.constant dense<0.000000e+00> : vector<8xf32>
    %34 = vector.multi_reduction <add>, %33, %cst_19 [0] : vector<32x8xf32> to vector<8xf32>
    %35 = vector.shape_cast %34 : vector<8xf32> to vector<1x8xf32>
    %36 = vector.broadcast %30 : vector<1x8xf32> to vector<32x8xf32>
    %37 = arith.subf %9, %36 : vector<32x8xf32>
    %38 = arith.mulf %37, %37 : vector<32x8xf32>
    %cst_20 = arith.constant dense<0.000000e+00> : vector<8xf32>
    %39 = vector.multi_reduction <add>, %38, %cst_20 [0] : vector<32x8xf32> to vector<8xf32>
    %40 = vector.shape_cast %39 : vector<8xf32> to vector<1x8xf32>
    %41 = arith.addf %35, %40 : vector<1x8xf32>
    %42 = vector.broadcast %30 : vector<1x8xf32> to vector<32x8xf32>
    %43 = arith.subf %13, %42 : vector<32x8xf32>
    %44 = arith.mulf %43, %43 : vector<32x8xf32>
    %cst_21 = arith.constant dense<0.000000e+00> : vector<8xf32>
    %45 = vector.multi_reduction <add>, %44, %cst_21 [0] : vector<32x8xf32> to vector<8xf32>
    %46 = vector.shape_cast %45 : vector<8xf32> to vector<1x8xf32>
    %47 = arith.addf %41, %46 : vector<1x8xf32>
    %48 = vector.broadcast %30 : vector<1x8xf32> to vector<32x8xf32>
    %49 = arith.subf %17, %48 : vector<32x8xf32>
    %50 = arith.mulf %49, %49 : vector<32x8xf32>
    %cst_22 = arith.constant dense<0.000000e+00> : vector<8xf32>
    %51 = vector.multi_reduction <add>, %50, %cst_22 [0] : vector<32x8xf32> to vector<8xf32>
    %52 = vector.shape_cast %51 : vector<8xf32> to vector<1x8xf32>
    %53 = arith.addf %47, %52 : vector<1x8xf32>
    %cst_23 = arith.constant 1.280000e+02 : f32
    %54 = vector.broadcast %cst_23 : f32 to vector<1x8xf32>
    %55 = arith.divf %53, %54 : vector<1x8xf32>
    %c0_24 = arith.constant 0 : index
    %c0_25 = arith.constant 0 : index
    %56 = vector.load %arg7[%c0_24, %c0_25] : memref<1x8xf32, #tpu.memory_space<vmem>>, vector<1x8xf32>
    %cst_26 = arith.constant 9.99999974E-6 : f32
    %57 = vector.broadcast %cst_26 : f32 to vector<1x8xf32>
    %58 = arith.addf %55, %57 : vector<1x8xf32>
    %59 = math.rsqrt %58 : vector<1x8xf32>
    %60 = arith.mulf %56, %59 : vector<1x8xf32>
    %c0_27 = arith.constant 0 : index
    %c0_28 = arith.constant 0 : index
    %61 = vector.load %arg8[%c0_27, %c0_28] : memref<1x8xf32, #tpu.memory_space<vmem>>, vector<1x8xf32>
    %62 = arith.mulf %30, %60 : vector<1x8xf32>
    %63 = arith.subf %61, %62 : vector<1x8xf32>
    %64 = vector.broadcast %60 : vector<1x8xf32> to vector<32x8xf32>
    %65 = arith.mulf %5, %64 : vector<32x8xf32>
    %66 = vector.broadcast %63 : vector<1x8xf32> to vector<32x8xf32>
    %67 = arith.addf %65, %66 : vector<32x8xf32>
    %cst_29 = arith.constant 0.000000e+00 : f32
    %68 = vector.broadcast %cst_29 : f32 to vector<32x8xf32>
    %69 = arith.maximumf %67, %68 : vector<32x8xf32>
    %70 = arith.truncf %69 : vector<32x8xf32> to vector<32x8xbf16>
    %c0_30 = arith.constant 0 : index
    %c0_31 = arith.constant 0 : index
    %c0_32 = arith.constant 0 : index
    %71 = vector.load %arg9[%c0_30, %c0_31, %c0_32] : memref<4x32x8xbf16, #tpu.memory_space<vmem>>, vector<1x32x8xbf16>
    %72 = vector.shape_cast %71 : vector<1x32x8xbf16> to vector<32x8xbf16>
    %73 = vector.shape_cast %70 : vector<32x8xbf16> to vector<1x32x8xbf16>
    tpu.vector_store %arg9[%c0_30, %c0_31, %c0_32], %73 {strides = array<i32>} : memref<4x32x8xbf16, #tpu.memory_space<vmem>>, vector<1x32x8xbf16>,
    %74 = vector.broadcast %60 : vector<1x8xf32> to vector<32x8xf32>
    %75 = arith.mulf %9, %74 : vector<32x8xf32>
    %76 = vector.broadcast %63 : vector<1x8xf32> to vector<32x8xf32>
    %77 = arith.addf %75, %76 : vector<32x8xf32>
    %cst_33 = arith.constant 0.000000e+00 : f32
    %78 = vector.broadcast %cst_33 : f32 to vector<32x8xf32>
    %79 = arith.maximumf %77, %78 : vector<32x8xf32>
    %80 = arith.truncf %79 : vector<32x8xf32> to vector<32x8xbf16>
    %c1 = arith.constant 1 : index
    %c0_34 = arith.constant 0 : index
    %c0_35 = arith.constant 0 : index
    %81 = vector.load %arg9[%c1, %c0_34, %c0_35] : memref<4x32x8xbf16, #tpu.memory_space<vmem>>, vector<1x32x8xbf16>
    %82 = vector.shape_cast %81 : vector<1x32x8xbf16> to vector<32x8xbf16>
    %83 = vector.shape_cast %80 : vector<32x8xbf16> to vector<1x32x8xbf16>
    tpu.vector_store %arg9[%c1, %c0_34, %c0_35], %83 {strides = array<i32>} : memref<4x32x8xbf16, #tpu.memory_space<vmem>>, vector<1x32x8xbf16>,
    %84 = vector.broadcast %60 : vector<1x8xf32> to vector<32x8xf32>
    %85 = arith.mulf %13, %84 : vector<32x8xf32>
    %86 = vector.broadcast %63 : vector<1x8xf32> to vector<32x8xf32>
    %87 = arith.addf %85, %86 : vector<32x8xf32>
    %cst_36 = arith.constant 0.000000e+00 : f32
    %88 = vector.broadcast %cst_36 : f32 to vector<32x8xf32>
    %89 = arith.maximumf %87, %88 : vector<32x8xf32>
    %90 = arith.truncf %89 : vector<32x8xf32> to vector<32x8xbf16>
    %c2 = arith.constant 2 : index
    %c0_37 = arith.constant 0 : index
    %c0_38 = arith.constant 0 : index
    %91 = vector.load %arg9[%c2, %c0_37, %c0_38] : memref<4x32x8xbf16, #tpu.memory_space<vmem>>, vector<1x32x8xbf16>
    %92 = vector.shape_cast %91 : vector<1x32x8xbf16> to vector<32x8xbf16>
    %93 = vector.shape_cast %90 : vector<32x8xbf16> to vector<1x32x8xbf16>
    tpu.vector_store %arg9[%c2, %c0_37, %c0_38], %93 {strides = array<i32>} : memref<4x32x8xbf16, #tpu.memory_space<vmem>>, vector<1x32x8xbf16>,
    %94 = vector.broadcast %60 : vector<1x8xf32> to vector<32x8xf32>
    %95 = arith.mulf %17, %94 : vector<32x8xf32>
    %96 = vector.broadcast %63 : vector<1x8xf32> to vector<32x8xf32>
    %97 = arith.addf %95, %96 : vector<32x8xf32>
    %cst_39 = arith.constant 0.000000e+00 : f32
    %98 = vector.broadcast %cst_39 : f32 to vector<32x8xf32>
    %99 = arith.maximumf %97, %98 : vector<32x8xf32>
    %100 = arith.truncf %99 : vector<32x8xf32> to vector<32x8xbf16>
    %c3 = arith.constant 3 : index
    %c0_40 = arith.constant 0 : index
    %c0_41 = arith.constant 0 : index
    %101 = vector.load %arg9[%c3, %c0_40, %c0_41] : memref<4x32x8xbf16, #tpu.memory_space<vmem>>, vector<1x32x8xbf16>
    %102 = vector.shape_cast %101 : vector<1x32x8xbf16> to vector<32x8xbf16>
    %103 = vector.shape_cast %100 : vector<32x8xbf16> to vector<1x32x8xbf16>
    tpu.vector_store %arg9[%c3, %c0_40, %c0_41], %103 {strides = array<i32>} : memref<4x32x8xbf16, #tpu.memory_space<vmem>>, vector<1x32x8xbf16>,
    return
  }
  func.func @transform_0(%arg0: i32) -> (i32, i32) {
    %c0_i32 = arith.constant 0 : i32
    %c0_i32_0 = arith.constant 0 : i32
    %c0_i32_1 = arith.constant 0 : i32
    return %c0_i32, %c0_i32_0 : i32, i32
  }
  func.func @transform_1(%arg0: i32) -> (i32, i32) {
    %c0_i32 = arith.constant 0 : i32
    %c0_i32_0 = arith.constant 0 : i32
    %c0_i32_1 = arith.constant 0 : i32
    return %c0_i32, %c0_i32_0 : i32, i32
  }
  func.func @transform_2(%arg0: i32) -> (i32, i32) {
    %c0_i32 = arith.constant 0 : i32
    %c0_i32_0 = arith.constant 0 : i32
    %c0_i32_1 = arith.constant 0 : i32
    return %c0_i32, %c0_i32_0 : i32, i32
  }
  func.func @transform_3(%arg0: i32) -> (i32, i32) {
    %c0_i32 = arith.constant 0 : i32
    %c0_i32_0 = arith.constant 0 : i32
    %c0_i32_1 = arith.constant 0 : i32
    return %c0_i32, %c0_i32_0 : i32, i32
  }
  func.func @transform_4(%arg0: i32) -> (i32, i32) {
    %c0_i32 = arith.constant 0 : i32
    %c0_i32_0 = arith.constant 0 : i32
    %c0_i32_1 = arith.constant 0 : i32
    return %c0_i32, %c0_i32_0 : i32, i32
  }
  func.func @transform_5(%arg0: i32) -> (i32, i32) {
    %c0_i32 = arith.constant 0 : i32
    %c0_i32_0 = arith.constant 0 : i32
    %c0_i32_1 = arith.constant 0 : i32
    return %c0_i32, %c0_i32_0 : i32, i32
  }
  func.func @transform_6(%arg0: i32) -> (i32, i32) {
    %c0_i32 = arith.constant 0 : i32
    %c0_i32_0 = arith.constant 0 : i32
    %c0_i32_1 = arith.constant 0 : i32
    return %c0_i32, %c0_i32_0 : i32, i32
  }
  func.func @transform_7(%arg0: i32) -> (i32, i32) {
    %c0_i32 = arith.constant 0 : i32
    %c0_i32_0 = arith.constant 0 : i32
    %c0_i32_1 = arith.constant 0 : i32
    return %c0_i32, %c0_i32_0 : i32, i32
  }
  func.func @transform_8(%arg0: i32) -> (i32, i32, i32) {
    %c0_i32 = arith.constant 0 : i32
    %c0_i32_0 = arith.constant 0 : i32
    %c0_i32_1 = arith.constant 0 : i32
    %c0_i32_2 = arith.constant 0 : i32
    return %c0_i32, %c0_i32_0, %c0_i32_1 : i32, i32, i32
  }
}

module attributes {stable_mosaic.version = 11 : i64} {
  func.func @_convt_bn_relu_kernel(%arg0: i32, %arg1: memref<128x72xbf16, #tpu.memory_space<vmem>>, %arg2: memref<72x4xbf16, #tpu.memory_space<vmem>>, %arg3: memref<72x4xbf16, #tpu.memory_space<vmem>>, %arg4: memref<72x4xbf16, #tpu.memory_space<vmem>>, %arg5: memref<72x4xbf16, #tpu.memory_space<vmem>>, %arg6: memref<1x4xf32, #tpu.memory_space<vmem>>, %arg7: memref<1x4xf32, #tpu.memory_space<vmem>>, %arg8: memref<1x4xf32, #tpu.memory_space<vmem>>, %arg9: memref<4x3xbf16, #tpu.memory_space<vmem>>, %arg10: memref<1x3xf32, #tpu.memory_space<vmem>>, %arg11: memref<4x128x3xf32, #tpu.memory_space<vmem>>) attributes {dimension_semantics = [#tpu.dimension_semantics<arbitrary>], iteration_bounds = array<i64: 1>, scalar_prefetch = 0 : i64, scratch_operands = 0 : i64, tpu.core_type = #tpu.core_type<tc>, window_params = [{pipeline_mode = #tpu.pipeline_mode<synchronous>, transform_indices = @transform_0, window_bounds = array<i64: 128, 72>}, {pipeline_mode = #tpu.pipeline_mode<synchronous>, transform_indices = @transform_1, window_bounds = array<i64: 72, 4>}, {pipeline_mode = #tpu.pipeline_mode<synchronous>, transform_indices = @transform_2, window_bounds = array<i64: 72, 4>}, {pipeline_mode = #tpu.pipeline_mode<synchronous>, transform_indices = @transform_3, window_bounds = array<i64: 72, 4>}, {pipeline_mode = #tpu.pipeline_mode<synchronous>, transform_indices = @transform_4, window_bounds = array<i64: 72, 4>}, {pipeline_mode = #tpu.pipeline_mode<synchronous>, transform_indices = @transform_5, window_bounds = array<i64: 1, 4>}, {pipeline_mode = #tpu.pipeline_mode<synchronous>, transform_indices = @transform_6, window_bounds = array<i64: 1, 4>}, {pipeline_mode = #tpu.pipeline_mode<synchronous>, transform_indices = @transform_7, window_bounds = array<i64: 1, 4>}, {pipeline_mode = #tpu.pipeline_mode<synchronous>, transform_indices = @transform_8, window_bounds = array<i64: 4, 3>}, {pipeline_mode = #tpu.pipeline_mode<synchronous>, transform_indices = @transform_9, window_bounds = array<i64: 1, 3>}, {pipeline_mode = #tpu.pipeline_mode<synchronous>, transform_indices = @transform_10, window_bounds = array<i64: 4, 128, 3>}]} {
    %c0 = arith.constant 0 : index
    %c0_0 = arith.constant 0 : index
    %0 = vector.load %arg1[%c0, %c0_0] : memref<128x72xbf16, #tpu.memory_space<vmem>>, vector<128x72xbf16>
    %c0_1 = arith.constant 0 : index
    %c0_2 = arith.constant 0 : index
    %1 = vector.load %arg6[%c0_1, %c0_2] : memref<1x4xf32, #tpu.memory_space<vmem>>, vector<1x4xf32>
    %c0_3 = arith.constant 0 : index
    %c0_4 = arith.constant 0 : index
    %2 = vector.load %arg2[%c0_3, %c0_4] : memref<72x4xbf16, #tpu.memory_space<vmem>>, vector<72x4xbf16>
    %cst = arith.constant dense<0.000000e+00> : vector<128x4xf32>
    %3 = tpu.matmul %0, %2, %cst {dimension_numbers = #tpu.dot_dimension_numbers<[1], [0], [0], [1], [0, 0, 1, 1], [], []>} : vector<128x72xbf16>, vector<72x4xbf16>, vector<128x4xf32> -> vector<128x4xf32>
    %4 = vector.broadcast %1 : vector<1x4xf32> to vector<128x4xf32>
    %5 = arith.addf %3, %4 : vector<128x4xf32>
    %c0_5 = arith.constant 0 : index
    %c0_6 = arith.constant 0 : index
    %6 = vector.load %arg3[%c0_5, %c0_6] : memref<72x4xbf16, #tpu.memory_space<vmem>>, vector<72x4xbf16>
    %cst_7 = arith.constant dense<0.000000e+00> : vector<128x4xf32>
    %7 = tpu.matmul %0, %6, %cst_7 {dimension_numbers = #tpu.dot_dimension_numbers<[1], [0], [0], [1], [0, 0, 1, 1], [], []>} : vector<128x72xbf16>, vector<72x4xbf16>, vector<128x4xf32> -> vector<128x4xf32>
    %8 = vector.broadcast %1 : vector<1x4xf32> to vector<128x4xf32>
    %9 = arith.addf %7, %8 : vector<128x4xf32>
    %c0_8 = arith.constant 0 : index
    %c0_9 = arith.constant 0 : index
    %10 = vector.load %arg4[%c0_8, %c0_9] : memref<72x4xbf16, #tpu.memory_space<vmem>>, vector<72x4xbf16>
    %cst_10 = arith.constant dense<0.000000e+00> : vector<128x4xf32>
    %11 = tpu.matmul %0, %10, %cst_10 {dimension_numbers = #tpu.dot_dimension_numbers<[1], [0], [0], [1], [0, 0, 1, 1], [], []>} : vector<128x72xbf16>, vector<72x4xbf16>, vector<128x4xf32> -> vector<128x4xf32>
    %12 = vector.broadcast %1 : vector<1x4xf32> to vector<128x4xf32>
    %13 = arith.addf %11, %12 : vector<128x4xf32>
    %c0_11 = arith.constant 0 : index
    %c0_12 = arith.constant 0 : index
    %14 = vector.load %arg5[%c0_11, %c0_12] : memref<72x4xbf16, #tpu.memory_space<vmem>>, vector<72x4xbf16>
    %cst_13 = arith.constant dense<0.000000e+00> : vector<128x4xf32>
    %15 = tpu.matmul %0, %14, %cst_13 {dimension_numbers = #tpu.dot_dimension_numbers<[1], [0], [0], [1], [0, 0, 1, 1], [], []>} : vector<128x72xbf16>, vector<72x4xbf16>, vector<128x4xf32> -> vector<128x4xf32>
    %16 = vector.broadcast %1 : vector<1x4xf32> to vector<128x4xf32>
    %17 = arith.addf %15, %16 : vector<128x4xf32>
    %cst_14 = arith.constant dense<0.000000e+00> : vector<4xf32>
    %18 = vector.multi_reduction <add>, %5, %cst_14 [0] : vector<128x4xf32> to vector<4xf32>
    %19 = vector.shape_cast %18 : vector<4xf32> to vector<1x4xf32>
    %cst_15 = arith.constant dense<0.000000e+00> : vector<4xf32>
    %20 = vector.multi_reduction <add>, %9, %cst_15 [0] : vector<128x4xf32> to vector<4xf32>
    %21 = vector.shape_cast %20 : vector<4xf32> to vector<1x4xf32>
    %22 = arith.addf %19, %21 : vector<1x4xf32>
    %cst_16 = arith.constant dense<0.000000e+00> : vector<4xf32>
    %23 = vector.multi_reduction <add>, %13, %cst_16 [0] : vector<128x4xf32> to vector<4xf32>
    %24 = vector.shape_cast %23 : vector<4xf32> to vector<1x4xf32>
    %25 = arith.addf %22, %24 : vector<1x4xf32>
    %cst_17 = arith.constant dense<0.000000e+00> : vector<4xf32>
    %26 = vector.multi_reduction <add>, %17, %cst_17 [0] : vector<128x4xf32> to vector<4xf32>
    %27 = vector.shape_cast %26 : vector<4xf32> to vector<1x4xf32>
    %28 = arith.addf %25, %27 : vector<1x4xf32>
    %cst_18 = arith.constant 5.120000e+02 : f32
    %29 = vector.broadcast %cst_18 : f32 to vector<1x4xf32>
    %30 = arith.divf %28, %29 : vector<1x4xf32>
    %31 = vector.broadcast %30 : vector<1x4xf32> to vector<128x4xf32>
    %32 = arith.subf %5, %31 : vector<128x4xf32>
    %33 = arith.mulf %32, %32 : vector<128x4xf32>
    %cst_19 = arith.constant dense<0.000000e+00> : vector<4xf32>
    %34 = vector.multi_reduction <add>, %33, %cst_19 [0] : vector<128x4xf32> to vector<4xf32>
    %35 = vector.shape_cast %34 : vector<4xf32> to vector<1x4xf32>
    %36 = vector.broadcast %30 : vector<1x4xf32> to vector<128x4xf32>
    %37 = arith.subf %9, %36 : vector<128x4xf32>
    %38 = arith.mulf %37, %37 : vector<128x4xf32>
    %cst_20 = arith.constant dense<0.000000e+00> : vector<4xf32>
    %39 = vector.multi_reduction <add>, %38, %cst_20 [0] : vector<128x4xf32> to vector<4xf32>
    %40 = vector.shape_cast %39 : vector<4xf32> to vector<1x4xf32>
    %41 = arith.addf %35, %40 : vector<1x4xf32>
    %42 = vector.broadcast %30 : vector<1x4xf32> to vector<128x4xf32>
    %43 = arith.subf %13, %42 : vector<128x4xf32>
    %44 = arith.mulf %43, %43 : vector<128x4xf32>
    %cst_21 = arith.constant dense<0.000000e+00> : vector<4xf32>
    %45 = vector.multi_reduction <add>, %44, %cst_21 [0] : vector<128x4xf32> to vector<4xf32>
    %46 = vector.shape_cast %45 : vector<4xf32> to vector<1x4xf32>
    %47 = arith.addf %41, %46 : vector<1x4xf32>
    %48 = vector.broadcast %30 : vector<1x4xf32> to vector<128x4xf32>
    %49 = arith.subf %17, %48 : vector<128x4xf32>
    %50 = arith.mulf %49, %49 : vector<128x4xf32>
    %cst_22 = arith.constant dense<0.000000e+00> : vector<4xf32>
    %51 = vector.multi_reduction <add>, %50, %cst_22 [0] : vector<128x4xf32> to vector<4xf32>
    %52 = vector.shape_cast %51 : vector<4xf32> to vector<1x4xf32>
    %53 = arith.addf %47, %52 : vector<1x4xf32>
    %cst_23 = arith.constant 5.120000e+02 : f32
    %54 = vector.broadcast %cst_23 : f32 to vector<1x4xf32>
    %55 = arith.divf %53, %54 : vector<1x4xf32>
    %c0_24 = arith.constant 0 : index
    %c0_25 = arith.constant 0 : index
    %56 = vector.load %arg7[%c0_24, %c0_25] : memref<1x4xf32, #tpu.memory_space<vmem>>, vector<1x4xf32>
    %cst_26 = arith.constant 9.99999974E-6 : f32
    %57 = vector.broadcast %cst_26 : f32 to vector<1x4xf32>
    %58 = arith.addf %55, %57 : vector<1x4xf32>
    %59 = math.rsqrt %58 : vector<1x4xf32>
    %60 = arith.mulf %56, %59 : vector<1x4xf32>
    %c0_27 = arith.constant 0 : index
    %c0_28 = arith.constant 0 : index
    %61 = vector.load %arg8[%c0_27, %c0_28] : memref<1x4xf32, #tpu.memory_space<vmem>>, vector<1x4xf32>
    %62 = arith.mulf %30, %60 : vector<1x4xf32>
    %63 = arith.subf %61, %62 : vector<1x4xf32>
    %64 = vector.broadcast %60 : vector<1x4xf32> to vector<128x4xf32>
    %65 = arith.mulf %5, %64 : vector<128x4xf32>
    %66 = vector.broadcast %63 : vector<1x4xf32> to vector<128x4xf32>
    %67 = arith.addf %65, %66 : vector<128x4xf32>
    %cst_29 = arith.constant 0.000000e+00 : f32
    %68 = vector.broadcast %cst_29 : f32 to vector<128x4xf32>
    %69 = arith.maximumf %67, %68 : vector<128x4xf32>
    %70 = arith.truncf %69 : vector<128x4xf32> to vector<128x4xbf16>
    %c0_30 = arith.constant 0 : index
    %c0_31 = arith.constant 0 : index
    %71 = vector.load %arg9[%c0_30, %c0_31] : memref<4x3xbf16, #tpu.memory_space<vmem>>, vector<4x3xbf16>
    %cst_32 = arith.constant dense<0.000000e+00> : vector<128x3xf32>
    %72 = tpu.matmul %70, %71, %cst_32 {dimension_numbers = #tpu.dot_dimension_numbers<[1], [0], [0], [1], [0, 0, 1, 1], [], []>} : vector<128x4xbf16>, vector<4x3xbf16>, vector<128x3xf32> -> vector<128x3xf32>
    %c0_33 = arith.constant 0 : index
    %c0_34 = arith.constant 0 : index
    %73 = vector.load %arg10[%c0_33, %c0_34] : memref<1x3xf32, #tpu.memory_space<vmem>>, vector<1x3xf32>
    %74 = vector.broadcast %73 : vector<1x3xf32> to vector<128x3xf32>
    %75 = arith.addf %72, %74 : vector<128x3xf32>
    %76 = math.tanh %75 : vector<128x3xf32>
    %c0_35 = arith.constant 0 : index
    %c0_36 = arith.constant 0 : index
    %c0_37 = arith.constant 0 : index
    %77 = vector.load %arg11[%c0_35, %c0_36, %c0_37] : memref<4x128x3xf32, #tpu.memory_space<vmem>>, vector<1x128x3xf32>
    %78 = vector.shape_cast %77 : vector<1x128x3xf32> to vector<128x3xf32>
    %79 = vector.shape_cast %76 : vector<128x3xf32> to vector<1x128x3xf32>
    tpu.vector_store %arg11[%c0_35, %c0_36, %c0_37], %79 {strides = array<i32>} : memref<4x128x3xf32, #tpu.memory_space<vmem>>, vector<1x128x3xf32>,
    %80 = vector.broadcast %60 : vector<1x4xf32> to vector<128x4xf32>
    %81 = arith.mulf %9, %80 : vector<128x4xf32>
    %82 = vector.broadcast %63 : vector<1x4xf32> to vector<128x4xf32>
    %83 = arith.addf %81, %82 : vector<128x4xf32>
    %cst_38 = arith.constant 0.000000e+00 : f32
    %84 = vector.broadcast %cst_38 : f32 to vector<128x4xf32>
    %85 = arith.maximumf %83, %84 : vector<128x4xf32>
    %86 = arith.truncf %85 : vector<128x4xf32> to vector<128x4xbf16>
    %c0_39 = arith.constant 0 : index
    %c0_40 = arith.constant 0 : index
    %87 = vector.load %arg9[%c0_39, %c0_40] : memref<4x3xbf16, #tpu.memory_space<vmem>>, vector<4x3xbf16>
    %cst_41 = arith.constant dense<0.000000e+00> : vector<128x3xf32>
    %88 = tpu.matmul %86, %87, %cst_41 {dimension_numbers = #tpu.dot_dimension_numbers<[1], [0], [0], [1], [0, 0, 1, 1], [], []>} : vector<128x4xbf16>, vector<4x3xbf16>, vector<128x3xf32> -> vector<128x3xf32>
    %c0_42 = arith.constant 0 : index
    %c0_43 = arith.constant 0 : index
    %89 = vector.load %arg10[%c0_42, %c0_43] : memref<1x3xf32, #tpu.memory_space<vmem>>, vector<1x3xf32>
    %90 = vector.broadcast %89 : vector<1x3xf32> to vector<128x3xf32>
    %91 = arith.addf %88, %90 : vector<128x3xf32>
    %92 = math.tanh %91 : vector<128x3xf32>
    %c1 = arith.constant 1 : index
    %c0_44 = arith.constant 0 : index
    %c0_45 = arith.constant 0 : index
    %93 = vector.load %arg11[%c1, %c0_44, %c0_45] : memref<4x128x3xf32, #tpu.memory_space<vmem>>, vector<1x128x3xf32>
    %94 = vector.shape_cast %93 : vector<1x128x3xf32> to vector<128x3xf32>
    %95 = vector.shape_cast %92 : vector<128x3xf32> to vector<1x128x3xf32>
    tpu.vector_store %arg11[%c1, %c0_44, %c0_45], %95 {strides = array<i32>} : memref<4x128x3xf32, #tpu.memory_space<vmem>>, vector<1x128x3xf32>,
    %96 = vector.broadcast %60 : vector<1x4xf32> to vector<128x4xf32>
    %97 = arith.mulf %13, %96 : vector<128x4xf32>
    %98 = vector.broadcast %63 : vector<1x4xf32> to vector<128x4xf32>
    %99 = arith.addf %97, %98 : vector<128x4xf32>
    %cst_46 = arith.constant 0.000000e+00 : f32
    %100 = vector.broadcast %cst_46 : f32 to vector<128x4xf32>
    %101 = arith.maximumf %99, %100 : vector<128x4xf32>
    %102 = arith.truncf %101 : vector<128x4xf32> to vector<128x4xbf16>
    %c0_47 = arith.constant 0 : index
    %c0_48 = arith.constant 0 : index
    %103 = vector.load %arg9[%c0_47, %c0_48] : memref<4x3xbf16, #tpu.memory_space<vmem>>, vector<4x3xbf16>
    %cst_49 = arith.constant dense<0.000000e+00> : vector<128x3xf32>
    %104 = tpu.matmul %102, %103, %cst_49 {dimension_numbers = #tpu.dot_dimension_numbers<[1], [0], [0], [1], [0, 0, 1, 1], [], []>} : vector<128x4xbf16>, vector<4x3xbf16>, vector<128x3xf32> -> vector<128x3xf32>
    %c0_50 = arith.constant 0 : index
    %c0_51 = arith.constant 0 : index
    %105 = vector.load %arg10[%c0_50, %c0_51] : memref<1x3xf32, #tpu.memory_space<vmem>>, vector<1x3xf32>
    %106 = vector.broadcast %105 : vector<1x3xf32> to vector<128x3xf32>
    %107 = arith.addf %104, %106 : vector<128x3xf32>
    %108 = math.tanh %107 : vector<128x3xf32>
    %c2 = arith.constant 2 : index
    %c0_52 = arith.constant 0 : index
    %c0_53 = arith.constant 0 : index
    %109 = vector.load %arg11[%c2, %c0_52, %c0_53] : memref<4x128x3xf32, #tpu.memory_space<vmem>>, vector<1x128x3xf32>
    %110 = vector.shape_cast %109 : vector<1x128x3xf32> to vector<128x3xf32>
    %111 = vector.shape_cast %108 : vector<128x3xf32> to vector<1x128x3xf32>
    tpu.vector_store %arg11[%c2, %c0_52, %c0_53], %111 {strides = array<i32>} : memref<4x128x3xf32, #tpu.memory_space<vmem>>, vector<1x128x3xf32>,
    %112 = vector.broadcast %60 : vector<1x4xf32> to vector<128x4xf32>
    %113 = arith.mulf %17, %112 : vector<128x4xf32>
    %114 = vector.broadcast %63 : vector<1x4xf32> to vector<128x4xf32>
    %115 = arith.addf %113, %114 : vector<128x4xf32>
    %cst_54 = arith.constant 0.000000e+00 : f32
    %116 = vector.broadcast %cst_54 : f32 to vector<128x4xf32>
    %117 = arith.maximumf %115, %116 : vector<128x4xf32>
    %118 = arith.truncf %117 : vector<128x4xf32> to vector<128x4xbf16>
    %c0_55 = arith.constant 0 : index
    %c0_56 = arith.constant 0 : index
    %119 = vector.load %arg9[%c0_55, %c0_56] : memref<4x3xbf16, #tpu.memory_space<vmem>>, vector<4x3xbf16>
    %cst_57 = arith.constant dense<0.000000e+00> : vector<128x3xf32>
    %120 = tpu.matmul %118, %119, %cst_57 {dimension_numbers = #tpu.dot_dimension_numbers<[1], [0], [0], [1], [0, 0, 1, 1], [], []>} : vector<128x4xbf16>, vector<4x3xbf16>, vector<128x3xf32> -> vector<128x3xf32>
    %c0_58 = arith.constant 0 : index
    %c0_59 = arith.constant 0 : index
    %121 = vector.load %arg10[%c0_58, %c0_59] : memref<1x3xf32, #tpu.memory_space<vmem>>, vector<1x3xf32>
    %122 = vector.broadcast %121 : vector<1x3xf32> to vector<128x3xf32>
    %123 = arith.addf %120, %122 : vector<128x3xf32>
    %124 = math.tanh %123 : vector<128x3xf32>
    %c3 = arith.constant 3 : index
    %c0_60 = arith.constant 0 : index
    %c0_61 = arith.constant 0 : index
    %125 = vector.load %arg11[%c3, %c0_60, %c0_61] : memref<4x128x3xf32, #tpu.memory_space<vmem>>, vector<1x128x3xf32>
    %126 = vector.shape_cast %125 : vector<1x128x3xf32> to vector<128x3xf32>
    %127 = vector.shape_cast %124 : vector<128x3xf32> to vector<1x128x3xf32>
    tpu.vector_store %arg11[%c3, %c0_60, %c0_61], %127 {strides = array<i32>} : memref<4x128x3xf32, #tpu.memory_space<vmem>>, vector<1x128x3xf32>,
    return
  }
  func.func @transform_0(%arg0: i32) -> (i32, i32) {
    %c0_i32 = arith.constant 0 : i32
    %c0_i32_0 = arith.constant 0 : i32
    %c0_i32_1 = arith.constant 0 : i32
    return %c0_i32, %c0_i32_0 : i32, i32
  }
  func.func @transform_1(%arg0: i32) -> (i32, i32) {
    %c0_i32 = arith.constant 0 : i32
    %c0_i32_0 = arith.constant 0 : i32
    %c0_i32_1 = arith.constant 0 : i32
    return %c0_i32, %c0_i32_0 : i32, i32
  }
  func.func @transform_2(%arg0: i32) -> (i32, i32) {
    %c0_i32 = arith.constant 0 : i32
    %c0_i32_0 = arith.constant 0 : i32
    %c0_i32_1 = arith.constant 0 : i32
    return %c0_i32, %c0_i32_0 : i32, i32
  }
  func.func @transform_3(%arg0: i32) -> (i32, i32) {
    %c0_i32 = arith.constant 0 : i32
    %c0_i32_0 = arith.constant 0 : i32
    %c0_i32_1 = arith.constant 0 : i32
    return %c0_i32, %c0_i32_0 : i32, i32
  }
  func.func @transform_4(%arg0: i32) -> (i32, i32) {
    %c0_i32 = arith.constant 0 : i32
    %c0_i32_0 = arith.constant 0 : i32
    %c0_i32_1 = arith.constant 0 : i32
    return %c0_i32, %c0_i32_0 : i32, i32
  }
  func.func @transform_5(%arg0: i32) -> (i32, i32) {
    %c0_i32 = arith.constant 0 : i32
    %c0_i32_0 = arith.constant 0 : i32
    %c0_i32_1 = arith.constant 0 : i32
    return %c0_i32, %c0_i32_0 : i32, i32
  }
  func.func @transform_6(%arg0: i32) -> (i32, i32) {
    %c0_i32 = arith.constant 0 : i32
    %c0_i32_0 = arith.constant 0 : i32
    %c0_i32_1 = arith.constant 0 : i32
    return %c0_i32, %c0_i32_0 : i32, i32
  }
  func.func @transform_7(%arg0: i32) -> (i32, i32) {
    %c0_i32 = arith.constant 0 : i32
    %c0_i32_0 = arith.constant 0 : i32
    %c0_i32_1 = arith.constant 0 : i32
    return %c0_i32, %c0_i32_0 : i32, i32
  }
  func.func @transform_8(%arg0: i32) -> (i32, i32) {
    %c0_i32 = arith.constant 0 : i32
    %c0_i32_0 = arith.constant 0 : i32
    %c0_i32_1 = arith.constant 0 : i32
    return %c0_i32, %c0_i32_0 : i32, i32
  }
  func.func @transform_9(%arg0: i32) -> (i32, i32) {
    %c0_i32 = arith.constant 0 : i32
    %c0_i32_0 = arith.constant 0 : i32
    %c0_i32_1 = arith.constant 0 : i32
    return %c0_i32, %c0_i32_0 : i32, i32
  }
  func.func @transform_10(%arg0: i32) -> (i32, i32, i32) {
    %c0_i32 = arith.constant 0 : i32
    %c0_i32_0 = arith.constant 0 : i32
    %c0_i32_1 = arith.constant 0 : i32
    %c0_i32_2 = arith.constant 0 : i32
    return %c0_i32, %c0_i32_0, %c0_i32_1 : i32, i32, i32
  }
}

</mosaic_0001>

<llo_original>
// kernel: vae_forward.8
$region0: #{vae_forward.8}
  #allocation0 [shape = 'u32[]', space=smem, size = 0x4, offset = 0x4, fixed_abs, tag = 'smem constant byte address 0x4 - core index']
  #allocation1 [shape = 'u32[144,128]{1,0:T(1,128)}', space=vmem, size = 0x12000, scoped, tag = 'internal scratch']
  %s0 = inlined_call_operand.vmem [shape: bf16[128,36], index: 0, kind: input, shape index: {}]
  %s1 = inlined_call_operand.vmem [shape: bf16[36,8], index: 1, kind: input, shape index: {}]
  %s2 = inlined_call_operand.vmem [shape: f32[1,8], index: 2, kind: input, shape index: {}]
  %s3 = inlined_call_operand.vmem [shape: f32[1,8], index: 3, kind: input, shape index: {}]
  %s4 = inlined_call_operand.vmem [shape: f32[1,8], index: 4, kind: input, shape index: {}]
  %s5 = inlined_call_operand.vmem [shape: bf16[128,8], index: 5, kind: output, shape index: {}]
  %s6 = sld [smem:[#allocation0]]
  $region30: #{vae_forward.8} parent=0
    _
  %s8 = ssub.s32 1, %s6
  %s9 = scalar_select 0, %s8, %s6
  // Predicated region
  $region2: #{vae_forward.8} parent=0 // pred_check
    _
  $region3: #{vae_forward.8} parent=0 // pred_check_branch
    %11 = sbr.rel (0) target = $region5
  $region4: #{vae_forward.8} parent=0 // pred_region
    _
  $region5: #{vae_forward.8} parent=0 // pred_fallthru
    _
  // Predicated region
  $region6: #{vae_forward.8} parent=0 // pred_check
    _
  $region7: #{vae_forward.8} parent=0 // pred_check_branch
    %13 = sbr.rel (0) target = $region9
  $region8: #{vae_forward.8} parent=0 // pred_region
    _
  $region9: #{vae_forward.8} parent=0 // pred_fallthru
    _
  // Predicated region
  $region10: #{vae_forward.8} parent=0 // pred_check
    _
  $region11: #{vae_forward.8} parent=0 // pred_check_branch
    %15 = sbr.rel (0) target = $region13
  $region12: #{vae_forward.8} parent=0 // pred_region
    _
  $region13: #{vae_forward.8} parent=0 // pred_fallthru
    _
  // Predicated region
  $region14: #{vae_forward.8} parent=0 // pred_check
    _
  $region15: #{vae_forward.8} parent=0 // pred_check_branch
    %17 = sbr.rel (0) target = $region17
  $region16: #{vae_forward.8} parent=0 // pred_region
    _
  $region17: #{vae_forward.8} parent=0 // pred_fallthru
    _
  // Predicated region
  $region18: #{vae_forward.8} parent=0 // pred_check
    _
  $region19: #{vae_forward.8} parent=0 // pred_check_branch
    %19 = sbr.rel (0) target = $region21
  $region20: #{vae_forward.8} parent=0 // pred_region
    _
  $region21: #{vae_forward.8} parent=0 // pred_fallthru
    _
  %v21 = vld [vmem:[%s0] sm:$0xf]
  %v22 = vld [vmem:[%s0 + $0x4] sm:$0xf]
  %v23 = vld [vmem:[%s0 + $0x8] sm:$0xf]
  %v24 = vld [vmem:[%s0 + $0xc] sm:$0xf]
  %v25 = vld [vmem:[%s0 + $0x10] sm:$0xf]
  %v26 = vld [vmem:[%s0 + $0x14] sm:$0xf]
  %v27 = vld [vmem:[%s0 + $0x18] sm:$0xf]
  %v28 = vld [vmem:[%s0 + $0x1c] sm:$0xf]
  %v29 = vld [vmem:[%s0 + $0x20] sm:$0xf]
  %v30 = vld [vmem:[%s0 + $0x24] sm:$0xf]
  %v31 = vld [vmem:[%s0 + $0x28] sm:$0xf]
  %v32 = vld [vmem:[%s0 + $0x2c] sm:$0xf]
  %v33 = vld [vmem:[%s0 + $0x30] sm:$0xf]
  %v34 = vld [vmem:[%s0 + $0x34] sm:$0xf]
  %v35 = vld [vmem:[%s0 + $0x38] sm:$0xf]
  %v36 = vld [vmem:[%s0 + $0x3c] sm:$0xf]
  %v37 = vld [vmem:[%s1] sm:$0xf]
  %v38 = vld [vmem:[%s1 + $0x4] sm:$0xf]
  %v39 = vld [vmem:[%s1 + $0x8] sm:$0xf]
  %v40 = vld [vmem:[%s1 + $0xc] sm:$0xf]
  %v41 = vld [vmem:[%s1 + $0x10] sm:$0x3]
  %v42 = vld [vmem:[%s2] sm:$0x1]
  %v44 = vlaneseq
  %v45 = vshrl.u32 %v44, 7
  %v46 = vsub.s32 0, %v45
  %v47 = vrot.slane %v42, %v46
  %v65 = vunpack.c.l.b16 %v21
  %v66 = vunpack.c.l.b16 %v22
  %v67 = vunpack.c.l.b16 %v23
  %v68 = vunpack.c.l.b16 %v24
  %v69 = vunpack.c.l.b16 %v25
  %v70 = vunpack.c.l.b16 %v26
  %v71 = vunpack.c.l.b16 %v27
  %v72 = vunpack.c.l.b16 %v28
  %v73 = vunpack.c.l.b16 %v29
  %v74 = vunpack.c.l.b16 %v30
  %v75 = vunpack.c.l.b16 %v31
  %v76 = vunpack.c.l.b16 %v32
  %v77 = vunpack.c.l.b16 %v33
  %v78 = vunpack.c.l.b16 %v34
  %v79 = vunpack.c.l.b16 %v35
  %v80 = vunpack.c.l.b16 %v36
  %v81 = vpack.c.b16 %v66, %v65
  %v82 = vpack.c.b16 %v68, %v67
  %v83 = vpack.c.b16 %v70, %v69
  %v84 = vpack.c.b16 %v72, %v71
  %v85 = vpack.c.b16 %v74, %v73
  %v86 = vpack.c.b16 %v76, %v75
  %v87 = vpack.c.b16 %v78, %v77
  %v88 = vpack.c.b16 %v80, %v79
  %v94 = vunpack.c.l.b16 %v37
  %v95 = vunpack.c.l.b16 %v38
  %v96 = vunpack.c.l.b16 %v39
  %v97 = vunpack.c.l.b16 %v40
  %v98 = vunpack.c.l.b16 %v41
  %v99 = vpack.c.b16 %v95, %v94
  %v100 = vpack.c.b16 %v97, %v96
  %v101 = vpack.c.b16 %v98, %v98
  %vm104 = vcmask 293888
  %v106 = vsel %vm104, %v81, 0
  %v109 = vsel %vm104, %v82, 0
  %v112 = vsel %vm104, %v83, 0
  %v115 = vsel %vm104, %v84, 0
  %v118 = vsel %vm104, %v85, 0
  %v121 = vsel %vm104, %v86, 0
  %v124 = vsel %vm104, %v87, 0
  %v127 = vsel %vm104, %v88, 0
  %vm129 = vcmask 1041408
  %v131 = vsel %vm129, %v101, 0
  %133 = vmatprep.subr.bf16.mxu0 0
  %134 = vmatpush1.bf16.msra.mxu0 %v99
  %135 = vmatprep.subr.bf16.mxu0 0
  %136 = vmatpush1.bf16.msra.mxu0 %v100
  %137 = vmatprep.subr.bf16.mxu0 0
  %138 = vmatpush1.bf16.msra.mxu0 %v131
  %139 = vmatprep.subr.bf16.mxu0 0
  %140 = vmatpush1.bf16.msra.mxu0 0
  %141 = vmatprep.subr.bf16.mxu0 0
  %142 = vmatpush1.bf16.msra.mxu0 0
  %143 = vmatprep.subr.bf16.mxu0 0
  %144 = vmatpush1.bf16.msra.mxu0 0
  %145 = vmatprep.subr.bf16.mxu0 0
  %146 = vmatpush1.bf16.msra.mxu0 0
  %147 = vmatprep.subr.bf16.mxu0 0
  %148 = vmatpush1.bf16.msra.mxu0 0
  %149 = vmatprep.subr.bf16.mxu0 0
  %150 = vmatpush1.bf16.msra.mxu0 0
  %151 = vmatprep.subr.bf16.mxu0 0
  %152 = vmatpush1.bf16.msra.mxu0 0
  %153 = vmatprep.subr.bf16.mxu0 0
  %154 = vmatpush1.bf16.msra.mxu0 0
  %155 = vmatprep.subr.bf16.mxu0 0
  %156 = vmatpush1.bf16.msra.mxu0 0
  %157 = vmatprep.subr.bf16.mxu0 0
  %158 = vmatpush1.bf16.msra.mxu0 0
  %159 = vmatprep.subr.bf16.mxu0 0
  %160 = vmatpush1.bf16.msra.mxu0 0
  %161 = vmatprep.subr.bf16.mxu0 0
  %162 = vmatpush1.bf16.msra.mxu0 0
  %163 = vmatprep.subr.bf16.mxu0 0
  %164 = vmatpush1.bf16.msra.mxu0 0
  %165 = vmatprep.mubr.bf16.mxu0 0
  %166 = vmatmul.mubr.bf16.gmra.mrb[0].mxu0 %v106
  %v167 = vpop.f32.mrb[0].mxu0
  %v168 = vadd.f32 %v47, %v167
  %v169 = vpop.f32.mrb[0].mxu0
  %v170 = vpop.f32.mrb[0].mxu0
  %v171 = vadd.f32 %v47, %v170
  %v172 = vpop.f32.mrb[0].mxu0
  %173 = vmatprep.mubr.bf16.mxu0 0
  %174 = vmatmul.mubr.bf16.gmra.mrb[0].mxu0 %v109
  %v175 = vpop.f32.mrb[0].mxu0
  %v176 = vadd.f32 %v47, %v175
  %v177 = vpop.f32.mrb[0].mxu0
  %v178 = vpop.f32.mrb[0].mxu0
  %v179 = vadd.f32 %v47, %v178
  %v180 = vpop.f32.mrb[0].mxu0
  %181 = vmatprep.mubr.bf16.mxu0 0
  %182 = vmatmul.mubr.bf16.gmra.mrb[0].mxu0 %v112
  %v183 = vpop.f32.mrb[0].mxu0
  %v184 = vadd.f32 %v47, %v183
  %v185 = vpop.f32.mrb[0].mxu0
  %v186 = vpop.f32.mrb[0].mxu0
  %v187 = vadd.f32 %v47, %v186
  %v188 = vpop.f32.mrb[0].mxu0
  %189 = vmatprep.mubr.bf16.mxu0 0
  %190 = vmatmul.mubr.bf16.gmra.mrb[0].mxu0 %v115
  %v191 = vpop.f32.mrb[0].mxu0
  %v192 = vadd.f32 %v47, %v191
  %v193 = vpop.f32.mrb[0].mxu0
  %v194 = vpop.f32.mrb[0].mxu0
  %v195 = vadd.f32 %v47, %v194
  %v196 = vpop.f32.mrb[0].mxu0
  %197 = vmatprep.mubr.bf16.mxu0 0
  %198 = vmatmul.mubr.bf16.gmra.mrb[0].mxu0 %v118
  %v199 = vpop.f32.mrb[0].mxu0
  %v200 = vadd.f32 %v47, %v199
  %v201 = vpop.f32.mrb[0].mxu0
  %v202 = vpop.f32.mrb[0].mxu0
  %v203 = vadd.f32 %v47, %v202
  %v204 = vpop.f32.mrb[0].mxu0
  %205 = vmatprep.mubr.bf16.mxu0 0
  %206 = vmatmul.mubr.bf16.gmra.mrb[0].mxu0 %v121
  %v207 = vpop.f32.mrb[0].mxu0
  %v208 = vadd.f32 %v47, %v207
  %v209 = vpop.f32.mrb[0].mxu0
  %v210 = vpop.f32.mrb[0].mxu0
  %v211 = vadd.f32 %v47, %v210
  %v212 = vpop.f32.mrb[0].mxu0
  %213 = vmatprep.mubr.bf16.mxu0 0
  %214 = vmatmul.mubr.bf16.gmra.mrb[0].mxu0 %v124
  %v215 = vpop.f32.mrb[0].mxu0
  %v216 = vadd.f32 %v47, %v215
  %v217 = vpop.f32.mrb[0].mxu0
  %v218 = vpop.f32.mrb[0].mxu0
  %v219 = vadd.f32 %v47, %v218
  %v220 = vpop.f32.mrb[0].mxu0
  %221 = vmatprep.mubr.bf16.mxu0 0
  %222 = vmatmul.mubr.bf16.gmra.mrb[0].mxu0 %v127
  %v223 = vpop.f32.mrb[0].mxu0
  %v224 = vadd.f32 %v47, %v223
  %v225 = vpop.f32.mrb[0].mxu0
  %v226 = vpop.f32.mrb[0].mxu0
  %v227 = vadd.f32 %v47, %v226
  %v228 = vpop.f32.mrb[0].mxu0
  %229 = vdwg.mxu0
  %vm230 = vcmask 64512
  %v231 = vsel %vm230, %v168, 0.0
  %v232 = vsel %vm230, %v171, 0.0
  %v233 = vadd.f32 %v231, %v232
  %v234 = vsel %vm230, %v176, 0.0
  %v235 = vadd.f32 %v233, %v234
  %v236 = vsel %vm230, %v179, 0.0
  %v237 = vadd.f32 %v235, %v236
  %v238 = vsel %vm230, %v184, 0.0
  %v239 = vadd.f32 %v237, %v238
  %v240 = vsel %vm230, %v187, 0.0
  %v241 = vadd.f32 %v239, %v240
  %v242 = vsel %vm230, %v192, 0.0
  %v243 = vadd.f32 %v241, %v242
  %v244 = vsel %vm230, %v195, 0.0
  %v245 = vadd.f32 %v243, %v244
  %v246 = vsel %vm230, %v200, 0.0
  %v247 = vadd.f32 %v245, %v246
  %v248 = vsel %vm230, %v203, 0.0
  %v249 = vadd.f32 %v247, %v248
  %v250 = vsel %vm230, %v208, 0.0
  %v251 = vadd.f32 %v249, %v250
  %v252 = vsel %vm230, %v211, 0.0
  %v253 = vadd.f32 %v251, %v252
  %v254 = vsel %vm230, %v216, 0.0
  %v255 = vadd.f32 %v253, %v254
  %v256 = vsel %vm230, %v219, 0.0
  %v257 = vadd.f32 %v255, %v256
  %v258 = vsel %vm230, %v224, 0.0
  %v259 = vadd.f32 %v257, %v258
  %v260 = vsel %vm230, %v227, 0.0
  %v261 = vadd.f32 %v259, %v260
  %v262 = vrot.slane %v261, 4
  %v263 = vadd.f32 %v261, %v262
  %v264 = vrot.slane %v263, 2
  %v265 = vadd.f32 %v263, %v264
  %v266 = vrot.slane %v265, 1
  %v267 = vadd.f32 %v265, %v266
  %v268 = vrcp.pop 128.0
  %v269 = vmul.f32 %v267, %v268
  %v270 = vsub.f32 %v168, %v269
  %v271 = vsub.f32 %v171, %v269
  %v272 = vsub.f32 %v176, %v269
  %v273 = vsub.f32 %v179, %v269
  %v274 = vsub.f32 %v184, %v269
  %v275 = vsub.f32 %v187, %v269
  %v276 = vsub.f32 %v192, %v269
  %v277 = vsub.f32 %v195, %v269
  %v278 = vsub.f32 %v200, %v269
  %v279 = vsub.f32 %v203, %v269
  %v280 = vsub.f32 %v208, %v269
  %v281 = vsub.f32 %v211, %v269
  %v282 = vsub.f32 %v216, %v269
  %v283 = vsub.f32 %v219, %v269
  %v284 = vsub.f32 %v224, %v269
  %v285 = vsub.f32 %v227, %v269
  %v286 = vmul.f32 %v270, %v270
  %v287 = vmul.f32 %v271, %v271
  %v288 = vmul.f32 %v272, %v272
  %v289 = vmul.f32 %v273, %v273
  %v290 = vmul.f32 %v274, %v274
  %v291 = vmul.f32 %v275, %v275
  %v292 = vmul.f32 %v276, %v276
  %v293 = vmul.f32 %v277, %v277
  %v294 = vmul.f32 %v278, %v278
  %v295 = vmul.f32 %v279, %v279
  %v296 = vmul.f32 %v280, %v280
  %v297 = vmul.f32 %v281, %v281
  %v298 = vmul.f32 %v282, %v282
  %v299 = vmul.f32 %v283, %v283
  %v300 = vmul.f32 %v284, %v284
  %v301 = vmul.f32 %v285, %v285
  %v302 = vsel %vm230, %v286, 0.0
  %v303 = vsel %vm230, %v287, 0.0
  %v304 = vadd.f32 %v302, %v303
  %v305 = vsel %vm230, %v288, 0.0
  %v306 = vadd.f32 %v304, %v305
  %v307 = vsel %vm230, %v289, 0.0
  %v308 = vadd.f32 %v306, %v307
  %v309 = vsel %vm230, %v290, 0.0
  %v310 = vadd.f32 %v308, %v309
  %v311 = vsel %vm230, %v291, 0.0
  %v312 = vadd.f32 %v310, %v311
  %v313 = vsel %vm230, %v292, 0.0
  %v314 = vadd.f32 %v312, %v313
  %v315 = vsel %vm230, %v293, 0.0
  %v316 = vadd.f32 %v314, %v315
  %v317 = vsel %vm230, %v294, 0.0
  %v318 = vadd.f32 %v316, %v317
  %v319 = vsel %vm230, %v295, 0.0
  %v320 = vadd.f32 %v318, %v319
  %v321 = vsel %vm230, %v296, 0.0
  %v322 = vadd.f32 %v320, %v321
  %v323 = vsel %vm230, %v297, 0.0
  %v324 = vadd.f32 %v322, %v323
  %v325 = vsel %vm230, %v298, 0.0
  %v326 = vadd.f32 %v324, %v325
  %v327 = vsel %vm230, %v299, 0.0
  %v328 = vadd.f32 %v326, %v327
  %v329 = vsel %vm230, %v300, 0.0
  %v330 = vadd.f32 %v328, %v329
  %v331 = vsel %vm230, %v301, 0.0
  %v332 = vadd.f32 %v330, %v331
  %v333 = vrot.slane %v332, 4
  %v334 = vadd.f32 %v332, %v333
  %v335 = vrot.slane %v334, 2
  %v336 = vadd.f32 %v334, %v335
  %v337 = vrot.slane %v336, 1
  %v338 = vadd.f32 %v336, %v337
  %v339 = vmul.f32 %v338, %v268
  %v340 = vld [vmem:[%s3] sm:$0x1]
  %v341 = vadd.f32 %v339, 1e-05
  %v342 = vrsqrt.pop %v341
  %v343 = vmul.f32 %v340, %v342
  %v344 = vld [vmem:[%s4] sm:$0x1]
  %v345 = vmul.f32 %v269, %v343
  %v346 = vsub.f32 %v344, %v345
  %v348 = vlaneseq
  %v349 = vshrl.u32 %v348, 7
  %v350 = vsub.s32 0, %v349
  %v351 = vrot.slane %v343, %v350
  %v353 = vmul.f32 %v168, %v351
  %v354 = vmul.f32 %v171, %v351
  %v355 = vmul.f32 %v176, %v351
  %v356 = vmul.f32 %v179, %v351
  %v357 = vmul.f32 %v184, %v351
  %v358 = vmul.f32 %v187, %v351
  %v359 = vmul.f32 %v192, %v351
  %v360 = vmul.f32 %v195, %v351
  %v361 = vmul.f32 %v200, %v351
  %v362 = vmul.f32 %v203, %v351
  %v363 = vmul.f32 %v208, %v351
  %v364 = vmul.f32 %v211, %v351
  %v365 = vmul.f32 %v216, %v351
  %v366 = vmul.f32 %v219, %v351
  %v367 = vmul.f32 %v224, %v351
  %v368 = vmul.f32 %v227, %v351
  %v370 = vlaneseq
  %v371 = vshrl.u32 %v370, 7
  %v372 = vsub.s32 0, %v371
  %v373 = vrot.slane %v346, %v372
  %v375 = vadd.f32 %v353, %v373
  %v376 = vadd.f32 %v354, %v373
  %v377 = vadd.f32 %v355, %v373
  %v378 = vadd.f32 %v356, %v373
  %v379 = vadd.f32 %v357, %v373
  %v380 = vadd.f32 %v358, %v373
  %v381 = vadd.f32 %v359, %v373
  %v382 = vadd.f32 %v360, %v373
  %v383 = vadd.f32 %v361, %v373
  %v384 = vadd.f32 %v362, %v373
  %v385 = vadd.f32 %v363, %v373
  %v386 = vadd.f32 %v364, %v373
  %v387 = vadd.f32 %v365, %v373
  %v388 = vadd.f32 %v366, %v373
  %v389 = vadd.f32 %v367, %v373
  %v390 = vadd.f32 %v368, %v373
  %v391 = vmax.f32 %v375, 0.0
  %v392 = vmax.f32 %v376, 0.0
  %v393 = vmax.f32 %v377, 0.0
  %v394 = vmax.f32 %v378, 0.0
  %v395 = vmax.f32 %v379, 0.0
  %v396 = vmax.f32 %v380, 0.0
  %v397 = vmax.f32 %v381, 0.0
  %v398 = vmax.f32 %v382, 0.0
  %v399 = vmax.f32 %v383, 0.0
  %v400 = vmax.f32 %v384, 0.0
  %v401 = vmax.f32 %v385, 0.0
  %v402 = vmax.f32 %v386, 0.0
  %v403 = vmax.f32 %v387, 0.0
  %v404 = vmax.f32 %v388, 0.0
  %v405 = vmax.f32 %v389, 0.0
  %v406 = vmax.f32 %v390, 0.0
  %v407 = vpack.c.bf16 %v392, %v391
  %v408 = vpack.c.bf16 %v394, %v393
  %v409 = vpack.c.bf16 %v396, %v395
  %v410 = vpack.c.bf16 %v398, %v397
  %v411 = vpack.c.bf16 %v400, %v399
  %v412 = vpack.c.bf16 %v402, %v401
  %v413 = vpack.c.bf16 %v404, %v403
  %v414 = vpack.c.bf16 %v406, %v405
  %v423 = vunpack.c.l.b16 %v407
  %v424 = vunpack.c.h.b16 %v407
  %v425 = vunpack.c.l.b16 %v408
  %v426 = vunpack.c.h.b16 %v408
  %v427 = vunpack.c.l.b16 %v409
  %v428 = vunpack.c.h.b16 %v409
  %v429 = vunpack.c.l.b16 %v410
  %v430 = vunpack.c.h.b16 %v410
  %v431 = vunpack.c.l.b16 %v411
  %v432 = vunpack.c.h.b16 %v411
  %v433 = vunpack.c.l.b16 %v412
  %v434 = vunpack.c.h.b16 %v412
  %v435 = vunpack.c.l.b16 %v413
  %v436 = vunpack.c.h.b16 %v413
  %v437 = vunpack.c.l.b16 %v414
  %v438 = vunpack.c.h.b16 %v414
  %v439 = vpack.c.b16 %v423, %v423
  %v440 = vpack.c.b16 %v424, %v424
  %v441 = vpack.c.b16 %v425, %v425
  %v442 = vpack.c.b16 %v426, %v426
  %v443 = vpack.c.b16 %v427, %v427
  %v444 = vpack.c.b16 %v428, %v428
  %v445 = vpack.c.b16 %v429, %v429
  %v446 = vpack.c.b16 %v430, %v430
  %v447 = vpack.c.b16 %v431, %v431
  %v448 = vpack.c.b16 %v432, %v432
  %v449 = vpack.c.b16 %v433, %v433
  %v450 = vpack.c.b16 %v434, %v434
  %v451 = vpack.c.b16 %v435, %v435
  %v452 = vpack.c.b16 %v436, %v436
  %v453 = vpack.c.b16 %v437, %v437
  %v454 = vpack.c.b16 %v438, %v438
  %vm471 = vcmask 60416
  %472 = vst.msk [vmem:[%s5] sm:$0xf] %vm471, %v439
  %473 = vst.msk [vmem:[%s5 + $0x4] sm:$0xf] %vm471, %v440
  %474 = vst.msk [vmem:[%s5 + $0x8] sm:$0xf] %vm471, %v441
  %475 = vst.msk [vmem:[%s5 + $0xc] sm:$0xf] %vm471, %v442
  %476 = vst.msk [vmem:[%s5 + $0x10] sm:$0xf] %vm471, %v443
  %477 = vst.msk [vmem:[%s5 + $0x14] sm:$0xf] %vm471, %v444
  %478 = vst.msk [vmem:[%s5 + $0x18] sm:$0xf] %vm471, %v445
  %479 = vst.msk [vmem:[%s5 + $0x1c] sm:$0xf] %vm471, %v446
  %480 = vst.msk [vmem:[%s5 + $0x20] sm:$0xf] %vm471, %v447
  %481 = vst.msk [vmem:[%s5 + $0x24] sm:$0xf] %vm471, %v448
  %482 = vst.msk [vmem:[%s5 + $0x28] sm:$0xf] %vm471, %v449
  %483 = vst.msk [vmem:[%s5 + $0x2c] sm:$0xf] %vm471, %v450
  %484 = vst.msk [vmem:[%s5 + $0x30] sm:$0xf] %vm471, %v451
  %485 = vst.msk [vmem:[%s5 + $0x34] sm:$0xf] %vm471, %v452
  %486 = vst.msk [vmem:[%s5 + $0x38] sm:$0xf] %vm471, %v453
  %487 = vst.msk [vmem:[%s5 + $0x3c] sm:$0xf] %vm471, %v454
  // Predicated region
  $region22: #{vae_forward.8} parent=0 // pred_check
    _
  $region23: #{vae_forward.8} parent=0 // pred_check_branch
    %489 = sbr.rel (0) target = $region25
  $region24: #{vae_forward.8} parent=0 // pred_region
    _
  $region25: #{vae_forward.8} parent=0 // pred_fallthru
    _
  // Predicated region
  $region26: #{vae_forward.8} parent=0 // pred_check
    _
  $region27: #{vae_forward.8} parent=0 // pred_check_branch
    %491 = sbr.rel (0) target = $region29
  $region28: #{vae_forward.8} parent=0 // pred_region
    _
  $region29: #{vae_forward.8} parent=0 // pred_fallthru
    _

// kernel: vae_forward.7
$region0: #{vae_forward.7}
  #allocation0 [shape = 'u32[]', space=smem, size = 0x4, offset = 0x4, fixed_abs, tag = 'smem constant byte address 0x4 - core index']
  #allocation1 [shape = 'u32[144,128]{1,0:T(1,128)}', space=vmem, size = 0x12000, scoped, tag = 'internal scratch']
  %s0 = inlined_call_operand.vmem [shape: bf16[512,3], index: 0, kind: input, shape index: {}]
  %s1 = inlined_call_operand.vmem [shape: bf16[3,4], index: 1, kind: input, shape index: {}]
  %s2 = inlined_call_operand.vmem [shape: f32[1,4], index: 2, kind: input, shape index: {}]
  %s3 = inlined_call_operand.vmem [shape: bf16[512,4], index: 3, kind: output, shape index: {}]
  %s4 = sld [smem:[#allocation0]]
  $region45: #{vae_forward.7} parent=0
    _
  %s6 = ssub.s32 1, %s4
  %s7 = scalar_select 0, %s6, %s4
  loop: start=0, step=1, limit=4
  $region2: #{vae_forward.7} parent=0 // loop_pre_header
    _
  $region3: #{vae_forward.7} parent=0 // loop_header
    %s9 = sphi 0, %s13
    %p10 = scmp.ge.s32.totalorder %s9, 4
    %s19 = sphi 0, %s21
    %s22 = sphi 0, %s19
    %s23 = sphi 0, %s22
    %s39 = sphi 0, %s23
    %s43 = sphi 0, %s43
    %s45 = sphi 0, %s43
    %s46 = sphi 0, %s45
    %s60 = sphi 0, %s46
    %s64 = sphi 0, %s64
    %s66 = sphi 0, %s64
    %s67 = sphi 0, %s66
    %s81 = sphi 0, %s67
    %s87 = sphi 0, %s89
    %s90 = sphi 0, %s87
    %s91 = sphi 0, %s90
    %s107 = sphi 0, %s91
  $region4: #{vae_forward.7} parent=0 // loop_header_branch
    %12 = sbr.rel (%p10) target = $region8
  $region5: #{vae_forward.7} parent=0 // loop_body
    %s14 = ssub.s32 %s9, 1
    %s15 = ssub.s32 %s9, 2
    %s16 = sadd.s32 %s9, 1
    %s17 = ssub.s32 %s9, %s16
    %p18 = scmp.eq.s32.totalorder %s17, 0
    %s20 = sadd.s32 %s19, 1
    %s21 = scalar_select %p18, %s19, %s20
    %p24 = pneg %p18
    %p25 = scmp.eq.s32.totalorder %s9, 1
    %p26 = por %p24, %p25
    %p27 = scmp.ne.s32.totalorder %s19, %s22
    %p28 = scmp.eq.s32.totalorder %s9, 0
    %p29 = por %p27, %p28
    %p30 = scmp.ne.s32.totalorder %s19, %s22
    %p31 = scmp.eq.s32.totalorder %s14, 1
    %p32 = por %p30, %p31
    %p33 = scmp.ne.s32.totalorder %s22, %s23
    %p34 = scmp.eq.s32.totalorder %s14, 0
    %p35 = por %p33, %p34
    %p36 = scmp.ne.s32.totalorder %s22, %s23
    %p37 = scmp.eq.s32.totalorder %s15, 1
    %p38 = por %p36, %p37
    %p40 = scmp.ne.s32.totalorder %s23, %s39
    %p41 = scmp.eq.s32.totalorder %s15, 0
    %p42 = por %p40, %p41
    %s44 = sadd.s32 %s43, 1
    %p47 = scmp.eq.s32.totalorder %s9, 1
    %p48 = scmp.ne.s32.totalorder %s43, %s45
    %p49 = scmp.eq.s32.totalorder %s9, 0
    %p50 = por %p48, %p49
    %p51 = scmp.ne.s32.totalorder %s43, %s45
    %p52 = scmp.eq.s32.totalorder %s14, 1
    %p53 = por %p51, %p52
    %p54 = scmp.ne.s32.totalorder %s45, %s46
    %p55 = scmp.eq.s32.totalorder %s14, 0
    %p56 = por %p54, %p55
    %p57 = scmp.ne.s32.totalorder %s45, %s46
    %p58 = scmp.eq.s32.totalorder %s15, 1
    %p59 = por %p57, %p58
    %p61 = scmp.ne.s32.totalorder %s46, %s60
    %p62 = scmp.eq.s32.totalorder %s15, 0
    %p63 = por %p61, %p62
    %s65 = sadd.s32 %s64, 1
    %p68 = scmp.eq.s32.totalorder %s9, 1
    %p69 = scmp.ne.s32.totalorder %s64, %s66
    %p70 = scmp.eq.s32.totalorder %s9, 0
    %p71 = por %p69, %p70
    %p72 = scmp.ne.s32.totalorder %s64, %s66
    %p73 = scmp.eq.s32.totalorder %s14, 1
    %p74 = por %p72, %p73
    %p75 = scmp.ne.s32.totalorder %s66, %s67
    %p76 = scmp.eq.s32.totalorder %s14, 0
    %p77 = por %p75, %p76
    %p78 = scmp.ne.s32.totalorder %s66, %s67
    %p79 = scmp.eq.s32.totalorder %s15, 1
    %p80 = por %p78, %p79
    %p82 = scmp.ne.s32.totalorder %s67, %s81
    %p83 = scmp.eq.s32.totalorder %s15, 0
    %p84 = por %p82, %p83
    %s85 = ssub.s32 %s9, %s16
    %p86 = scmp.eq.s32.totalorder %s85, 0
    %s88 = sadd.s32 %s87, 1
    %s89 = scalar_select %p86, %s87, %s88
    %p92 = pneg %p86
    %p93 = scmp.eq.s32.totalorder %s9, 1
    %p94 = por %p92, %p93
    %p95 = scmp.ne.s32.totalorder %s87, %s90
    %p96 = scmp.eq.s32.totalorder %s9, 0
    %p97 = por %p95, %p96
    %p98 = scmp.ne.s32.totalorder %s87, %s90
    %p99 = scmp.eq.s32.totalorder %s14, 1
    %p100 = por %p98, %p99
    %p101 = scmp.ne.s32.totalorder %s90, %s91
    %p102 = scmp.eq.s32.totalorder %s14, 0
    %p103 = por %p101, %p102
    %p104 = scmp.ne.s32.totalorder %s90, %s91
    %p105 = scmp.eq.s32.totalorder %s15, 1
    %p106 = por %p104, %p105
    %p108 = scmp.ne.s32.totalorder %s91, %s107
    %p109 = scmp.eq.s32.totalorder %s15, 0
    %p110 = por %p108, %p109
    %p111 = scmp.le.s32.totalorder 1, %s9
    %p112 = scmp.lt.s32.totalorder %s9, 3
    %p113 = pnand %p111, %p112
    %p114 = pneg %p113
    // Predicated region
    $region9: #{vae_forward.7} parent=5 // pred_check
      _
    $region10: #{vae_forward.7} parent=5 // pred_check_branch
      %116 = sbr.rel (%p113) target = $region12
    $region11: #{vae_forward.7} parent=5 // pred_region
      %s117 = ssub.s32 %s9, 1
      // Predicated region
      $region13: #{vae_forward.7} parent=11 // pred_check
        %p118 = pneg %p56
      $region14: #{vae_forward.7} parent=11 // pred_check_branch
        %120 = sbr.rel (%p118) target = $region16
      $region15: #{vae_forward.7} parent=11 // pred_region
        _
      $region16: #{vae_forward.7} parent=11 // pred_fallthru
        _
      // Predicated region
      $region17: #{vae_forward.7} parent=11 // pred_check
        %p121 = pneg %p77
      $region18: #{vae_forward.7} parent=11 // pred_check_branch
        %123 = sbr.rel (%p121) target = $region20
      $region19: #{vae_forward.7} parent=11 // pred_region
        _
      $region20: #{vae_forward.7} parent=11 // pred_fallthru
        _
    $region12: #{vae_forward.7} parent=5 // pred_fallthru
      _
    %p124 = scmp.lt.s32.totalorder %s9, 2
    // Predicated region
    $region21: #{vae_forward.7} parent=5 // pred_check
      %p125 = pneg %p124
    $region22: #{vae_forward.7} parent=5 // pred_check_branch
      %127 = sbr.rel (%p125) target = $region24
    $region23: #{vae_forward.7} parent=5 // pred_region
      // Predicated region
      $region25: #{vae_forward.7} parent=23 // pred_check
        %p128 = pneg %p29
      $region26: #{vae_forward.7} parent=23 // pred_check_branch
        %130 = sbr.rel (%p128) target = $region28
      $region27: #{vae_forward.7} parent=23 // pred_region
        %s131 = smul.u32 32, %s9
        %p132 = scmp.lt.s32.totalorder %s131, 63
        %s133 = scalar_select %p132, %s131, 63
        %s134 = smul.addr %s133, 4
        %s135 = scalar_lea.vmem %s0, %s134
        %s136 = smul.u32 32, %s9
      $region28: #{vae_forward.7} parent=23 // pred_fallthru
        _
    $region24: #{vae_forward.7} parent=5 // pred_fallthru
      _
    %p137 = scmp.le.s32.totalorder 1, %s9
    %p138 = scmp.lt.s32.totalorder %s9, 3
    %p139 = pnand %p137, %p138
    %p140 = pneg %p139
    // Predicated region
    $region29: #{vae_forward.7} parent=5 // pred_check
      _
    $region30: #{vae_forward.7} parent=5 // pred_check_branch
      %142 = sbr.rel (%p139) target = $region32
    $region31: #{vae_forward.7} parent=5 // pred_region
      %s143 = ssub.s32 %s9, 1
      %s144 = smul.u32 32, %s14
      %p145 = scmp.lt.s32.totalorder %s144, 63
      %s146 = scalar_select %p145, %s144, 63
      %s147 = smul.addr %s146, 4
      %s148 = scalar_lea.vmem %s0, %s147
      %p149 = pneg %p35
      %p150 = pneg %p32
      %p151 = pneg %p56
      %p152 = pneg %p53
      %p153 = pneg %p77
      %p154 = pneg %p74
      %p155 = pneg %p103
      %p156 = pneg %p100
      %s157 = smul.u32 32, %s14
      %p158 = scmp.lt.s32.totalorder %s157, 63
      %s159 = scalar_select %p158, %s157, 63
      %s160 = smul.addr %s159, 4
      %s161 = scalar_lea.vmem %s3, %s160
      %s162 = smul.u32 32, %s14
      %p163 = scmp.lt.s32.totalorder %s162, 63
      %s164 = scalar_select %p163, %s162, 63
      %s165 = smul.addr %s164, 4
      %s166 = scalar_lea.vmem %s0, %s165
      %s167 = smul.u32 32, %s14
      %s168 = smul.u32 32, %s14
      %p169 = scmp.lt.s32.totalorder %s168, 63
      %s170 = scalar_select %p169, %s168, 63
      %s171 = smul.addr %s170, 4
      %s172 = scalar_lea.vmem %s3, %s171
      %s173 = smul.u32 32, %s14
      %v175 = vld [vmem:[%s166] sm:$0xf]
      %v176 = vld [vmem:[%s166 + $0x4] sm:$0xf]
      %v177 = vld [vmem:[%s166 + $0x8] sm:$0xf]
      %v178 = vld [vmem:[%s166 + $0xc] sm:$0xf]
      %v179 = vld [vmem:[%s166 + $0x10] sm:$0xf]
      %v180 = vld [vmem:[%s166 + $0x14] sm:$0xf]
      %v181 = vld [vmem:[%s166 + $0x18] sm:$0xf]
      %v182 = vld [vmem:[%s166 + $0x1c] sm:$0xf]
      %v183 = vld [vmem:[%s166 + $0x20] sm:$0xf]
      %v184 = vld [vmem:[%s166 + $0x24] sm:$0xf]
      %v185 = vld [vmem:[%s166 + $0x28] sm:$0xf]
      %v186 = vld [vmem:[%s166 + $0x2c] sm:$0xf]
      %v187 = vld [vmem:[%s166 + $0x30] sm:$0xf]
      %v188 = vld [vmem:[%s166 + $0x34] sm:$0xf]
      %v189 = vld [vmem:[%s166 + $0x38] sm:$0xf]
      %v190 = vld [vmem:[%s166 + $0x3c] sm:$0xf]
      %v191 = vld [vmem:[%s166 + $0x40] sm:$0xf]
      %v192 = vld [vmem:[%s166 + $0x44] sm:$0xf]
      %v193 = vld [vmem:[%s166 + $0x48] sm:$0xf]
      %v194 = vld [vmem:[%s166 + $0x4c] sm:$0xf]
      %v195 = vld [vmem:[%s166 + $0x50] sm:$0xf]
      %v196 = vld [vmem:[%s166 + $0x54] sm:$0xf]
      %v197 = vld [vmem:[%s166 + $0x58] sm:$0xf]
      %v198 = vld [vmem:[%s166 + $0x5c] sm:$0xf]
      %v199 = vld [vmem:[%s166 + $0x60] sm:$0xf]
      %v200 = vld [vmem:[%s166 + $0x64] sm:$0xf]
      %v201 = vld [vmem:[%s166 + $0x68] sm:$0xf]
      %v202 = vld [vmem:[%s166 + $0x6c] sm:$0xf]
      %v203 = vld [vmem:[%s166 + $0x70] sm:$0xf]
      %v204 = vld [vmem:[%s166 + $0x74] sm:$0xf]
      %v205 = vld [vmem:[%s166 + $0x78] sm:$0xf]
      %v206 = vld [vmem:[%s166 + $0x7c] sm:$0xf]
      %v207 = vld [vmem:[%s1] sm:$0x3]
      %v208 = vld [vmem:[%s2] sm:$0x1]
      %v210 = vlaneseq
      %v211 = vshrl.u32 %v210, 7
      %v212 = vsub.s32 0, %v211
      %v213 = vrot.slane %v208, %v212
      %v247 = vunpack.c.l.b16 %v175
      %v248 = vunpack.c.l.b16 %v176
      %v249 = vunpack.c.l.b16 %v177
      %v250 = vunpack.c.l.b16 %v178
      %v251 = vunpack.c.l.b16 %v179
      %v252 = vunpack.c.l.b16 %v180
      %v253 = vunpack.c.l.b16 %v181
      %v254 = vunpack.c.l.b16 %v182
      %v255 = vunpack.c.l.b16 %v183
      %v256 = vunpack.c.l.b16 %v184
      %v257 = vunpack.c.l.b16 %v185
      %v258 = vunpack.c.l.b16 %v186
      %v259 = vunpack.c.l.b16 %v187
      %v260 = vunpack.c.l.b16 %v188
      %v261 = vunpack.c.l.b16 %v189
      %v262 = vunpack.c.l.b16 %v190
      %v263 = vunpack.c.l.b16 %v191
      %v264 = vunpack.c.l.b16 %v192
      %v265 = vunpack.c.l.b16 %v193
      %v266 = vunpack.c.l.b16 %v194
      %v267 = vunpack.c.l.b16 %v195
      %v268 = vunpack.c.l.b16 %v196
      %v269 = vunpack.c.l.b16 %v197
      %v270 = vunpack.c.l.b16 %v198
      %v271 = vunpack.c.l.b16 %v199
      %v272 = vunpack.c.l.b16 %v200
      %v273 = vunpack.c.l.b16 %v201
      %v274 = vunpack.c.l.b16 %v202
      %v275 = vunpack.c.l.b16 %v203
      %v276 = vunpack.c.l.b16 %v204
      %v277 = vunpack.c.l.b16 %v205
      %v278 = vunpack.c.l.b16 %v206
      %v279 = vpack.c.b16 %v248, %v247
      %v280 = vpack.c.b16 %v250, %v249
      %v281 = vpack.c.b16 %v252, %v251
      %v282 = vpack.c.b16 %v254, %v253
      %v283 = vpack.c.b16 %v256, %v255
      %v284 = vpack.c.b16 %v258, %v257
      %v285 = vpack.c.b16 %v260, %v259
      %v286 = vpack.c.b16 %v262, %v261
      %v287 = vpack.c.b16 %v264, %v263
      %v288 = vpack.c.b16 %v266, %v265
      %v289 = vpack.c.b16 %v268, %v267
      %v290 = vpack.c.b16 %v270, %v269
      %v291 = vpack.c.b16 %v272, %v271
      %v292 = vpack.c.b16 %v274, %v273
      %v293 = vpack.c.b16 %v276, %v275
      %v294 = vpack.c.b16 %v278, %v277
      %vm295 = vcmask 23552
      %v297 = vsel %vm295, %v279, 0
      %v300 = vsel %vm295, %v280, 0
      %v303 = vsel %vm295, %v281, 0
      %v306 = vsel %vm295, %v282, 0
      %v309 = vsel %vm295, %v283, 0
      %v312 = vsel %vm295, %v284, 0
      %v315 = vsel %vm295, %v285, 0
      %v318 = vsel %vm295, %v286, 0
      %v321 = vsel %vm295, %v287, 0
      %v324 = vsel %vm295, %v288, 0
      %v327 = vsel %vm295, %v289, 0
      %v330 = vsel %vm295, %v290, 0
      %v333 = vsel %vm295, %v291, 0
      %v336 = vsel %vm295, %v292, 0
      %v339 = vsel %vm295, %v293, 0
      %v342 = vsel %vm295, %v294, 0
      %vm344 = vcmask 1040384
      %vm345 = vcmask 1041408
      %v346 = vsel %vm344, 4294967295, 65535
      %v347 = vsel %vm345, %v346, 0
      %v349 = vand.u32 %v207, %v347
      %351 = vmatprep.subr.bf16.mxu0 0
      %352 = vmatpush1.bf16.msra.mxu0 %v349
      %353 = vmatprep.subr.bf16.mxu0 0
      %354 = vmatpush1.bf16.msra.mxu0 0
      %355 = vmatprep.subr.bf16.mxu0 0
      %356 = vmatpush1.bf16.msra.mxu0 0
      %357 = vmatprep.subr.bf16.mxu0 0
      %358 = vmatpush1.bf16.msra.mxu0 0
      %359 = vmatprep.subr.bf16.mxu0 0
      %360 = vmatpush1.bf16.msra.mxu0 0
      %361 = vmatprep.subr.bf16.mxu0 0
      %362 = vmatpush1.bf16.msra.mxu0 0
      %363 = vmatprep.subr.bf16.mxu0 0
      %364 = vmatpush1.bf16.msra.mxu0 0
      %365 = vmatprep.subr.bf16.mxu0 0
      %366 = vmatpush1.bf16.msra.mxu0 0
      %367 = vmatprep.subr.bf16.mxu0 0
      %368 = vmatpush1.bf16.msra.mxu0 0
      %369 = vmatprep.subr.bf16.mxu0 0
      %370 = vmatpush1.bf16.msra.mxu0 0
      %371 = vmatprep.subr.bf16.mxu0 0
      %372 = vmatpush1.bf16.msra.mxu0 0
      %373 = vmatprep.subr.bf16.mxu0 0
      %374 = vmatpush1.bf16.msra.mxu0 0
      %375 = vmatprep.subr.bf16.mxu0 0
      %376 = vmatpush1.bf16.msra.mxu0 0
      %377 = vmatprep.subr.bf16.mxu0 0
      %378 = vmatpush1.bf16.msra.mxu0 0
      %379 = vmatprep.subr.bf16.mxu0 0
      %380 = vmatpush1.bf16.msra.mxu0 0
      %381 = vmatprep.subr.bf16.mxu0 0
      %382 = vmatpush1.bf16.msra.mxu0 0
      %383 = vmatprep.mubr.bf16.mxu0 0
      %384 = vmatmul.mubr.bf16.gmra.mrb[0].mxu0 %v297
      %v385 = vpop.f32.mrb[0].mxu0
      %v386 = vadd.f32 %v213, %v385
      %v387 = vpop.f32.mrb[0].mxu0
      %v388 = vpop.f32.mrb[0].mxu0
      %v389 = vadd.f32 %v213, %v388
      %v390 = vpop.f32.mrb[0].mxu0
      %391 = vmatprep.mubr.bf16.mxu0 0
      %392 = vmatmul.mubr.bf16.gmra.mrb[0].mxu0 %v300
      %v393 = vpop.f32.mrb[0].mxu0
      %v394 = vadd.f32 %v213, %v393
      %v395 = vpop.f32.mrb[0].mxu0
      %v396 = vpop.f32.mrb[0].mxu0
      %v397 = vadd.f32 %v213, %v396
      %v398 = vpop.f32.mrb[0].mxu0
      %399 = vmatprep.mubr.bf16.mxu0 0
      %400 = vmatmul.mubr.bf16.gmra.mrb[0].mxu0 %v303
      %v401 = vpop.f32.mrb[0].mxu0
      %v402 = vadd.f32 %v213, %v401
      %v403 = vpop.f32.mrb[0].mxu0
      %v404 = vpop.f32.mrb[0].mxu0
      %v405 = vadd.f32 %v213, %v404
      %v406 = vpop.f32.mrb[0].mxu0
      %407 = vmatprep.mubr.bf16.mxu0 0
      %408 = vmatmul.mubr.bf16.gmra.mrb[0].mxu0 %v306
      %v409 = vpop.f32.mrb[0].mxu0
      %v410 = vadd.f32 %v213, %v409
      %v411 = vpop.f32.mrb[0].mxu0
      %v412 = vpop.f32.mrb[0].mxu0
      %v413 = vadd.f32 %v213, %v412
      %v414 = vpop.f32.mrb[0].mxu0
      %415 = vmatprep.mubr.bf16.mxu0 0
      %416 = vmatmul.mubr.bf16.gmra.mrb[0].mxu0 %v309
      %v417 = vpop.f32.mrb[0].mxu0
      %v418 = vadd.f32 %v213, %v417
      %v419 = vpop.f32.mrb[0].mxu0
      %v420 = vpop.f32.mrb[0].mxu0
      %v421 = vadd.f32 %v213, %v420
      %v422 = vpop.f32.mrb[0].mxu0
      %423 = vmatprep.mubr.bf16.mxu0 0
      %424 = vmatmul.mubr.bf16.gmra.mrb[0].mxu0 %v312
      %v425 = vpop.f32.mrb[0].mxu0
      %v426 = vadd.f32 %v213, %v425
      %v427 = vpop.f32.mrb[0].mxu0
      %v428 = vpop.f32.mrb[0].mxu0
      %v429 = vadd.f32 %v213, %v428
      %v430 = vpop.f32.mrb[0].mxu0
      %431 = vmatprep.mubr.bf16.mxu0 0
      %432 = vmatmul.mubr.bf16.gmra.mrb[0].mxu0 %v315
      %v433 = vpop.f32.mrb[0].mxu0
      %v434 = vadd.f32 %v213, %v433
      %v435 = vpop.f32.mrb[0].mxu0
      %v436 = vpop.f32.mrb[0].mxu0
      %v437 = vadd.f32 %v213, %v436
      %v438 = vpop.f32.mrb[0].mxu0
      %439 = vmatprep.mubr.bf16.mxu0 0
      %440 = vmatmul.mubr.bf16.gmra.mrb[0].mxu0 %v318
      %v441 = vpop.f32.mrb[0].mxu0
      %v442 = vadd.f32 %v213, %v441
      %v443 = vpop.f32.mrb[0].mxu0
      %v444 = vpop.f32.mrb[0].mxu0
      %v445 = vadd.f32 %v213, %v444
      %v446 = vpop.f32.mrb[0].mxu0
      %447 = vmatprep.mubr.bf16.mxu0 0
      %448 = vmatmul.mubr.bf16.gmra.mrb[0].mxu0 %v321
      %v449 = vpop.f32.mrb[0].mxu0
      %v450 = vadd.f32 %v213, %v449
      %v451 = vpop.f32.mrb[0].mxu0
      %v452 = vpop.f32.mrb[0].mxu0
      %v453 = vadd.f32 %v213, %v452
      %v454 = vpop.f32.mrb[0].mxu0
      %455 = vmatprep.mubr.bf16.mxu0 0
      %456 = vmatmul.mubr.bf16.gmra.mrb[0].mxu0 %v324
      %v457 = vpop.f32.mrb[0].mxu0
      %v458 = vadd.f32 %v213, %v457
      %v459 = vpop.f32.mrb[0].mxu0
      %v460 = vpop.f32.mrb[0].mxu0
      %v461 = vadd.f32 %v213, %v460
      %v462 = vpop.f32.mrb[0].mxu0
      %463 = vmatprep.mubr.bf16.mxu0 0
      %464 = vmatmul.mubr.bf16.gmra.mrb[0].mxu0 %v327
      %v465 = vpop.f32.mrb[0].mxu0
      %v466 = vadd.f32 %v213, %v465
      %v467 = vpop.f32.mrb[0].mxu0
      %v468 = vpop.f32.mrb[0].mxu0
      %v469 = vadd.f32 %v213, %v468
      %v470 = vpop.f32.mrb[0].mxu0
      %471 = vmatprep.mubr.bf16.mxu0 0
      %472 = vmatmul.mubr.bf16.gmra.mrb[0].mxu0 %v330
      %v473 = vpop.f32.mrb[0].mxu0
      %v474 = vadd.f32 %v213, %v473
      %v475 = vpop.f32.mrb[0].mxu0
      %v476 = vpop.f32.mrb[0].mxu0
      %v477 = vadd.f32 %v213, %v476
      %v478 = vpop.f32.mrb[0].mxu0
      %479 = vmatprep.mubr.bf16.mxu0 0
      %480 = vmatmul.mubr.bf16.gmra.mrb[0].mxu0 %v333
      %v481 = vpop.f32.mrb[0].mxu0
      %v482 = vadd.f32 %v213, %v481
      %v483 = vpop.f32.mrb[0].mxu0
      %v484 = vpop.f32.mrb[0].mxu0
      %v485 = vadd.f32 %v213, %v484
      %v486 = vpop.f32.mrb[0].mxu0
      %487 = vmatprep.mubr.bf16.mxu0 0
      %488 = vmatmul.mubr.bf16.gmra.mrb[0].mxu0 %v336
      %v489 = vpop.f32.mrb[0].mxu0
      %v490 = vadd.f32 %v213, %v489
      %v491 = vpop.f32.mrb[0].mxu0
      %v492 = vpop.f32.mrb[0].mxu0
      %v493 = vadd.f32 %v213, %v492
      %v494 = vpop.f32.mrb[0].mxu0
      %495 = vmatprep.mubr.bf16.mxu0 0
      %496 = vmatmul.mubr.bf16.gmra.mrb[0].mxu0 %v339
      %v497 = vpop.f32.mrb[0].mxu0
      %v498 = vadd.f32 %v213, %v497
      %v499 = vpop.f32.mrb[0].mxu0
      %v500 = vpop.f32.mrb[0].mxu0
      %v501 = vadd.f32 %v213, %v500
      %v502 = vpop.f32.mrb[0].mxu0
      %503 = vmatprep.mubr.bf16.mxu0 0
      %504 = vmatmul.mubr.bf16.gmra.mrb[0].mxu0 %v342
      %v505 = vpop.f32.mrb[0].mxu0
      %v506 = vadd.f32 %v213, %v505
      %v507 = vpop.f32.mrb[0].mxu0
      %v508 = vpop.f32.mrb[0].mxu0
      %v509 = vadd.f32 %v213, %v508
      %v510 = vpop.f32.mrb[0].mxu0
      %511 = vdwg.mxu0
      %v512 = vpack.c.bf16 %v389, %v386
      %v513 = vpack.c.bf16 %v397, %v394
      %v514 = vpack.c.bf16 %v405, %v402
      %v515 = vpack.c.bf16 %v413, %v410
      %v516 = vpack.c.bf16 %v421, %v418
      %v517 = vpack.c.bf16 %v429, %v426
      %v518 = vpack.c.bf16 %v437, %v434
      %v519 = vpack.c.bf16 %v445, %v442
      %v520 = vpack.c.bf16 %v453, %v450
      %v521 = vpack.c.bf16 %v461, %v458
      %v522 = vpack.c.bf16 %v469, %v466
      %v523 = vpack.c.bf16 %v477, %v474
      %v524 = vpack.c.bf16 %v485, %v482
      %v525 = vpack.c.bf16 %v493, %v490
      %v526 = vpack.c.bf16 %v501, %v498
      %v527 = vpack.c.bf16 %v509, %v506
      %v544 = vunpack.c.l.b16 %v512
      %v545 = vunpack.c.h.b16 %v512
      %v546 = vunpack.c.l.b16 %v513
      %v547 = vunpack.c.h.b16 %v513
      %v548 = vunpack.c.l.b16 %v514
      %v549 = vunpack.c.h.b16 %v514
      %v550 = vunpack.c.l.b16 %v515
      %v551 = vunpack.c.h.b16 %v515
      %v552 = vunpack.c.l.b16 %v516
      %v553 = vunpack.c.h.b16 %v516
      %v554 = vunpack.c.l.b16 %v517
      %v555 = vunpack.c.h.b16 %v517
      %v556 = vunpack.c.l.b16 %v518
      %v557 = vunpack.c.h.b16 %v518
      %v558 = vunpack.c.l.b16 %v519
      %v559 = vunpack.c.h.b16 %v519
      %v560 = vunpack.c.l.b16 %v520
      %v561 = vunpack.c.h.b16 %v520
      %v562 = vunpack.c.l.b16 %v521
      %v563 = vunpack.c.h.b16 %v521
      %v564 = vunpack.c.l.b16 %v522
      %v565 = vunpack.c.h.b16 %v522
      %v566 = vunpack.c.l.b16 %v523
      %v567 = vunpack.c.h.b16 %v523
      %v568 = vunpack.c.l.b16 %v524
      %v569 = vunpack.c.h.b16 %v524
      %v570 = vunpack.c.l.b16 %v525
      %v571 = vunpack.c.h.b16 %v525
      %v572 = vunpack.c.l.b16 %v526
      %v573 = vunpack.c.h.b16 %v526
      %v574 = vunpack.c.l.b16 %v527
      %v575 = vunpack.c.h.b16 %v527
      %v576 = vpack.c.b16 %v544, %v544
      %v577 = vpack.c.b16 %v545, %v545
      %v578 = vpack.c.b16 %v546, %v546
      %v579 = vpack.c.b16 %v547, %v547
      %v580 = vpack.c.b16 %v548, %v548
      %v581 = vpack.c.b16 %v549, %v549
      %v582 = vpack.c.b16 %v550, %v550
      %v583 = vpack.c.b16 %v551, %v551
      %v584 = vpack.c.b16 %v552, %v552
      %v585 = vpack.c.b16 %v553, %v553
      %v586 = vpack.c.b16 %v554, %v554
      %v587 = vpack.c.b16 %v555, %v555
      %v588 = vpack.c.b16 %v556, %v556
      %v589 = vpack.c.b16 %v557, %v557
      %v590 = vpack.c.b16 %v558, %v558
      %v591 = vpack.c.b16 %v559, %v559
      %v592 = vpack.c.b16 %v560, %v560
      %v593 = vpack.c.b16 %v561, %v561
      %v594 = vpack.c.b16 %v562, %v562
      %v595 = vpack.c.b16 %v563, %v563
      %v596 = vpack.c.b16 %v564, %v564
      %v597 = vpack.c.b16 %v565, %v565
      %v598 = vpack.c.b16 %v566, %v566
      %v599 = vpack.c.b16 %v567, %v567
      %v600 = vpack.c.b16 %v568, %v568
      %v601 = vpack.c.b16 %v569, %v569
      %v602 = vpack.c.b16 %v570, %v570
      %v603 = vpack.c.b16 %v571, %v571
      %v604 = vpack.c.b16 %v572, %v572
      %v605 = vpack.c.b16 %v573, %v573
      %v606 = vpack.c.b16 %v574, %v574
      %v607 = vpack.c.b16 %v575, %v575
      %vm640 = vcmask 27648
      %641 = vst.msk [vmem:[%s172] sm:$0xf] %vm640, %v576
      %642 = vst.msk [vmem:[%s172 + $0x4] sm:$0xf] %vm640, %v577
      %643 = vst.msk [vmem:[%s172 + $0x8] sm:$0xf] %vm640, %v578
      %644 = vst.msk [vmem:[%s172 + $0xc] sm:$0xf] %vm640, %v579
      %645 = vst.msk [vmem:[%s172 + $0x10] sm:$0xf] %vm640, %v580
      %646 = vst.msk [vmem:[%s172 + $0x14] sm:$0xf] %vm640, %v581
      %647 = vst.msk [vmem:[%s172 + $0x18] sm:$0xf] %vm640, %v582
      %648 = vst.msk [vmem:[%s172 + $0x1c] sm:$0xf] %vm640, %v583
      %649 = vst.msk [vmem:[%s172 + $0x20] sm:$0xf] %vm640, %v584
      %650 = vst.msk [vmem:[%s172 + $0x24] sm:$0xf] %vm640, %v585
      %651 = vst.msk [vmem:[%s172 + $0x28] sm:$0xf] %vm640, %v586
      %652 = vst.msk [vmem:[%s172 + $0x2c] sm:$0xf] %vm640, %v587
      %653 = vst.msk [vmem:[%s172 + $0x30] sm:$0xf] %vm640, %v588
      %654 = vst.msk [vmem:[%s172 + $0x34] sm:$0xf] %vm640, %v589
      %655 = vst.msk [vmem:[%s172 + $0x38] sm:$0xf] %vm640, %v590
      %656 = vst.msk [vmem:[%s172 + $0x3c] sm:$0xf] %vm640, %v591
      %657 = vst.msk [vmem:[%s172 + $0x40] sm:$0xf] %vm640, %v592
      %658 = vst.msk [vmem:[%s172 + $0x44] sm:$0xf] %vm640, %v593
      %659 = vst.msk [vmem:[%s172 + $0x48] sm:$0xf] %vm640, %v594
      %660 = vst.msk [vmem:[%s172 + $0x4c] sm:$0xf] %vm640, %v595
      %661 = vst.msk [vmem:[%s172 + $0x50] sm:$0xf] %vm640, %v596
      %662 = vst.msk [vmem:[%s172 + $0x54] sm:$0xf] %vm640, %v597
      %663 = vst.msk [vmem:[%s172 + $0x58] sm:$0xf] %vm640, %v598
      %664 = vst.msk [vmem:[%s172 + $0x5c] sm:$0xf] %vm640, %v599
      %665 = vst.msk [vmem:[%s172 + $0x60] sm:$0xf] %vm640, %v600
      %666 = vst.msk [vmem:[%s172 + $0x64] sm:$0xf] %vm640, %v601
      %667 = vst.msk [vmem:[%s172 + $0x68] sm:$0xf] %vm640, %v602
      %668 = vst.msk [vmem:[%s172 + $0x6c] sm:$0xf] %vm640, %v603
      %669 = vst.msk [vmem:[%s172 + $0x70] sm:$0xf] %vm640, %v604
      %670 = vst.msk [vmem:[%s172 + $0x74] sm:$0xf] %vm640, %v605
      %671 = vst.msk [vmem:[%s172 + $0x78] sm:$0xf] %vm640, %v606
      %672 = vst.msk [vmem:[%s172 + $0x7c] sm:$0xf] %vm640, %v607
      %s673 = smul.u32 32, %s14
      %p674 = scmp.lt.s32.totalorder %s673, 63
      %s675 = scalar_select %p674, %s673, 63
      %s676 = smul.addr %s675, 4
      %s677 = scalar_lea.vmem %s3, %s676
      // Predicated region
      $region33: #{vae_forward.7} parent=31 // pred_check
        %p678 = pneg %p100
      $region34: #{vae_forward.7} parent=31 // pred_check_branch
        %680 = sbr.rel (%p678) target = $region36
      $region35: #{vae_forward.7} parent=31 // pred_region
        %s681 = smul.u32 32, %s14
      $region36: #{vae_forward.7} parent=31 // pred_fallthru
        _
    $region32: #{vae_forward.7} parent=5 // pred_fallthru
      _
    %p682 = scmp.le.s32.totalorder 2, %s9
    // Predicated region
    $region37: #{vae_forward.7} parent=5 // pred_check
      %p683 = pneg %p682
    $region38: #{vae_forward.7} parent=5 // pred_check_branch
      %685 = sbr.rel (%p683) target = $region40
    $region39: #{vae_forward.7} parent=5 // pred_region
      %s686 = ssub.s32 %s9, 2
      // Predicated region
      $region41: #{vae_forward.7} parent=39 // pred_check
        %p687 = pneg %p106
      $region42: #{vae_forward.7} parent=39 // pred_check_branch
        %689 = sbr.rel (%p687) target = $region44
      $region43: #{vae_forward.7} parent=39 // pred_region
        %s690 = smul.u32 32, %s15
        %p691 = scmp.lt.s32.totalorder %s690, 63
        %s692 = scalar_select %p691, %s690, 63
        %s693 = smul.addr %s692, 4
        %s694 = scalar_lea.vmem %s3, %s693
      $region44: #{vae_forward.7} parent=39 // pred_fallthru
        _
    $region40: #{vae_forward.7} parent=5 // pred_fallthru
      _
  $region6: #{vae_forward.7} parent=0 // loop_footer
    %s13 = sadd.s32 1, %s9
  $region7: #{vae_forward.7} parent=0 // loop_footer_branch
    %8 = sbr.rel target = $region3
  $region8: #{vae_forward.7} parent=0 // loop_exit
    _

// kernel: vae_forward.9
$region0: #{vae_forward.9}
  #allocation0 [shape = 'u32[]', space=smem, size = 0x4, offset = 0x4, fixed_abs, tag = 'smem constant byte address 0x4 - core index']
  #allocation1 [shape = 'u32[144,128]{1,0:T(1,128)}', space=vmem, size = 0x12000, scoped, tag = 'internal scratch']
  %s0 = inlined_call_operand.vmem [shape: bf16[32,72], index: 0, kind: input, shape index: {}]
  %s1 = inlined_call_operand.vmem [shape: bf16[72,16], index: 1, kind: input, shape index: {}]
  %s2 = inlined_call_operand.vmem [shape: f32[1,16], index: 2, kind: input, shape index: {}]
  %s3 = inlined_call_operand.vmem [shape: f32[1,16], index: 3, kind: input, shape index: {}]
  %s4 = inlined_call_operand.vmem [shape: f32[1,16], index: 4, kind: input, shape index: {}]
  %s5 = inlined_call_operand.vmem [shape: bf16[32,16], index: 5, kind: output, shape index: {}]
  %s6 = sld [smem:[#allocation0]]
  $region30: #{vae_forward.9} parent=0
    _
  %s8 = ssub.s32 1, %s6
  %s9 = scalar_select 0, %s8, %s6
  // Predicated region
  $region2: #{vae_forward.9} parent=0 // pred_check
    _
  $region3: #{vae_forward.9} parent=0 // pred_check_branch
    %11 = sbr.rel (0) target = $region5
  $region4: #{vae_forward.9} parent=0 // pred_region
    _
  $region5: #{vae_forward.9} parent=0 // pred_fallthru
    _
  // Predicated region
  $region6: #{vae_forward.9} parent=0 // pred_check
    _
  $region7: #{vae_forward.9} parent=0 // pred_check_branch
    %13 = sbr.rel (0) target = $region9
  $region8: #{vae_forward.9} parent=0 // pred_region
    _
  $region9: #{vae_forward.9} parent=0 // pred_fallthru
    _
  // Predicated region
  $region10: #{vae_forward.9} parent=0 // pred_check
    _
  $region11: #{vae_forward.9} parent=0 // pred_check_branch
    %15 = sbr.rel (0) target = $region13
  $region12: #{vae_forward.9} parent=0 // pred_region
    _
  $region13: #{vae_forward.9} parent=0 // pred_fallthru
    _
  // Predicated region
  $region14: #{vae_forward.9} parent=0 // pred_check
    _
  $region15: #{vae_forward.9} parent=0 // pred_check_branch
    %17 = sbr.rel (0) target = $region17
  $region16: #{vae_forward.9} parent=0 // pred_region
    _
  $region17: #{vae_forward.9} parent=0 // pred_fallthru
    _
  // Predicated region
  $region18: #{vae_forward.9} parent=0 // pred_check
    _
  $region19: #{vae_forward.9} parent=0 // pred_check_branch
    %19 = sbr.rel (0) target = $region21
  $region20: #{vae_forward.9} parent=0 // pred_region
    _
  $region21: #{vae_forward.9} parent=0 // pred_fallthru
    _
  %v21 = vld [vmem:[%s0] sm:$0xf]
  %v22 = vld [vmem:[%s0 + $0x4] sm:$0xf]
  %v23 = vld [vmem:[%s0 + $0x8] sm:$0xf]
  %v24 = vld [vmem:[%s0 + $0xc] sm:$0xf]
  %v25 = vld [vmem:[%s1] sm:$0xf]
  %v26 = vld [vmem:[%s1 + $0x4] sm:$0xf]
  %v27 = vld [vmem:[%s1 + $0x8] sm:$0xf]
  %v28 = vld [vmem:[%s1 + $0xc] sm:$0xf]
  %v29 = vld [vmem:[%s1 + $0x10] sm:$0xf]
  %v30 = vld [vmem:[%s1 + $0x14] sm:$0xf]
  %v31 = vld [vmem:[%s1 + $0x18] sm:$0xf]
  %v32 = vld [vmem:[%s1 + $0x1c] sm:$0xf]
  %v33 = vld [vmem:[%s1 + $0x20] sm:$0xf]
  %v34 = vld [vmem:[%s2] sm:$0x1]
  %v36 = vlaneseq
  %v37 = vshrl.u32 %v36, 7
  %v38 = vsub.s32 0, %v37
  %v39 = vrot.slane %v34, %v38
  %v45 = vunpack.c.l.b16 %v21
  %v46 = vunpack.c.l.b16 %v22
  %v47 = vunpack.c.l.b16 %v23
  %v48 = vunpack.c.l.b16 %v24
  %v49 = vpack.c.b16 %v46, %v45
  %v50 = vpack.c.b16 %v48, %v47
  %v60 = vunpack.c.l.b16 %v25
  %v61 = vunpack.c.l.b16 %v26
  %v62 = vunpack.c.l.b16 %v27
  %v63 = vunpack.c.l.b16 %v28
  %v64 = vunpack.c.l.b16 %v29
  %v65 = vunpack.c.l.b16 %v30
  %v66 = vunpack.c.l.b16 %v31
  %v67 = vunpack.c.l.b16 %v32
  %v68 = vunpack.c.l.b16 %v33
  %v69 = vpack.c.b16 %v61, %v60
  %v70 = vpack.c.b16 %v63, %v62
  %v71 = vpack.c.b16 %v65, %v64
  %v72 = vpack.c.b16 %v67, %v66
  %v73 = vpack.c.b16 %v68, %v68
  %vm78 = vcmask 588800
  %v80 = vsel %vm78, %v49, 0
  %v83 = vsel %vm78, %v50, 0
  %vm85 = vcmask 1043456
  %v87 = vsel %vm85, %v73, 0
  %89 = vmatprep.subr.bf16.mxu0 0
  %90 = vmatpush1.bf16.msra.mxu0 %v69
  %91 = vmatprep.subr.bf16.mxu0 0
  %92 = vmatpush1.bf16.msra.mxu0 %v70
  %93 = vmatprep.subr.bf16.mxu0 0
  %94 = vmatpush1.bf16.msra.mxu0 %v71
  %95 = vmatprep.subr.bf16.mxu0 0
  %96 = vmatpush1.bf16.msra.mxu0 %v72
  %97 = vmatprep.subr.bf16.mxu0 0
  %98 = vmatpush1.bf16.msra.mxu0 %v87
  %99 = vmatprep.subr.bf16.mxu0 0
  %100 = vmatpush1.bf16.msra.mxu0 0
  %101 = vmatprep.subr.bf16.mxu0 0
  %102 = vmatpush1.bf16.msra.mxu0 0
  %103 = vmatprep.subr.bf16.mxu0 0
  %104 = vmatpush1.bf16.msra.mxu0 0
  %105 = vmatprep.subr.bf16.mxu0 0
  %106 = vmatpush1.bf16.msra.mxu0 0
  %107 = vmatprep.subr.bf16.mxu0 0
  %108 = vmatpush1.bf16.msra.mxu0 0
  %109 = vmatprep.subr.bf16.mxu0 0
  %110 = vmatpush1.bf16.msra.mxu0 0
  %111 = vmatprep.subr.bf16.mxu0 0
  %112 = vmatpush1.bf16.msra.mxu0 0
  %113 = vmatprep.subr.bf16.mxu0 0
  %114 = vmatpush1.bf16.msra.mxu0 0
  %115 = vmatprep.subr.bf16.mxu0 0
  %116 = vmatpush1.bf16.msra.mxu0 0
  %117 = vmatprep.subr.bf16.mxu0 0
  %118 = vmatpush1.bf16.msra.mxu0 0
  %119 = vmatprep.subr.bf16.mxu0 0
  %120 = vmatpush1.bf16.msra.mxu0 0
  %121 = vmatprep.mubr.bf16.mxu0 0
  %122 = vmatmul.mubr.bf16.gmra.mrb[0].mxu0 %v80
  %v123 = vpop.f32.mrb[0].mxu0
  %v124 = vadd.f32 %v39, %v123
  %v125 = vpop.f32.mrb[0].mxu0
  %v126 = vpop.f32.mrb[0].mxu0
  %v127 = vadd.f32 %v39, %v126
  %v128 = vpop.f32.mrb[0].mxu0
  %129 = vmatprep.mubr.bf16.mxu0 0
  %130 = vmatmul.mubr.bf16.gmra.mrb[0].mxu0 %v83
  %v131 = vpop.f32.mrb[0].mxu0
  %v132 = vadd.f32 %v39, %v131
  %v133 = vpop.f32.mrb[0].mxu0
  %v134 = vpop.f32.mrb[0].mxu0
  %v135 = vadd.f32 %v39, %v134
  %v136 = vpop.f32.mrb[0].mxu0
  %137 = vdwg.mxu0
  %vm138 = vcmask 130048
  %v139 = vsel %vm138, %v124, 0.0
  %v140 = vsel %vm138, %v127, 0.0
  %v141 = vadd.f32 %v139, %v140
  %v142 = vsel %vm138, %v132, 0.0
  %v143 = vadd.f32 %v141, %v142
  %v144 = vsel %vm138, %v135, 0.0
  %v145 = vadd.f32 %v143, %v144
  %v146 = vrot.slane %v145, 4
  %v147 = vadd.f32 %v145, %v146
  %v148 = vrot.slane %v147, 2
  %v149 = vadd.f32 %v147, %v148
  %v150 = vrot.slane %v149, 1
  %v151 = vadd.f32 %v149, %v150
  %v152 = vrcp.pop 32.0
  %v153 = vmul.f32 %v151, %v152
  %v154 = vsub.f32 %v124, %v153
  %v155 = vsub.f32 %v127, %v153
  %v156 = vsub.f32 %v132, %v153
  %v157 = vsub.f32 %v135, %v153
  %v158 = vmul.f32 %v154, %v154
  %v159 = vmul.f32 %v155, %v155
  %v160 = vmul.f32 %v156, %v156
  %v161 = vmul.f32 %v157, %v157
  %v162 = vsel %vm138, %v158, 0.0
  %v163 = vsel %vm138, %v159, 0.0
  %v164 = vadd.f32 %v162, %v163
  %v165 = vsel %vm138, %v160, 0.0
  %v166 = vadd.f32 %v164, %v165
  %v167 = vsel %vm138, %v161, 0.0
  %v168 = vadd.f32 %v166, %v167
  %v169 = vrot.slane %v168, 4
  %v170 = vadd.f32 %v168, %v169
  %v171 = vrot.slane %v170, 2
  %v172 = vadd.f32 %v170, %v171
  %v173 = vrot.slane %v172, 1
  %v174 = vadd.f32 %v172, %v173
  %v175 = vmul.f32 %v174, %v152
  %v176 = vld [vmem:[%s3] sm:$0x1]
  %v177 = vadd.f32 %v175, 1e-05
  %v178 = vrsqrt.pop %v177
  %v179 = vmul.f32 %v176, %v178
  %v180 = vld [vmem:[%s4] sm:$0x1]
  %v181 = vmul.f32 %v153, %v179
  %v182 = vsub.f32 %v180, %v181
  %v184 = vlaneseq
  %v185 = vshrl.u32 %v184, 7
  %v186 = vsub.s32 0, %v185
  %v187 = vrot.slane %v179, %v186
  %v189 = vmul.f32 %v124, %v187
  %v190 = vmul.f32 %v127, %v187
  %v191 = vmul.f32 %v132, %v187
  %v192 = vmul.f32 %v135, %v187
  %v194 = vlaneseq
  %v195 = vshrl.u32 %v194, 7
  %v196 = vsub.s32 0, %v195
  %v197 = vrot.slane %v182, %v196
  %v199 = vadd.f32 %v189, %v197
  %v200 = vadd.f32 %v190, %v197
  %v201 = vadd.f32 %v191, %v197
  %v202 = vadd.f32 %v192, %v197
  %v203 = vmax.f32 %v199, 0.0
  %v204 = vmax.f32 %v200, 0.0
  %v205 = vmax.f32 %v201, 0.0
  %v206 = vmax.f32 %v202, 0.0
  %v207 = vpack.c.bf16 %v204, %v203
  %v208 = vpack.c.bf16 %v206, %v205
  %v211 = vunpack.c.l.b16 %v207
  %v212 = vunpack.c.h.b16 %v207
  %v213 = vunpack.c.l.b16 %v208
  %v214 = vunpack.c.h.b16 %v208
  %v215 = vpack.c.b16 %v211, %v211
  %v216 = vpack.c.b16 %v212, %v212
  %v217 = vpack.c.b16 %v213, %v213
  %v218 = vpack.c.b16 %v214, %v214
  %vm223 = vcmask 125952
  %224 = vst.msk [vmem:[%s5] sm:$0xf] %vm223, %v215
  %225 = vst.msk [vmem:[%s5 + $0x4] sm:$0xf] %vm223, %v216
  %226 = vst.msk [vmem:[%s5 + $0x8] sm:$0xf] %vm223, %v217
  %227 = vst.msk [vmem:[%s5 + $0xc] sm:$0xf] %vm223, %v218
  // Predicated region
  $region22: #{vae_forward.9} parent=0 // pred_check
    _
  $region23: #{vae_forward.9} parent=0 // pred_check_branch
    %229 = sbr.rel (0) target = $region25
  $region24: #{vae_forward.9} parent=0 // pred_region
    _
  $region25: #{vae_forward.9} parent=0 // pred_fallthru
    _
  // Predicated region
  $region26: #{vae_forward.9} parent=0 // pred_check
    _
  $region27: #{vae_forward.9} parent=0 // pred_check_branch
    %231 = sbr.rel (0) target = $region29
  $region28: #{vae_forward.9} parent=0 // pred_region
    _
  $region29: #{vae_forward.9} parent=0 // pred_fallthru
    _

// kernel: vae_forward.10
$region0: #{vae_forward.10}
  #allocation0 [shape = 'u32[]', space=smem, size = 0x4, offset = 0x4, fixed_abs, tag = 'smem constant byte address 0x4 - core index']
  #allocation1 [shape = 'u32[144,128]{1,0:T(1,128)}', space=vmem, size = 0x12000, scoped, tag = 'internal scratch']
  %s0 = inlined_call_operand.vmem [shape: bf16[2,256], index: 0, kind: input, shape index: {}]
  %s1 = inlined_call_operand.vmem [shape: bf16[256,32], index: 1, kind: input, shape index: {}]
  %s2 = inlined_call_operand.vmem [shape: f32[1,32], index: 2, kind: input, shape index: {}]
  %s3 = inlined_call_operand.vmem [shape: bf16[32,32], index: 3, kind: input, shape index: {}]
  %s4 = inlined_call_operand.vmem [shape: f32[1,32], index: 4, kind: input, shape index: {}]
  %s5 = inlined_call_operand.vmem [shape: bf16[32,32], index: 5, kind: input, shape index: {}]
  %s6 = inlined_call_operand.vmem [shape: f32[1,32], index: 6, kind: input, shape index: {}]
  %s7 = inlined_call_operand.vmem [shape: f32[2,32], index: 7, kind: input, shape index: {}]
  %s8 = inlined_call_operand.vmem [shape: f32[2,32], index: 8, kind: output, shape index: {0}]
  %s9 = inlined_call_operand.hbm [shape: f32[2,32], index: 9, kind: output, shape index: {1}]
  %10 = xla_tuple %s8, %s9
  %s11 = sld [smem:[#allocation0]]
  $region50: #{vae_forward.10} parent=0
    _
  %s13 = ssub.s32 1, %s11
  %s14 = scalar_select 0, %s13, %s11
  $region1: #{vae_forward.10} parent=0
    #allocation2 [shape = 'u8[1024]{0}', space=vmem, size = 0x400, scoped, tag = 'output window, operand 1, single buffered']
    #allocation3 [shape = 's32[1]{0}', space=sflag, size = 0x4, scoped, tag = 'scoped memory for vae_forward.10']
    %15 = vsyncpa [#allocation3], 0
    // Predicated region
    $region2: #{vae_forward.10} parent=1 // pred_check
      _
    $region3: #{vae_forward.10} parent=1 // pred_check_branch
      %17 = sbr.rel (0) target = $region5
    $region4: #{vae_forward.10} parent=1 // pred_region
      _
    $region5: #{vae_forward.10} parent=1 // pred_fallthru
      _
    // Predicated region
    $region6: #{vae_forward.10} parent=1 // pred_check
      _
    $region7: #{vae_forward.10} parent=1 // pred_check_branch
      %19 = sbr.rel (0) target = $region9
    $region8: #{vae_forward.10} parent=1 // pred_region
      _
    $region9: #{vae_forward.10} parent=1 // pred_fallthru
      _
    // Predicated region
    $region10: #{vae_forward.10} parent=1 // pred_check
      _
    $region11: #{vae_forward.10} parent=1 // pred_check_branch
      %21 = sbr.rel (0) target = $region13
    $region12: #{vae_forward.10} parent=1 // pred_region
      _
    $region13: #{vae_forward.10} parent=1 // pred_fallthru
      _
    // Predicated region
    $region14: #{vae_forward.10} parent=1 // pred_check
      _
    $region15: #{vae_forward.10} parent=1 // pred_check_branch
      %23 = sbr.rel (0) target = $region17
    $region16: #{vae_forward.10} parent=1 // pred_region
      _
    $region17: #{vae_forward.10} parent=1 // pred_fallthru
      _
    // Predicated region
    $region18: #{vae_forward.10} parent=1 // pred_check
      _
    $region19: #{vae_forward.10} parent=1 // pred_check_branch
      %25 = sbr.rel (0) target = $region21
    $region20: #{vae_forward.10} parent=1 // pred_region
      _
    $region21: #{vae_forward.10} parent=1 // pred_fallthru
      _
    // Predicated region
    $region22: #{vae_forward.10} parent=1 // pred_check
      _
    $region23: #{vae_forward.10} parent=1 // pred_check_branch
      %27 = sbr.rel (0) target = $region25
    $region24: #{vae_forward.10} parent=1 // pred_region
      _
    $region25: #{vae_forward.10} parent=1 // pred_fallthru
      _
    // Predicated region
    $region26: #{vae_forward.10} parent=1 // pred_check
      _
    $region27: #{vae_forward.10} parent=1 // pred_check_branch
      %29 = sbr.rel (0) target = $region29
    $region28: #{vae_forward.10} parent=1 // pred_region
      _
    $region29: #{vae_forward.10} parent=1 // pred_fallthru
      _
    // Predicated region
    $region30: #{vae_forward.10} parent=1 // pred_check
      _
    $region31: #{vae_forward.10} parent=1 // pred_check_branch
      %31 = sbr.rel (0) target = $region33
    $region32: #{vae_forward.10} parent=1 // pred_region
      _
    $region33: #{vae_forward.10} parent=1 // pred_fallthru
      _
    %v33 = vld [vmem:[%s0] sm:$0x3]
    %v34 = vld [vmem:[%s1] sm:$0xf]
    %v35 = vld [vmem:[%s1 + $0x4] sm:$0xf]
    %v36 = vld [vmem:[%s1 + $0x8] sm:$0xf]
    %v37 = vld [vmem:[%s1 + $0xc] sm:$0xf]
    %v38 = vld [vmem:[%s1 + $0x10] sm:$0xf]
    %v39 = vld [vmem:[%s1 + $0x14] sm:$0xf]
    %v40 = vld [vmem:[%s1 + $0x18] sm:$0xf]
    %v41 = vld [vmem:[%s1 + $0x1c] sm:$0xf]
    %v42 = vld [vmem:[%s1 + $0x20] sm:$0xf]
    %v43 = vld [vmem:[%s1 + $0x24] sm:$0xf]
    %v44 = vld [vmem:[%s1 + $0x28] sm:$0xf]
    %v45 = vld [vmem:[%s1 + $0x2c] sm:$0xf]
    %v46 = vld [vmem:[%s1 + $0x30] sm:$0xf]
    %v47 = vld [vmem:[%s1 + $0x34] sm:$0xf]
    %v48 = vld [vmem:[%s1 + $0x38] sm:$0xf]
    %v49 = vld [vmem:[%s1 + $0x3c] sm:$0xf]
    %v50 = vld [vmem:[%s1 + $0x40] sm:$0xf]
    %v51 = vld [vmem:[%s1 + $0x44] sm:$0xf]
    %v52 = vld [vmem:[%s1 + $0x48] sm:$0xf]
    %v53 = vld [vmem:[%s1 + $0x4c] sm:$0xf]
    %v54 = vld [vmem:[%s1 + $0x50] sm:$0xf]
    %v55 = vld [vmem:[%s1 + $0x54] sm:$0xf]
    %v56 = vld [vmem:[%s1 + $0x58] sm:$0xf]
    %v57 = vld [vmem:[%s1 + $0x5c] sm:$0xf]
    %v58 = vld [vmem:[%s1 + $0x60] sm:$0xf]
    %v59 = vld [vmem:[%s1 + $0x64] sm:$0xf]
    %v60 = vld [vmem:[%s1 + $0x68] sm:$0xf]
    %v61 = vld [vmem:[%s1 + $0x6c] sm:$0xf]
    %v62 = vld [vmem:[%s1 + $0x70] sm:$0xf]
    %v63 = vld [vmem:[%s1 + $0x74] sm:$0xf]
    %v64 = vld [vmem:[%s1 + $0x78] sm:$0xf]
    %v65 = vld [vmem:[%s1 + $0x7c] sm:$0xf]
    %v66 = vld [vmem:[%s2] sm:$0x1]
    %v68 = vlaneseq
    %v69 = vshrl.u32 %v68, 7
    %v70 = vsub.s32 0, %v69
    %v71 = vrot.slane %v66, %v70
    %v75 = vunpack.c.l.s4 1966171168
    %v76 = vunpack.c.0.s8 %v75
    %v77 = vlaneseq
    %v78 = vshrl.u32 %v77, 7
    %v79 = vsub.s32 %v76, %v78
    %v80 = vrot.slane %v33, %v79
    %v81 = vcombine.high %v80, %v80
    %v83 = vunpack.c.l.s4 1966171168
    %v84 = vunpack.c.0.s8 %v83
    %v85 = vlaneseq
    %v86 = vshrl.u32 %v85, 7
    %v87 = vsub.s32 %v84, %v86
    %v88 = vrot.slane %v80, %v87
    %v90 = vunpack.c.l.s4 1966171168
    %v91 = vunpack.c.0.s8 %v90
    %v92 = vlaneseq
    %v93 = vshrl.u32 %v92, 7
    %v94 = vsub.s32 %v91, %v93
    %v95 = vrot.slane %v81, %v94
    %v130 = vunpack.c.l.b16 %v34
    %v131 = vunpack.c.l.b16 %v35
    %v132 = vunpack.c.l.b16 %v36
    %v133 = vunpack.c.l.b16 %v37
    %v134 = vunpack.c.l.b16 %v38
    %v135 = vunpack.c.l.b16 %v39
    %v136 = vunpack.c.l.b16 %v40
    %v137 = vunpack.c.l.b16 %v41
    %v138 = vunpack.c.l.b16 %v42
    %v139 = vunpack.c.l.b16 %v43
    %v140 = vunpack.c.l.b16 %v44
    %v141 = vunpack.c.l.b16 %v45
    %v142 = vunpack.c.l.b16 %v46
    %v143 = vunpack.c.l.b16 %v47
    %v144 = vunpack.c.l.b16 %v48
    %v145 = vunpack.c.l.b16 %v49
    %v146 = vunpack.c.l.b16 %v50
    %v147 = vunpack.c.l.b16 %v51
    %v148 = vunpack.c.l.b16 %v52
    %v149 = vunpack.c.l.b16 %v53
    %v150 = vunpack.c.l.b16 %v54
    %v151 = vunpack.c.l.b16 %v55
    %v152 = vunpack.c.l.b16 %v56
    %v153 = vunpack.c.l.b16 %v57
    %v154 = vunpack.c.l.b16 %v58
    %v155 = vunpack.c.l.b16 %v59
    %v156 = vunpack.c.l.b16 %v60
    %v157 = vunpack.c.l.b16 %v61
    %v158 = vunpack.c.l.b16 %v62
    %v159 = vunpack.c.l.b16 %v63
    %v160 = vunpack.c.l.b16 %v64
    %v161 = vunpack.c.l.b16 %v65
    %v162 = vpack.c.b16 %v131, %v130
    %v163 = vpack.c.b16 %v133, %v132
    %v164 = vpack.c.b16 %v135, %v134
    %v165 = vpack.c.b16 %v137, %v136
    %v166 = vpack.c.b16 %v139, %v138
    %v167 = vpack.c.b16 %v141, %v140
    %v168 = vpack.c.b16 %v143, %v142
    %v169 = vpack.c.b16 %v145, %v144
    %v170 = vpack.c.b16 %v147, %v146
    %v171 = vpack.c.b16 %v149, %v148
    %v172 = vpack.c.b16 %v151, %v150
    %v173 = vpack.c.b16 %v153, %v152
    %v174 = vpack.c.b16 %v155, %v154
    %v175 = vpack.c.b16 %v157, %v156
    %v176 = vpack.c.b16 %v159, %v158
    %v177 = vpack.c.b16 %v161, %v160
    %194 = vmatprep.subr.bf16.mxu0 0
    %195 = vmatpush1.bf16.msra.mxu0 %v162
    %196 = vmatprep.subr.bf16.mxu0 0
    %197 = vmatpush1.bf16.msra.mxu0 %v163
    %198 = vmatprep.subr.bf16.mxu0 0
    %199 = vmatpush1.bf16.msra.mxu0 %v164
    %200 = vmatprep.subr.bf16.mxu0 0
    %201 = vmatpush1.bf16.msra.mxu0 %v165
    %202 = vmatprep.subr.bf16.mxu0 0
    %203 = vmatpush1.bf16.msra.mxu0 %v166
    %204 = vmatprep.subr.bf16.mxu0 0
    %205 = vmatpush1.bf16.msra.mxu0 %v167
    %206 = vmatprep.subr.bf16.mxu0 0
    %207 = vmatpush1.bf16.msra.mxu0 %v168
    %208 = vmatprep.subr.bf16.mxu0 0
    %209 = vmatpush1.bf16.msra.mxu0 %v169
    %210 = vmatprep.subr.bf16.mxu0 0
    %211 = vmatpush1.bf16.msra.mxu0 %v170
    %212 = vmatprep.subr.bf16.mxu0 0
    %213 = vmatpush1.bf16.msra.mxu0 %v171
    %214 = vmatprep.subr.bf16.mxu0 0
    %215 = vmatpush1.bf16.msra.mxu0 %v172
    %216 = vmatprep.subr.bf16.mxu0 0
    %217 = vmatpush1.bf16.msra.mxu0 %v173
    %218 = vmatprep.subr.bf16.mxu0 0
    %219 = vmatpush1.bf16.msra.mxu0 %v174
    %220 = vmatprep.subr.bf16.mxu0 0
    %221 = vmatpush1.bf16.msra.mxu0 %v175
    %222 = vmatprep.subr.bf16.mxu0 0
    %223 = vmatpush1.bf16.msra.mxu0 %v176
    %224 = vmatprep.subr.bf16.mxu0 0
    %225 = vmatpush1.bf16.msra.mxu0 %v177
    %226 = vmatprep.mubr.bf16.mxu0 %v95
    %227 = vmatmul.mubr.bf16.gmra.mrb[0].mxu0 %v88
    %v228 = vpop.f32.mrb[0].mxu0
    %v229 = vadd.f32 %v71, %v228
    %v230 = vpop.f32.mrb[0].mxu0
    %v231 = vpop.f32.mrb[0].mxu0
    %v232 = vpop.f32.mrb[0].mxu0
    %233 = vdwg.mxu0
    %v234 = vmax.f32 %v229, 0.0
    %v235 = vpack.c.bf16 %v234, %v234
    %v236 = vld [vmem:[%s3] sm:$0xf]
    %v237 = vld [vmem:[%s3 + $0x4] sm:$0xf]
    %v238 = vld [vmem:[%s3 + $0x8] sm:$0xf]
    %v239 = vld [vmem:[%s3 + $0xc] sm:$0xf]
    %v240 = vld [vmem:[%s4] sm:$0x1]
    %v242 = vlaneseq
    %v243 = vshrl.u32 %v242, 7
    %v244 = vsub.s32 0, %v243
    %v245 = vrot.slane %v240, %v244
    %v251 = vunpack.c.l.b16 %v236
    %v252 = vunpack.c.l.b16 %v237
    %v253 = vunpack.c.l.b16 %v238
    %v254 = vunpack.c.l.b16 %v239
    %v255 = vpack.c.b16 %v252, %v251
    %v256 = vpack.c.b16 %v254, %v253
    %vm259 = vcmask 261120
    %v261 = vsel %vm259, %v235, 0
    %263 = vmatprep.subr.bf16.mxu0 0
    %264 = vmatpush1.bf16.msra.mxu0 %v255
    %265 = vmatprep.subr.bf16.mxu0 0
    %266 = vmatpush1.bf16.msra.mxu0 %v256
    %267 = vmatprep.subr.bf16.mxu0 0
    %268 = vmatpush1.bf16.msra.mxu0 0
    %269 = vmatprep.subr.bf16.mxu0 0
    %270 = vmatpush1.bf16.msra.mxu0 0
    %271 = vmatprep.subr.bf16.mxu0 0
    %272 = vmatpush1.bf16.msra.mxu0 0
    %273 = vmatprep.subr.bf16.mxu0 0
    %274 = vmatpush1.bf16.msra.mxu0 0
    %275 = vmatprep.subr.bf16.mxu0 0
    %276 = vmatpush1.bf16.msra.mxu0 0
    %277 = vmatprep.subr.bf16.mxu0 0
    %278 = vmatpush1.bf16.msra.mxu0 0
    %279 = vmatprep.subr.bf16.mxu0 0
    %280 = vmatpush1.bf16.msra.mxu0 0
    %281 = vmatprep.subr.bf16.mxu0 0
    %282 = vmatpush1.bf16.msra.mxu0 0
    %283 = vmatprep.subr.bf16.mxu0 0
    %284 = vmatpush1.bf16.msra.mxu0 0
    %285 = vmatprep.subr.bf16.mxu0 0
    %286 = vmatpush1.bf16.msra.mxu0 0
    %287 = vmatprep.subr.bf16.mxu0 0
    %288 = vmatpush1.bf16.msra.mxu0 0
    %289 = vmatprep.subr.bf16.mxu0 0
    %290 = vmatpush1.bf16.msra.mxu0 0
    %291 = vmatprep.subr.bf16.mxu0 0
    %292 = vmatpush1.bf16.msra.mxu0 0
    %293 = vmatprep.subr.bf16.mxu0 0
    %294 = vmatpush1.bf16.msra.mxu0 0
    %295 = vmatprep.mubr.bf16.mxu0 0
    %296 = vmatmul.mubr.bf16.gmra.mrb[0].mxu0 %v261
    %v297 = vpop.f32.mrb[0].mxu0
    %v298 = vadd.f32 %v245, %v297
    %v299 = vpop.f32.mrb[0].mxu0
    %v300 = vpop.f32.mrb[0].mxu0
    %v301 = vpop.f32.mrb[0].mxu0
    %302 = vdwg.mxu0
    %v303 = vld [vmem:[%s5] sm:$0xf]
    %v304 = vld [vmem:[%s5 + $0x4] sm:$0xf]
    %v305 = vld [vmem:[%s5 + $0x8] sm:$0xf]
    %v306 = vld [vmem:[%s5 + $0xc] sm:$0xf]
    %v307 = vld [vmem:[%s6] sm:$0x1]
    %v309 = vlaneseq
    %v310 = vshrl.u32 %v309, 7
    %v311 = vsub.s32 0, %v310
    %v312 = vrot.slane %v307, %v311
    %v318 = vunpack.c.l.b16 %v303
    %v319 = vunpack.c.l.b16 %v304
    %v320 = vunpack.c.l.b16 %v305
    %v321 = vunpack.c.l.b16 %v306
    %v322 = vpack.c.b16 %v319, %v318
    %v323 = vpack.c.b16 %v321, %v320
    %326 = vmatprep.subr.bf16.mxu0 0
    %327 = vmatpush1.bf16.msra.mxu0 %v322
    %328 = vmatprep.subr.bf16.mxu0 0
    %329 = vmatpush1.bf16.msra.mxu0 %v323
    %330 = vmatprep.subr.bf16.mxu0 0
    %331 = vmatpush1.bf16.msra.mxu0 0
    %332 = vmatprep.subr.bf16.mxu0 0
    %333 = vmatpush1.bf16.msra.mxu0 0
    %334 = vmatprep.subr.bf16.mxu0 0
    %335 = vmatpush1.bf16.msra.mxu0 0
    %336 = vmatprep.subr.bf16.mxu0 0
    %337 = vmatpush1.bf16.msra.mxu0 0
    %338 = vmatprep.subr.bf16.mxu0 0
    %339 = vmatpush1.bf16.msra.mxu0 0
    %340 = vmatprep.subr.bf16.mxu0 0
    %341 = vmatpush1.bf16.msra.mxu0 0
    %342 = vmatprep.subr.bf16.mxu0 0
    %343 = vmatpush1.bf16.msra.mxu0 0
    %344 = vmatprep.subr.bf16.mxu0 0
    %345 = vmatpush1.bf16.msra.mxu0 0
    %346 = vmatprep.subr.bf16.mxu0 0
    %347 = vmatpush1.bf16.msra.mxu0 0
    %348 = vmatprep.subr.bf16.mxu0 0
    %349 = vmatpush1.bf16.msra.mxu0 0
    %350 = vmatprep.subr.bf16.mxu0 0
    %351 = vmatpush1.bf16.msra.mxu0 0
    %352 = vmatprep.subr.bf16.mxu0 0
    %353 = vmatpush1.bf16.msra.mxu0 0
    %354 = vmatprep.subr.bf16.mxu0 0
    %355 = vmatpush1.bf16.msra.mxu0 0
    %356 = vmatprep.subr.bf16.mxu0 0
    %357 = vmatpush1.bf16.msra.mxu0 0
    %358 = vmatprep.mubr.bf16.mxu0 0
    %359 = vmatmul.mubr.bf16.gmra.mrb[0].mxu0 %v261
    %v360 = vpop.f32.mrb[0].mxu0
    %v361 = vadd.f32 %v312, %v360
    %v362 = vpop.f32.mrb[0].mxu0
    %v363 = vpop.f32.mrb[0].mxu0
    %v364 = vpop.f32.mrb[0].mxu0
    %365 = vdwg.mxu0
    %v366 = vmul.f32 %v361, 1.442695
    %v367 = vpow.pop %v366
    %v368 = vld [vmem:[%s7] sm:$0x3]
    %v369 = vmul.f32 %v368, %v367
    %v370 = vadd.f32 %v298, %v369
    %vm371 = vcmask 254976
    %372 = vst.msk [vmem:[%s8] sm:$0x3] %vm371, %v370
    %v373 = vmul.f32 %v367, %v367
    %v374 = vmul.f32 %v298, %v298
    %v375 = vadd.f32 %v373, %v374
    %v376 = vmul.f32 %v361, 2.0
    %v377 = vsub.f32 %v375, %v376
    %v378 = vsub.f32 %v377, 1.0
    %v379 = vmul.f32 %v378, 0.5
    %380 = vst.msk [vmem:[#allocation2] sm:$0x3] %vm371, %v379
    // Predicated region
    $region34: #{vae_forward.10} parent=1 // pred_check
      _
    $region35: #{vae_forward.10} parent=1 // pred_check_branch
      %382 = sbr.rel (0) target = $region37
    $region36: #{vae_forward.10} parent=1 // pred_region
      _
    $region37: #{vae_forward.10} parent=1 // pred_fallthru
      _
    // Predicated region
    $region38: #{vae_forward.10} parent=1 // pred_check
      _
    $region39: #{vae_forward.10} parent=1 // pred_check_branch
      %384 = sbr.rel (0) target = $region41
    $region40: #{vae_forward.10} parent=1 // pred_region
      %s386 = ssub.s32 32, 32
      %387 = vsyncadd [#allocation3], %s386
      %s389 = sshll.u32 [#allocation2], 4
      %s390 = int_to_ptr.vmem [resolvable:$true] %s389
      %392 = dma.vmem_to_hbm [thread:$0]  %s390, 32, %s9, [#allocation3]
    $region41: #{vae_forward.10} parent=1 // pred_fallthru
      _
    // Predicated region
    $region42: #{vae_forward.10} parent=1 // pred_check
      _
    $region43: #{vae_forward.10} parent=1 // pred_check_branch
      %394 = sbr.rel (0) target = $region45
    $region44: #{vae_forward.10} parent=1 // pred_region
      _
    $region45: #{vae_forward.10} parent=1 // pred_fallthru
      _
    // Predicated region
    $region46: #{vae_forward.10} parent=1 // pred_check
      _
    $region47: #{vae_forward.10} parent=1 // pred_check_branch
      %396 = sbr.rel (0) target = $region49
    $region48: #{vae_forward.10} parent=1 // pred_region
      %397 = dma.done [#allocation3], 32
    $region49: #{vae_forward.10} parent=1 // pred_fallthru
      _
    %398 = vsyncpa [#allocation3], 1

// kernel: vae_forward.11
$region0: #{vae_forward.11}
  #allocation0 [shape = 'u32[]', space=smem, size = 0x4, offset = 0x4, fixed_abs, tag = 'smem constant byte address 0x4 - core index']
  #allocation1 [shape = 'u32[144,128]{1,0:T(1,128)}', space=vmem, size = 0x12000, scoped, tag = 'internal scratch']
  %s0 = inlined_call_operand.vmem [shape: bf16[2,32], index: 0, kind: input, shape index: {}]
  %s1 = inlined_call_operand.vmem [shape: bf16[32,64], index: 1, kind: input, shape index: {}]
  %s2 = inlined_call_operand.vmem [shape: f32[1,64], index: 2, kind: input, shape index: {}]
  %s3 = inlined_call_operand.vmem [shape: bf16[64,256], index: 3, kind: input, shape index: {}]
  %s4 = inlined_call_operand.vmem [shape: f32[1,256], index: 4, kind: input, shape index: {}]
  %s5 = inlined_call_operand.vmem [shape: bf16[2,256], index: 5, kind: output, shape index: {}]
  %s6 = sld [smem:[#allocation0]]
  $region30: #{vae_forward.11} parent=0
    _
  %s8 = ssub.s32 1, %s6
  %s9 = scalar_select 0, %s8, %s6
  // Predicated region
  $region2: #{vae_forward.11} parent=0 // pred_check
    _
  $region3: #{vae_forward.11} parent=0 // pred_check_branch
    %11 = sbr.rel (0) target = $region5
  $region4: #{vae_forward.11} parent=0 // pred_region
    _
  $region5: #{vae_forward.11} parent=0 // pred_fallthru
    _
  // Predicated region
  $region6: #{vae_forward.11} parent=0 // pred_check
    _
  $region7: #{vae_forward.11} parent=0 // pred_check_branch
    %13 = sbr.rel (0) target = $region9
  $region8: #{vae_forward.11} parent=0 // pred_region
    _
  $region9: #{vae_forward.11} parent=0 // pred_fallthru
    _
  // Predicated region
  $region10: #{vae_forward.11} parent=0 // pred_check
    _
  $region11: #{vae_forward.11} parent=0 // pred_check_branch
    %15 = sbr.rel (0) target = $region13
  $region12: #{vae_forward.11} parent=0 // pred_region
    _
  $region13: #{vae_forward.11} parent=0 // pred_fallthru
    _
  // Predicated region
  $region14: #{vae_forward.11} parent=0 // pred_check
    _
  $region15: #{vae_forward.11} parent=0 // pred_check_branch
    %17 = sbr.rel (0) target = $region17
  $region16: #{vae_forward.11} parent=0 // pred_region
    _
  $region17: #{vae_forward.11} parent=0 // pred_fallthru
    _
  // Predicated region
  $region18: #{vae_forward.11} parent=0 // pred_check
    _
  $region19: #{vae_forward.11} parent=0 // pred_check_branch
    %19 = sbr.rel (0) target = $region21
  $region20: #{vae_forward.11} parent=0 // pred_region
    _
  $region21: #{vae_forward.11} parent=0 // pred_fallthru
    _
  %v21 = vld [vmem:[%s0] sm:$0x1]
  %v22 = vld [vmem:[%s1] sm:$0xf]
  %v23 = vld [vmem:[%s1 + $0x4] sm:$0xf]
  %v24 = vld [vmem:[%s1 + $0x8] sm:$0xf]
  %v25 = vld [vmem:[%s1 + $0xc] sm:$0xf]
  %v26 = vld [vmem:[%s2] sm:$0x1]
  %v28 = vlaneseq
  %v29 = vshrl.u32 %v28, 7
  %v30 = vsub.s32 0, %v29
  %v31 = vrot.slane %v26, %v30
  %v37 = vunpack.c.l.b16 %v22
  %v38 = vunpack.c.l.b16 %v23
  %v39 = vunpack.c.l.b16 %v24
  %v40 = vunpack.c.l.b16 %v25
  %v41 = vpack.c.b16 %v38, %v37
  %v42 = vpack.c.b16 %v40, %v39
  %vm45 = vcmask 261120
  %v47 = vsel %vm45, %v21, 0
  %49 = vmatprep.subr.bf16.mxu0 0
  %50 = vmatpush1.bf16.msra.mxu0 %v41
  %51 = vmatprep.subr.bf16.mxu0 0
  %52 = vmatpush1.bf16.msra.mxu0 %v42
  %53 = vmatprep.subr.bf16.mxu0 0
  %54 = vmatpush1.bf16.msra.mxu0 0
  %55 = vmatprep.subr.bf16.mxu0 0
  %56 = vmatpush1.bf16.msra.mxu0 0
  %57 = vmatprep.subr.bf16.mxu0 0
  %58 = vmatpush1.bf16.msra.mxu0 0
  %59 = vmatprep.subr.bf16.mxu0 0
  %60 = vmatpush1.bf16.msra.mxu0 0
  %61 = vmatprep.subr.bf16.mxu0 0
  %62 = vmatpush1.bf16.msra.mxu0 0
  %63 = vmatprep.subr.bf16.mxu0 0
  %64 = vmatpush1.bf16.msra.mxu0 0
  %65 = vmatprep.subr.bf16.mxu0 0
  %66 = vmatpush1.bf16.msra.mxu0 0
  %67 = vmatprep.subr.bf16.mxu0 0
  %68 = vmatpush1.bf16.msra.mxu0 0
  %69 = vmatprep.subr.bf16.mxu0 0
  %70 = vmatpush1.bf16.msra.mxu0 0
  %71 = vmatprep.subr.bf16.mxu0 0
  %72 = vmatpush1.bf16.msra.mxu0 0
  %73 = vmatprep.subr.bf16.mxu0 0
  %74 = vmatpush1.bf16.msra.mxu0 0
  %75 = vmatprep.subr.bf16.mxu0 0
  %76 = vmatpush1.bf16.msra.mxu0 0
  %77 = vmatprep.subr.bf16.mxu0 0
  %78 = vmatpush1.bf16.msra.mxu0 0
  %79 = vmatprep.subr.bf16.mxu0 0
  %80 = vmatpush1.bf16.msra.mxu0 0
  %81 = vmatprep.mubr.bf16.mxu0 0
  %82 = vmatmul.mubr.bf16.gmra.mrb[0].mxu0 %v47
  %v83 = vpop.f32.mrb[0].mxu0
  %v84 = vadd.f32 %v31, %v83
  %v85 = vpop.f32.mrb[0].mxu0
  %v86 = vpop.f32.mrb[0].mxu0
  %v87 = vpop.f32.mrb[0].mxu0
  %88 = vdwg.mxu0
  %v89 = vmax.f32 %v84, 0.0
  %v90 = vpack.c.bf16 %v89, %v89
  %v91 = vld [vmem:[%s3] sm:$0xff]
  %v92 = vld [vmem:[%s3 + $0x8] sm:$0xff]
  %v93 = vld [vmem:[%s3 + $0x10] sm:$0xff]
  %v94 = vld [vmem:[%s3 + $0x18] sm:$0xff]
  %v95 = vld [vmem:[%s3 + $0x20] sm:$0xff]
  %v96 = vld [vmem:[%s3 + $0x28] sm:$0xff]
  %v97 = vld [vmem:[%s3 + $0x30] sm:$0xff]
  %v98 = vld [vmem:[%s3 + $0x38] sm:$0xff]
  %v99 = vld [vmem:[%s4] sm:$0x3]
  %v101 = vlaneseq
  %v102 = vshrl.u32 %v101, 7
  %v103 = vsub.s32 0, %v102
  %v104 = vrot.slane %v99, %v103
  %v105 = vlaneseq
  %v106 = vshrl.u32 %v105, 7
  %v107 = vsub.s32 1, %v106
  %v108 = vrot.slane %v99, %v107
  %v119 = vunpack.c.l.b16 %v91
  %v120 = vunpack.c.h.b16 %v91
  %v121 = vunpack.c.l.b16 %v92
  %v122 = vunpack.c.h.b16 %v92
  %v123 = vunpack.c.l.b16 %v93
  %v124 = vunpack.c.h.b16 %v93
  %v125 = vunpack.c.l.b16 %v94
  %v126 = vunpack.c.h.b16 %v94
  %v127 = vunpack.c.l.b16 %v95
  %v128 = vunpack.c.h.b16 %v95
  %v129 = vunpack.c.l.b16 %v96
  %v130 = vunpack.c.h.b16 %v96
  %v131 = vunpack.c.l.b16 %v97
  %v132 = vunpack.c.h.b16 %v97
  %v133 = vunpack.c.l.b16 %v98
  %v134 = vunpack.c.h.b16 %v98
  %v135 = vpack.c.b16 %v121, %v119
  %v136 = vpack.c.b16 %v122, %v120
  %v137 = vpack.c.b16 %v125, %v123
  %v138 = vpack.c.b16 %v126, %v124
  %v139 = vpack.c.b16 %v129, %v127
  %v140 = vpack.c.b16 %v130, %v128
  %v141 = vpack.c.b16 %v133, %v131
  %v142 = vpack.c.b16 %v134, %v132
  %vm151 = vcmask 523264
  %v153 = vsel %vm151, %v90, 0
  %155 = vmatprep.subr.bf16.mxu0 %v136
  %156 = vmatpush1.bf16.msra.mxu0 %v135
  %157 = vmatprep.subr.bf16.mxu0 %v138
  %158 = vmatpush1.bf16.msra.mxu0 %v137
  %159 = vmatprep.subr.bf16.mxu0 %v140
  %160 = vmatpush1.bf16.msra.mxu0 %v139
  %161 = vmatprep.subr.bf16.mxu0 %v142
  %162 = vmatpush1.bf16.msra.mxu0 %v141
  %163 = vmatprep.subr.bf16.mxu0 0
  %164 = vmatpush1.bf16.msra.mxu0 0
  %165 = vmatprep.subr.bf16.mxu0 0
  %166 = vmatpush1.bf16.msra.mxu0 0
  %167 = vmatprep.subr.bf16.mxu0 0
  %168 = vmatpush1.bf16.msra.mxu0 0
  %169 = vmatprep.subr.bf16.mxu0 0
  %170 = vmatpush1.bf16.msra.mxu0 0
  %171 = vmatprep.subr.bf16.mxu0 0
  %172 = vmatpush1.bf16.msra.mxu0 0
  %173 = vmatprep.subr.bf16.mxu0 0
  %174 = vmatpush1.bf16.msra.mxu0 0
  %175 = vmatprep.subr.bf16.mxu0 0
  %176 = vmatpush1.bf16.msra.mxu0 0
  %177 = vmatprep.subr.bf16.mxu0 0
  %178 = vmatpush1.bf16.msra.mxu0 0
  %179 = vmatprep.subr.bf16.mxu0 0
  %180 = vmatpush1.bf16.msra.mxu0 0
  %181 = vmatprep.subr.bf16.mxu0 0
  %182 = vmatpush1.bf16.msra.mxu0 0
  %183 = vmatprep.subr.bf16.mxu0 0
  %184 = vmatpush1.bf16.msra.mxu0 0
  %185 = vmatprep.subr.bf16.mxu0 0
  %186 = vmatpush1.bf16.msra.mxu0 0
  %187 = vmatprep.mubr.bf16.mxu0 0
  %188 = vmatmul.mubr.bf16.gmra.mrb[0].mxu0 %v153
  %v189 = vpop.f32.mrb[0].mxu0
  %v190 = vadd.f32 %v104, %v189
  %v191 = vpop.f32.mrb[0].mxu0
  %v192 = vadd.f32 %v108, %v191
  %v193 = vpop.f32.mrb[0].mxu0
  %v194 = vpop.f32.mrb[0].mxu0
  %195 = vdwg.mxu0
  %v196 = vpack.c.bf16 %v190, %v190
  %v197 = vpack.c.bf16 %v192, %v192
  %v200 = vcombine.low %v196, %v197
  %v202 = vunpack.c.l.s4 1966171168
  %v203 = vunpack.c.0.s8 %v202
  %v204 = vlaneseq
  %v205 = vshrl.u32 %v204, 7
  %v206 = vsub.s32 %v203, %v205
  %v207 = vrot.slane %v200, %v206
  %v209 = vunpack.c.l.s4 1966171168
  %v210 = vunpack.c.0.s8 %v209
  %v211 = vlaneseq
  %v212 = vshrl.u32 %v211, 7
  %v213 = vsub.s32 %v210, %v212
  %v214 = vrot.slane %v207, %v213
  %216 = vst [vmem:[%s5] sm:$0x3] %v214
  // Predicated region
  $region22: #{vae_forward.11} parent=0 // pred_check
    _
  $region23: #{vae_forward.11} parent=0 // pred_check_branch
    %218 = sbr.rel (0) target = $region25
  $region24: #{vae_forward.11} parent=0 // pred_region
    _
  $region25: #{vae_forward.11} parent=0 // pred_fallthru
    _
  // Predicated region
  $region26: #{vae_forward.11} parent=0 // pred_check
    _
  $region27: #{vae_forward.11} parent=0 // pred_check_branch
    %220 = sbr.rel (0) target = $region29
  $region28: #{vae_forward.11} parent=0 // pred_region
    _
  $region29: #{vae_forward.11} parent=0 // pred_fallthru
    _

// kernel: vae_forward.12
$region0: #{vae_forward.12}
  #allocation0 [shape = 'u32[]', space=smem, size = 0x4, offset = 0x4, fixed_abs, tag = 'smem constant byte address 0x4 - core index']
  #allocation1 [shape = 'u32[144,128]{1,0:T(1,128)}', space=vmem, size = 0x12000, scoped, tag = 'internal scratch']
  %s0 = inlined_call_operand.vmem [shape: bf16[32,144], index: 0, kind: input, shape index: {}]
  %s1 = inlined_call_operand.vmem [shape: bf16[144,8], index: 1, kind: input, shape index: {}]
  %s2 = inlined_call_operand.vmem [shape: bf16[144,8], index: 2, kind: input, shape index: {}]
  %s3 = inlined_call_operand.vmem [shape: bf16[144,8], index: 3, kind: input, shape index: {}]
  %s4 = inlined_call_operand.vmem [shape: bf16[144,8], index: 4, kind: input, shape index: {}]
  %s5 = inlined_call_operand.vmem [shape: f32[1,8], index: 5, kind: input, shape index: {}]
  %s6 = inlined_call_operand.vmem [shape: f32[1,8], index: 6, kind: input, shape index: {}]
  %s7 = inlined_call_operand.vmem [shape: f32[1,8], index: 7, kind: input, shape index: {}]
  %s8 = inlined_call_operand.vmem [shape: bf16[4,32,8], index: 8, kind: output, shape index: {}]
  %s9 = sld [smem:[#allocation0]]
  $region42: #{vae_forward.12} parent=0
    _
  %s11 = ssub.s32 1, %s9
  %s12 = scalar_select 0, %s11, %s9
  // Predicated region
  $region2: #{vae_forward.12} parent=0 // pred_check
    _
  $region3: #{vae_forward.12} parent=0 // pred_check_branch
    %14 = sbr.rel (0) target = $region5
  $region4: #{vae_forward.12} parent=0 // pred_region
    _
  $region5: #{vae_forward.12} parent=0 // pred_fallthru
    _
  // Predicated region
  $region6: #{vae_forward.12} parent=0 // pred_check
    _
  $region7: #{vae_forward.12} parent=0 // pred_check_branch
    %16 = sbr.rel (0) target = $region9
  $region8: #{vae_forward.12} parent=0 // pred_region
    _
  $region9: #{vae_forward.12} parent=0 // pred_fallthru
    _
  // Predicated region
  $region10: #{vae_forward.12} parent=0 // pred_check
    _
  $region11: #{vae_forward.12} parent=0 // pred_check_branch
    %18 = sbr.rel (0) target = $region13
  $region12: #{vae_forward.12} parent=0 // pred_region
    _
  $region13: #{vae_forward.12} parent=0 // pred_fallthru
    _
  // Predicated region
  $region14: #{vae_forward.12} parent=0 // pred_check
    _
  $region15: #{vae_forward.12} parent=0 // pred_check_branch
    %20 = sbr.rel (0) target = $region17
  $region16: #{vae_forward.12} parent=0 // pred_region
    _
  $region17: #{vae_forward.12} parent=0 // pred_fallthru
    _
  // Predicated region
  $region18: #{vae_forward.12} parent=0 // pred_check
    _
  $region19: #{vae_forward.12} parent=0 // pred_check_branch
    %22 = sbr.rel (0) target = $region21
  $region20: #{vae_forward.12} parent=0 // pred_region
    _
  $region21: #{vae_forward.12} parent=0 // pred_fallthru
    _
  // Predicated region
  $region22: #{vae_forward.12} parent=0 // pred_check
    _
  $region23: #{vae_forward.12} parent=0 // pred_check_branch
    %24 = sbr.rel (0) target = $region25
  $region24: #{vae_forward.12} parent=0 // pred_region
    _
  $region25: #{vae_forward.12} parent=0 // pred_fallthru
    _
  // Predicated region
  $region26: #{vae_forward.12} parent=0 // pred_check
    _
  $region27: #{vae_forward.12} parent=0 // pred_check_branch
    %26 = sbr.rel (0) target = $region29
  $region28: #{vae_forward.12} parent=0 // pred_region
    _
  $region29: #{vae_forward.12} parent=0 // pred_fallthru
    _
  // Predicated region
  $region30: #{vae_forward.12} parent=0 // pred_check
    _
  $region31: #{vae_forward.12} parent=0 // pred_check_branch
    %28 = sbr.rel (0) target = $region33
  $region32: #{vae_forward.12} parent=0 // pred_region
    _
  $region33: #{vae_forward.12} parent=0 // pred_fallthru
    _
  %v30 = vld [vmem:[%s0] sm:$0xff]
  %v31 = vld [vmem:[%s0 + $0x8] sm:$0xff]
  %v32 = vld [vmem:[%s0 + $0x10] sm:$0xff]
  %v33 = vld [vmem:[%s0 + $0x18] sm:$0xff]
  %v34 = vld [vmem:[%s5] sm:$0x1]
  %v35 = vld [vmem:[%s1] sm:$0xf]
  %v36 = vld [vmem:[%s1 + $0x4] sm:$0xf]
  %v37 = vld [vmem:[%s1 + $0x8] sm:$0xf]
  %v38 = vld [vmem:[%s1 + $0xc] sm:$0xf]
  %v39 = vld [vmem:[%s1 + $0x10] sm:$0xf]
  %v40 = vld [vmem:[%s1 + $0x14] sm:$0xf]
  %v41 = vld [vmem:[%s1 + $0x18] sm:$0xf]
  %v42 = vld [vmem:[%s1 + $0x1c] sm:$0xf]
  %v43 = vld [vmem:[%s1 + $0x20] sm:$0xf]
  %v44 = vld [vmem:[%s1 + $0x24] sm:$0xf]
  %v45 = vld [vmem:[%s1 + $0x28] sm:$0xf]
  %v46 = vld [vmem:[%s1 + $0x2c] sm:$0xf]
  %v47 = vld [vmem:[%s1 + $0x30] sm:$0xf]
  %v48 = vld [vmem:[%s1 + $0x34] sm:$0xf]
  %v49 = vld [vmem:[%s1 + $0x38] sm:$0xf]
  %v50 = vld [vmem:[%s1 + $0x3c] sm:$0xf]
  %v51 = vld [vmem:[%s1 + $0x40] sm:$0xf]
  %v52 = vld [vmem:[%s1 + $0x44] sm:$0xf]
  %v54 = vlaneseq
  %v55 = vshrl.u32 %v54, 7
  %v56 = vsub.s32 0, %v55
  %v57 = vrot.slane %v34, %v56
  %v63 = vunpack.c.l.b16 %v30
  %v64 = vunpack.c.h.b16 %v30
  %v65 = vunpack.c.l.b16 %v31
  %v66 = vunpack.c.h.b16 %v31
  %v67 = vunpack.c.l.b16 %v32
  %v68 = vunpack.c.h.b16 %v32
  %v69 = vunpack.c.l.b16 %v33
  %v70 = vunpack.c.h.b16 %v33
  %v71 = vpack.c.b16 %v65, %v63
  %v72 = vpack.c.b16 %v66, %v64
  %v73 = vpack.c.b16 %v69, %v67
  %v74 = vpack.c.b16 %v70, %v68
  %v95 = vunpack.c.l.b16 %v35
  %v96 = vunpack.c.l.b16 %v36
  %v97 = vunpack.c.l.b16 %v37
  %v98 = vunpack.c.l.b16 %v38
  %v99 = vunpack.c.l.b16 %v39
  %v100 = vunpack.c.l.b16 %v40
  %v101 = vunpack.c.l.b16 %v41
  %v102 = vunpack.c.l.b16 %v42
  %v103 = vunpack.c.l.b16 %v43
  %v104 = vunpack.c.l.b16 %v44
  %v105 = vunpack.c.l.b16 %v45
  %v106 = vunpack.c.l.b16 %v46
  %v107 = vunpack.c.l.b16 %v47
  %v108 = vunpack.c.l.b16 %v48
  %v109 = vunpack.c.l.b16 %v49
  %v110 = vunpack.c.l.b16 %v50
  %v111 = vunpack.c.l.b16 %v51
  %v112 = vunpack.c.l.b16 %v52
  %v113 = vpack.c.b16 %v96, %v95
  %v114 = vpack.c.b16 %v98, %v97
  %v115 = vpack.c.b16 %v100, %v99
  %v116 = vpack.c.b16 %v102, %v101
  %v117 = vpack.c.b16 %v104, %v103
  %v118 = vpack.c.b16 %v106, %v105
  %v119 = vpack.c.b16 %v108, %v107
  %v120 = vpack.c.b16 %v110, %v109
  %v121 = vpack.c.b16 %v112, %v111
  %vm131 = vcmask 130048
  %v133 = vsel %vm131, %v72, 0
  %v136 = vsel %vm131, %v74, 0
  %138 = vmatprep.subr.bf16.mxu0 0
  %139 = vmatpush1.bf16.msra.mxu0 %v113
  %140 = vmatprep.subr.bf16.mxu0 0
  %141 = vmatpush1.bf16.msra.mxu0 %v114
  %142 = vmatprep.subr.bf16.mxu0 0
  %143 = vmatpush1.bf16.msra.mxu0 %v115
  %144 = vmatprep.subr.bf16.mxu0 0
  %145 = vmatpush1.bf16.msra.mxu0 %v116
  %146 = vmatprep.subr.bf16.mxu0 0
  %147 = vmatpush1.bf16.msra.mxu0 %v117
  %148 = vmatprep.subr.bf16.mxu0 0
  %149 = vmatpush1.bf16.msra.mxu0 %v118
  %150 = vmatprep.subr.bf16.mxu0 0
  %151 = vmatpush1.bf16.msra.mxu0 %v119
  %152 = vmatprep.subr.bf16.mxu0 0
  %153 = vmatpush1.bf16.msra.mxu0 %v120
  %154 = vmatprep.subr.bf16.mxu0 0
  %155 = vmatpush1.bf16.msra.mxu0 %v121
  %156 = vmatprep.subr.bf16.mxu0 0
  %157 = vmatpush1.bf16.msra.mxu0 0
  %158 = vmatprep.subr.bf16.mxu0 0
  %159 = vmatpush1.bf16.msra.mxu0 0
  %160 = vmatprep.subr.bf16.mxu0 0
  %161 = vmatpush1.bf16.msra.mxu0 0
  %162 = vmatprep.subr.bf16.mxu0 0
  %163 = vmatpush1.bf16.msra.mxu0 0
  %164 = vmatprep.subr.bf16.mxu0 0
  %165 = vmatpush1.bf16.msra.mxu0 0
  %166 = vmatprep.subr.bf16.mxu0 0
  %167 = vmatpush1.bf16.msra.mxu0 0
  %168 = vmatprep.subr.bf16.mxu0 0
  %169 = vmatpush1.bf16.msra.mxu0 0
  %170 = vmatprep.mubr.bf16.mxu0 %v133
  %171 = vmatmul.mubr.bf16.gmra.mrb[0].mxu0 %v71
  %v172 = vpop.f32.mrb[0].mxu0
  %v173 = vadd.f32 %v57, %v172
  %v174 = vpop.f32.mrb[0].mxu0
  %v175 = vpop.f32.mrb[0].mxu0
  %v176 = vadd.f32 %v57, %v175
  %v177 = vpop.f32.mrb[0].mxu0
  %178 = vmatprep.mubr.bf16.mxu0 %v136
  %179 = vmatmul.mubr.bf16.gmra.mrb[0].mxu0 %v73
  %v180 = vpop.f32.mrb[0].mxu0
  %v181 = vadd.f32 %v57, %v180
  %v182 = vpop.f32.mrb[0].mxu0
  %v183 = vpop.f32.mrb[0].mxu0
  %v184 = vadd.f32 %v57, %v183
  %v185 = vpop.f32.mrb[0].mxu0
  %186 = vdwg.mxu0
  %v187 = vld [vmem:[%s2] sm:$0xf]
  %v188 = vld [vmem:[%s2 + $0x4] sm:$0xf]
  %v189 = vld [vmem:[%s2 + $0x8] sm:$0xf]
  %v190 = vld [vmem:[%s2 + $0xc] sm:$0xf]
  %v191 = vld [vmem:[%s2 + $0x10] sm:$0xf]
  %v192 = vld [vmem:[%s2 + $0x14] sm:$0xf]
  %v193 = vld [vmem:[%s2 + $0x18] sm:$0xf]
  %v194 = vld [vmem:[%s2 + $0x1c] sm:$0xf]
  %v195 = vld [vmem:[%s2 + $0x20] sm:$0xf]
  %v196 = vld [vmem:[%s2 + $0x24] sm:$0xf]
  %v197 = vld [vmem:[%s2 + $0x28] sm:$0xf]
  %v198 = vld [vmem:[%s2 + $0x2c] sm:$0xf]
  %v199 = vld [vmem:[%s2 + $0x30] sm:$0xf]
  %v200 = vld [vmem:[%s2 + $0x34] sm:$0xf]
  %v201 = vld [vmem:[%s2 + $0x38] sm:$0xf]
  %v202 = vld [vmem:[%s2 + $0x3c] sm:$0xf]
  %v203 = vld [vmem:[%s2 + $0x40] sm:$0xf]
  %v204 = vld [vmem:[%s2 + $0x44] sm:$0xf]
  %v223 = vunpack.c.l.b16 %v187
  %v224 = vunpack.c.l.b16 %v188
  %v225 = vunpack.c.l.b16 %v189
  %v226 = vunpack.c.l.b16 %v190
  %v227 = vunpack.c.l.b16 %v191
  %v228 = vunpack.c.l.b16 %v192
  %v229 = vunpack.c.l.b16 %v193
  %v230 = vunpack.c.l.b16 %v194
  %v231 = vunpack.c.l.b16 %v195
  %v232 = vunpack.c.l.b16 %v196
  %v233 = vunpack.c.l.b16 %v197
  %v234 = vunpack.c.l.b16 %v198
  %v235 = vunpack.c.l.b16 %v199
  %v236 = vunpack.c.l.b16 %v200
  %v237 = vunpack.c.l.b16 %v201
  %v238 = vunpack.c.l.b16 %v202
  %v239 = vunpack.c.l.b16 %v203
  %v240 = vunpack.c.l.b16 %v204
  %v241 = vpack.c.b16 %v224, %v223
  %v242 = vpack.c.b16 %v226, %v225
  %v243 = vpack.c.b16 %v228, %v227
  %v244 = vpack.c.b16 %v230, %v229
  %v245 = vpack.c.b16 %v232, %v231
  %v246 = vpack.c.b16 %v234, %v233
  %v247 = vpack.c.b16 %v236, %v235
  %v248 = vpack.c.b16 %v238, %v237
  %v249 = vpack.c.b16 %v240, %v239
  %259 = vmatprep.subr.bf16.mxu0 0
  %260 = vmatpush1.bf16.msra.mxu0 %v241
  %261 = vmatprep.subr.bf16.mxu0 0
  %262 = vmatpush1.bf16.msra.mxu0 %v242
  %263 = vmatprep.subr.bf16.mxu0 0
  %264 = vmatpush1.bf16.msra.mxu0 %v243
  %265 = vmatprep.subr.bf16.mxu0 0
  %266 = vmatpush1.bf16.msra.mxu0 %v244
  %267 = vmatprep.subr.bf16.mxu0 0
  %268 = vmatpush1.bf16.msra.mxu0 %v245
  %269 = vmatprep.subr.bf16.mxu0 0
  %270 = vmatpush1.bf16.msra.mxu0 %v246
  %271 = vmatprep.subr.bf16.mxu0 0
  %272 = vmatpush1.bf16.msra.mxu0 %v247
  %273 = vmatprep.subr.bf16.mxu0 0
  %274 = vmatpush1.bf16.msra.mxu0 %v248
  %275 = vmatprep.subr.bf16.mxu0 0
  %276 = vmatpush1.bf16.msra.mxu0 %v249
  %277 = vmatprep.subr.bf16.mxu0 0
  %278 = vmatpush1.bf16.msra.mxu0 0
  %279 = vmatprep.subr.bf16.mxu0 0
  %280 = vmatpush1.bf16.msra.mxu0 0
  %281 = vmatprep.subr.bf16.mxu0 0
  %282 = vmatpush1.bf16.msra.mxu0 0
  %283 = vmatprep.subr.bf16.mxu0 0
  %284 = vmatpush1.bf16.msra.mxu0 0
  %285 = vmatprep.subr.bf16.mxu0 0
  %286 = vmatpush1.bf16.msra.mxu0 0
  %287 = vmatprep.subr.bf16.mxu0 0
  %288 = vmatpush1.bf16.msra.mxu0 0
  %289 = vmatprep.subr.bf16.mxu0 0
  %290 = vmatpush1.bf16.msra.mxu0 0
  %291 = vmatprep.mubr.bf16.mxu0 %v133
  %292 = vmatmul.mubr.bf16.gmra.mrb[0].mxu0 %v71
  %v293 = vpop.f32.mrb[0].mxu0
  %v294 = vadd.f32 %v57, %v293
  %v295 = vpop.f32.mrb[0].mxu0
  %v296 = vpop.f32.mrb[0].mxu0
  %v297 = vadd.f32 %v57, %v296
  %v298 = vpop.f32.mrb[0].mxu0
  %299 = vmatprep.mubr.bf16.mxu0 %v136
  %300 = vmatmul.mubr.bf16.gmra.mrb[0].mxu0 %v73
  %v301 = vpop.f32.mrb[0].mxu0
  %v302 = vadd.f32 %v57, %v301
  %v303 = vpop.f32.mrb[0].mxu0
  %v304 = vpop.f32.mrb[0].mxu0
  %v305 = vadd.f32 %v57, %v304
  %v306 = vpop.f32.mrb[0].mxu0
  %307 = vdwg.mxu0
  %v308 = vld [vmem:[%s3] sm:$0xf]
  %v309 = vld [vmem:[%s3 + $0x4] sm:$0xf]
  %v310 = vld [vmem:[%s3 + $0x8] sm:$0xf]
  %v311 = vld [vmem:[%s3 + $0xc] sm:$0xf]
  %v312 = vld [vmem:[%s3 + $0x10] sm:$0xf]
  %v313 = vld [vmem:[%s3 + $0x14] sm:$0xf]
  %v314 = vld [vmem:[%s3 + $0x18] sm:$0xf]
  %v315 = vld [vmem:[%s3 + $0x1c] sm:$0xf]
  %v316 = vld [vmem:[%s3 + $0x20] sm:$0xf]
  %v317 = vld [vmem:[%s3 + $0x24] sm:$0xf]
  %v318 = vld [vmem:[%s3 + $0x28] sm:$0xf]
  %v319 = vld [vmem:[%s3 + $0x2c] sm:$0xf]
  %v320 = vld [vmem:[%s3 + $0x30] sm:$0xf]
  %v321 = vld [vmem:[%s3 + $0x34] sm:$0xf]
  %v322 = vld [vmem:[%s3 + $0x38] sm:$0xf]
  %v323 = vld [vmem:[%s3 + $0x3c] sm:$0xf]
  %v324 = vld [vmem:[%s3 + $0x40] sm:$0xf]
  %v325 = vld [vmem:[%s3 + $0x44] sm:$0xf]
  %v344 = vunpack.c.l.b16 %v308
  %v345 = vunpack.c.l.b16 %v309
  %v346 = vunpack.c.l.b16 %v310
  %v347 = vunpack.c.l.b16 %v311
  %v348 = vunpack.c.l.b16 %v312
  %v349 = vunpack.c.l.b16 %v313
  %v350 = vunpack.c.l.b16 %v314
  %v351 = vunpack.c.l.b16 %v315
  %v352 = vunpack.c.l.b16 %v316
  %v353 = vunpack.c.l.b16 %v317
  %v354 = vunpack.c.l.b16 %v318
  %v355 = vunpack.c.l.b16 %v319
  %v356 = vunpack.c.l.b16 %v320
  %v357 = vunpack.c.l.b16 %v321
  %v358 = vunpack.c.l.b16 %v322
  %v359 = vunpack.c.l.b16 %v323
  %v360 = vunpack.c.l.b16 %v324
  %v361 = vunpack.c.l.b16 %v325
  %v362 = vpack.c.b16 %v345, %v344
  %v363 = vpack.c.b16 %v347, %v346
  %v364 = vpack.c.b16 %v349, %v348
  %v365 = vpack.c.b16 %v351, %v350
  %v366 = vpack.c.b16 %v353, %v352
  %v367 = vpack.c.b16 %v355, %v354
  %v368 = vpack.c.b16 %v357, %v356
  %v369 = vpack.c.b16 %v359, %v358
  %v370 = vpack.c.b16 %v361, %v360
  %380 = vmatprep.subr.bf16.mxu0 0
  %381 = vmatpush1.bf16.msra.mxu0 %v362
  %382 = vmatprep.subr.bf16.mxu0 0
  %383 = vmatpush1.bf16.msra.mxu0 %v363
  %384 = vmatprep.subr.bf16.mxu0 0
  %385 = vmatpush1.bf16.msra.mxu0 %v364
  %386 = vmatprep.subr.bf16.mxu0 0
  %387 = vmatpush1.bf16.msra.mxu0 %v365
  %388 = vmatprep.subr.bf16.mxu0 0
  %389 = vmatpush1.bf16.msra.mxu0 %v366
  %390 = vmatprep.subr.bf16.mxu0 0
  %391 = vmatpush1.bf16.msra.mxu0 %v367
  %392 = vmatprep.subr.bf16.mxu0 0
  %393 = vmatpush1.bf16.msra.mxu0 %v368
  %394 = vmatprep.subr.bf16.mxu0 0
  %395 = vmatpush1.bf16.msra.mxu0 %v369
  %396 = vmatprep.subr.bf16.mxu0 0
  %397 = vmatpush1.bf16.msra.mxu0 %v370
  %398 = vmatprep.subr.bf16.mxu0 0
  %399 = vmatpush1.bf16.msra.mxu0 0
  %400 = vmatprep.subr.bf16.mxu0 0
  %401 = vmatpush1.bf16.msra.mxu0 0
  %402 = vmatprep.subr.bf16.mxu0 0
  %403 = vmatpush1.bf16.msra.mxu0 0
  %404 = vmatprep.subr.bf16.mxu0 0
  %405 = vmatpush1.bf16.msra.mxu0 0
  %406 = vmatprep.subr.bf16.mxu0 0
  %407 = vmatpush1.bf16.msra.mxu0 0
  %408 = vmatprep.subr.bf16.mxu0 0
  %409 = vmatpush1.bf16.msra.mxu0 0
  %410 = vmatprep.subr.bf16.mxu0 0
  %411 = vmatpush1.bf16.msra.mxu0 0
  %412 = vmatprep.mubr.bf16.mxu0 %v133
  %413 = vmatmul.mubr.bf16.gmra.mrb[0].mxu0 %v71
  %v414 = vpop.f32.mrb[0].mxu0
  %v415 = vadd.f32 %v57, %v414
  %v416 = vpop.f32.mrb[0].mxu0
  %v417 = vpop.f32.mrb[0].mxu0
  %v418 = vadd.f32 %v57, %v417
  %v419 = vpop.f32.mrb[0].mxu0
  %420 = vmatprep.mubr.bf16.mxu0 %v136
  %421 = vmatmul.mubr.bf16.gmra.mrb[0].mxu0 %v73
  %v422 = vpop.f32.mrb[0].mxu0
  %v423 = vadd.f32 %v57, %v422
  %v424 = vpop.f32.mrb[0].mxu0
  %v425 = vpop.f32.mrb[0].mxu0
  %v426 = vadd.f32 %v57, %v425
  %v427 = vpop.f32.mrb[0].mxu0
  %428 = vdwg.mxu0
  %v429 = vld [vmem:[%s4] sm:$0xf]
  %v430 = vld [vmem:[%s4 + $0x4] sm:$0xf]
  %v431 = vld [vmem:[%s4 + $0x8] sm:$0xf]
  %v432 = vld [vmem:[%s4 + $0xc] sm:$0xf]
  %v433 = vld [vmem:[%s4 + $0x10] sm:$0xf]
  %v434 = vld [vmem:[%s4 + $0x14] sm:$0xf]
  %v435 = vld [vmem:[%s4 + $0x18] sm:$0xf]
  %v436 = vld [vmem:[%s4 + $0x1c] sm:$0xf]
  %v437 = vld [vmem:[%s4 + $0x20] sm:$0xf]
  %v438 = vld [vmem:[%s4 + $0x24] sm:$0xf]
  %v439 = vld [vmem:[%s4 + $0x28] sm:$0xf]
  %v440 = vld [vmem:[%s4 + $0x2c] sm:$0xf]
  %v441 = vld [vmem:[%s4 + $0x30] sm:$0xf]
  %v442 = vld [vmem:[%s4 + $0x34] sm:$0xf]
  %v443 = vld [vmem:[%s4 + $0x38] sm:$0xf]
  %v444 = vld [vmem:[%s4 + $0x3c] sm:$0xf]
  %v445 = vld [vmem:[%s4 + $0x40] sm:$0xf]
  %v446 = vld [vmem:[%s4 + $0x44] sm:$0xf]
  %v465 = vunpack.c.l.b16 %v429
  %v466 = vunpack.c.l.b16 %v430
  %v467 = vunpack.c.l.b16 %v431
  %v468 = vunpack.c.l.b16 %v432
  %v469 = vunpack.c.l.b16 %v433
  %v470 = vunpack.c.l.b16 %v434
  %v471 = vunpack.c.l.b16 %v435
  %v472 = vunpack.c.l.b16 %v436
  %v473 = vunpack.c.l.b16 %v437
  %v474 = vunpack.c.l.b16 %v438
  %v475 = vunpack.c.l.b16 %v439
  %v476 = vunpack.c.l.b16 %v440
  %v477 = vunpack.c.l.b16 %v441
  %v478 = vunpack.c.l.b16 %v442
  %v479 = vunpack.c.l.b16 %v443
  %v480 = vunpack.c.l.b16 %v444
  %v481 = vunpack.c.l.b16 %v445
  %v482 = vunpack.c.l.b16 %v446
  %v483 = vpack.c.b16 %v466, %v465
  %v484 = vpack.c.b16 %v468, %v467
  %v485 = vpack.c.b16 %v470, %v469
  %v486 = vpack.c.b16 %v472, %v471
  %v487 = vpack.c.b16 %v474, %v473
  %v488 = vpack.c.b16 %v476, %v475
  %v489 = vpack.c.b16 %v478, %v477
  %v490 = vpack.c.b16 %v480, %v479
  %v491 = vpack.c.b16 %v482, %v481
  %501 = vmatprep.subr.bf16.mxu0 0
  %502 = vmatpush1.bf16.msra.mxu0 %v483
  %503 = vmatprep.subr.bf16.mxu0 0
  %504 = vmatpush1.bf16.msra.mxu0 %v484
  %505 = vmatprep.subr.bf16.mxu0 0
  %506 = vmatpush1.bf16.msra.mxu0 %v485
  %507 = vmatprep.subr.bf16.mxu0 0
  %508 = vmatpush1.bf16.msra.mxu0 %v486
  %509 = vmatprep.subr.bf16.mxu0 0
  %510 = vmatpush1.bf16.msra.mxu0 %v487
  %511 = vmatprep.subr.bf16.mxu0 0
  %512 = vmatpush1.bf16.msra.mxu0 %v488
  %513 = vmatprep.subr.bf16.mxu0 0
  %514 = vmatpush1.bf16.msra.mxu0 %v489
  %515 = vmatprep.subr.bf16.mxu0 0
  %516 = vmatpush1.bf16.msra.mxu0 %v490
  %517 = vmatprep.subr.bf16.mxu0 0
  %518 = vmatpush1.bf16.msra.mxu0 %v491
  %519 = vmatprep.subr.bf16.mxu0 0
  %520 = vmatpush1.bf16.msra.mxu0 0
  %521 = vmatprep.subr.bf16.mxu0 0
  %522 = vmatpush1.bf16.msra.mxu0 0
  %523 = vmatprep.subr.bf16.mxu0 0
  %524 = vmatpush1.bf16.msra.mxu0 0
  %525 = vmatprep.subr.bf16.mxu0 0
  %526 = vmatpush1.bf16.msra.mxu0 0
  %527 = vmatprep.subr.bf16.mxu0 0
  %528 = vmatpush1.bf16.msra.mxu0 0
  %529 = vmatprep.subr.bf16.mxu0 0
  %530 = vmatpush1.bf16.msra.mxu0 0
  %531 = vmatprep.subr.bf16.mxu0 0
  %532 = vmatpush1.bf16.msra.mxu0 0
  %533 = vmatprep.mubr.bf16.mxu0 %v133
  %534 = vmatmul.mubr.bf16.gmra.mrb[0].mxu0 %v71
  %v535 = vpop.f32.mrb[0].mxu0
  %v536 = vadd.f32 %v57, %v535
  %v537 = vpop.f32.mrb[0].mxu0
  %v538 = vpop.f32.mrb[0].mxu0
  %v539 = vadd.f32 %v57, %v538
  %v540 = vpop.f32.mrb[0].mxu0
  %541 = vmatprep.mubr.bf16.mxu0 %v136
  %542 = vmatmul.mubr.bf16.gmra.mrb[0].mxu0 %v73
  %v543 = vpop.f32.mrb[0].mxu0
  %v544 = vadd.f32 %v57, %v543
  %v545 = vpop.f32.mrb[0].mxu0
  %v546 = vpop.f32.mrb[0].mxu0
  %v547 = vadd.f32 %v57, %v546
  %v548 = vpop.f32.mrb[0].mxu0
  %549 = vdwg.mxu0
  %vm550 = vcmask 64512
  %v551 = vsel %vm550, %v173, 0.0
  %v552 = vsel %vm550, %v176, 0.0
  %v553 = vadd.f32 %v551, %v552
  %v554 = vsel %vm550, %v181, 0.0
  %v555 = vadd.f32 %v553, %v554
  %v556 = vsel %vm550, %v184, 0.0
  %v557 = vadd.f32 %v555, %v556
  %v558 = vrot.slane %v557, 4
  %v559 = vadd.f32 %v557, %v558
  %v560 = vrot.slane %v559, 2
  %v561 = vadd.f32 %v559, %v560
  %v562 = vrot.slane %v561, 1
  %v563 = vadd.f32 %v561, %v562
  %v564 = vsel %vm550, %v294, 0.0
  %v565 = vsel %vm550, %v297, 0.0
  %v566 = vadd.f32 %v564, %v565
  %v567 = vsel %vm550, %v302, 0.0
  %v568 = vadd.f32 %v566, %v567
  %v569 = vsel %vm550, %v305, 0.0
  %v570 = vadd.f32 %v568, %v569
  %v571 = vrot.slane %v570, 4
  %v572 = vadd.f32 %v570, %v571
  %v573 = vrot.slane %v572, 2
  %v574 = vadd.f32 %v572, %v573
  %v575 = vrot.slane %v574, 1
  %v576 = vadd.f32 %v574, %v575
  %v577 = vadd.f32 %v563, %v576
  %v578 = vsel %vm550, %v415, 0.0
  %v579 = vsel %vm550, %v418, 0.0
  %v580 = vadd.f32 %v578, %v579
  %v581 = vsel %vm550, %v423, 0.0
  %v582 = vadd.f32 %v580, %v581
  %v583 = vsel %vm550, %v426, 0.0
  %v584 = vadd.f32 %v582, %v583
  %v585 = vrot.slane %v584, 4
  %v586 = vadd.f32 %v584, %v585
  %v587 = vrot.slane %v586, 2
  %v588 = vadd.f32 %v586, %v587
  %v589 = vrot.slane %v588, 1
  %v590 = vadd.f32 %v588, %v589
  %v591 = vadd.f32 %v577, %v590
  %v592 = vsel %vm550, %v536, 0.0
  %v593 = vsel %vm550, %v539, 0.0
  %v594 = vadd.f32 %v592, %v593
  %v595 = vsel %vm550, %v544, 0.0
  %v596 = vadd.f32 %v594, %v595
  %v597 = vsel %vm550, %v547, 0.0
  %v598 = vadd.f32 %v596, %v597
  %v599 = vrot.slane %v598, 4
  %v600 = vadd.f32 %v598, %v599
  %v601 = vrot.slane %v600, 2
  %v602 = vadd.f32 %v600, %v601
  %v603 = vrot.slane %v602, 1
  %v604 = vadd.f32 %v602, %v603
  %v605 = vadd.f32 %v591, %v604
  %v606 = vrcp.pop 128.0
  %v607 = vmul.f32 %v605, %v606
  %v608 = vsub.f32 %v173, %v607
  %v609 = vsub.f32 %v176, %v607
  %v610 = vsub.f32 %v181, %v607
  %v611 = vsub.f32 %v184, %v607
  %v612 = vmul.f32 %v608, %v608
  %v613 = vmul.f32 %v609, %v609
  %v614 = vmul.f32 %v610, %v610
  %v615 = vmul.f32 %v611, %v611
  %v616 = vsel %vm550, %v612, 0.0
  %v617 = vsel %vm550, %v613, 0.0
  %v618 = vadd.f32 %v616, %v617
  %v619 = vsel %vm550, %v614, 0.0
  %v620 = vadd.f32 %v618, %v619
  %v621 = vsel %vm550, %v615, 0.0
  %v622 = vadd.f32 %v620, %v621
  %v623 = vrot.slane %v622, 4
  %v624 = vadd.f32 %v622, %v623
  %v625 = vrot.slane %v624, 2
  %v626 = vadd.f32 %v624, %v625
  %v627 = vrot.slane %v626, 1
  %v628 = vadd.f32 %v626, %v627
  %v629 = vsub.f32 %v294, %v607
  %v630 = vsub.f32 %v297, %v607
  %v631 = vsub.f32 %v302, %v607
  %v632 = vsub.f32 %v305, %v607
  %v633 = vmul.f32 %v629, %v629
  %v634 = vmul.f32 %v630, %v630
  %v635 = vmul.f32 %v631, %v631
  %v636 = vmul.f32 %v632, %v632
  %v637 = vsel %vm550, %v633, 0.0
  %v638 = vsel %vm550, %v634, 0.0
  %v639 = vadd.f32 %v637, %v638
  %v640 = vsel %vm550, %v635, 0.0
  %v641 = vadd.f32 %v639, %v640
  %v642 = vsel %vm550, %v636, 0.0
  %v643 = vadd.f32 %v641, %v642
  %v644 = vrot.slane %v643, 4
  %v645 = vadd.f32 %v643, %v644
  %v646 = vrot.slane %v645, 2
  %v647 = vadd.f32 %v645, %v646
  %v648 = vrot.slane %v647, 1
  %v649 = vadd.f32 %v647, %v648
  %v650 = vadd.f32 %v628, %v649
  %v651 = vsub.f32 %v415, %v607
  %v652 = vsub.f32 %v418, %v607
  %v653 = vsub.f32 %v423, %v607
  %v654 = vsub.f32 %v426, %v607
  %v655 = vmul.f32 %v651, %v651
  %v656 = vmul.f32 %v652, %v652
  %v657 = vmul.f32 %v653, %v653
  %v658 = vmul.f32 %v654, %v654
  %v659 = vsel %vm550, %v655, 0.0
  %v660 = vsel %vm550, %v656, 0.0
  %v661 = vadd.f32 %v659, %v660
  %v662 = vsel %vm550, %v657, 0.0
  %v663 = vadd.f32 %v661, %v662
  %v664 = vsel %vm550, %v658, 0.0
  %v665 = vadd.f32 %v663, %v664
  %v666 = vrot.slane %v665, 4
  %v667 = vadd.f32 %v665, %v666
  %v668 = vrot.slane %v667, 2
  %v669 = vadd.f32 %v667, %v668
  %v670 = vrot.slane %v669, 1
  %v671 = vadd.f32 %v669, %v670
  %v672 = vadd.f32 %v650, %v671
  %v673 = vsub.f32 %v536, %v607
  %v674 = vsub.f32 %v539, %v607
  %v675 = vsub.f32 %v544, %v607
  %v676 = vsub.f32 %v547, %v607
  %v677 = vmul.f32 %v673, %v673
  %v678 = vmul.f32 %v674, %v674
  %v679 = vmul.f32 %v675, %v675
  %v680 = vmul.f32 %v676, %v676
  %v681 = vsel %vm550, %v677, 0.0
  %v682 = vsel %vm550, %v678, 0.0
  %v683 = vadd.f32 %v681, %v682
  %v684 = vsel %vm550, %v679, 0.0
  %v685 = vadd.f32 %v683, %v684
  %v686 = vsel %vm550, %v680, 0.0
  %v687 = vadd.f32 %v685, %v686
  %v688 = vrot.slane %v687, 4
  %v689 = vadd.f32 %v687, %v688
  %v690 = vrot.slane %v689, 2
  %v691 = vadd.f32 %v689, %v690
  %v692 = vrot.slane %v691, 1
  %v693 = vadd.f32 %v691, %v692
  %v694 = vadd.f32 %v672, %v693
  %v695 = vmul.f32 %v694, %v606
  %v696 = vld [vmem:[%s6] sm:$0x1]
  %v697 = vadd.f32 %v695, 1e-05
  %v698 = vrsqrt.pop %v697
  %v699 = vmul.f32 %v696, %v698
  %v700 = vld [vmem:[%s7] sm:$0x1]
  %v701 = vmul.f32 %v607, %v699
  %v702 = vsub.f32 %v700, %v701
  %v704 = vlaneseq
  %v705 = vshrl.u32 %v704, 7
  %v706 = vsub.s32 0, %v705
  %v707 = vrot.slane %v699, %v706
  %v709 = vmul.f32 %v173, %v707
  %v710 = vmul.f32 %v176, %v707
  %v711 = vmul.f32 %v181, %v707
  %v712 = vmul.f32 %v184, %v707
  %v714 = vlaneseq
  %v715 = vshrl.u32 %v714, 7
  %v716 = vsub.s32 0, %v715
  %v717 = vrot.slane %v702, %v716
  %v719 = vadd.f32 %v709, %v717
  %v720 = vadd.f32 %v710, %v717
  %v721 = vadd.f32 %v711, %v717
  %v722 = vadd.f32 %v712, %v717
  %v723 = vmax.f32 %v719, 0.0
  %v724 = vmax.f32 %v720, 0.0
  %v725 = vmax.f32 %v721, 0.0
  %v726 = vmax.f32 %v722, 0.0
  %v727 = vpack.c.bf16 %v724, %v723
  %v728 = vpack.c.bf16 %v726, %v725
  %v731 = vunpack.c.l.b16 %v727
  %v732 = vunpack.c.h.b16 %v727
  %v733 = vunpack.c.l.b16 %v728
  %v734 = vunpack.c.h.b16 %v728
  %v735 = vpack.c.b16 %v731, %v731
  %v736 = vpack.c.b16 %v732, %v732
  %v737 = vpack.c.b16 %v733, %v733
  %v738 = vpack.c.b16 %v734, %v734
  %vm743 = vcmask 60416
  %744 = vst.msk [vmem:[%s8] sm:$0xf] %vm743, %v735
  %745 = vst.msk [vmem:[%s8 + $0x4] sm:$0xf] %vm743, %v736
  %746 = vst.msk [vmem:[%s8 + $0x8] sm:$0xf] %vm743, %v737
  %747 = vst.msk [vmem:[%s8 + $0xc] sm:$0xf] %vm743, %v738
  %v748 = vmul.f32 %v294, %v707
  %v749 = vmul.f32 %v297, %v707
  %v750 = vmul.f32 %v302, %v707
  %v751 = vmul.f32 %v305, %v707
  %v752 = vadd.f32 %v748, %v717
  %v753 = vadd.f32 %v749, %v717
  %v754 = vadd.f32 %v750, %v717
  %v755 = vadd.f32 %v751, %v717
  %v756 = vmax.f32 %v752, 0.0
  %v757 = vmax.f32 %v753, 0.0
  %v758 = vmax.f32 %v754, 0.0
  %v759 = vmax.f32 %v755, 0.0
  %v760 = vpack.c.bf16 %v757, %v756
  %v761 = vpack.c.bf16 %v759, %v758
  %v764 = vunpack.c.l.b16 %v760
  %v765 = vunpack.c.h.b16 %v760
  %v766 = vunpack.c.l.b16 %v761
  %v767 = vunpack.c.h.b16 %v761
  %v768 = vpack.c.b16 %v764, %v764
  %v769 = vpack.c.b16 %v765, %v765
  %v770 = vpack.c.b16 %v766, %v766
  %v771 = vpack.c.b16 %v767, %v767
  %s776 = scalar_lea.vmem %s8, 16
  %777 = vst.msk [vmem:[%s776] sm:$0xf] %vm743, %v768
  %778 = vst.msk [vmem:[%s776 + $0x4] sm:$0xf] %vm743, %v769
  %779 = vst.msk [vmem:[%s776 + $0x8] sm:$0xf] %vm743, %v770
  %780 = vst.msk [vmem:[%s776 + $0xc] sm:$0xf] %vm743, %v771
  %v781 = vmul.f32 %v415, %v707
  %v782 = vmul.f32 %v418, %v707
  %v783 = vmul.f32 %v423, %v707
  %v784 = vmul.f32 %v426, %v707
  %v785 = vadd.f32 %v781, %v717
  %v786 = vadd.f32 %v782, %v717
  %v787 = vadd.f32 %v783, %v717
  %v788 = vadd.f32 %v784, %v717
  %v789 = vmax.f32 %v785, 0.0
  %v790 = vmax.f32 %v786, 0.0
  %v791 = vmax.f32 %v787, 0.0
  %v792 = vmax.f32 %v788, 0.0
  %v793 = vpack.c.bf16 %v790, %v789
  %v794 = vpack.c.bf16 %v792, %v791
  %v797 = vunpack.c.l.b16 %v793
  %v798 = vunpack.c.h.b16 %v793
  %v799 = vunpack.c.l.b16 %v794
  %v800 = vunpack.c.h.b16 %v794
  %v801 = vpack.c.b16 %v797, %v797
  %v802 = vpack.c.b16 %v798, %v798
  %v803 = vpack.c.b16 %v799, %v799
  %v804 = vpack.c.b16 %v800, %v800
  %s809 = scalar_lea.vmem %s8, 32
  %810 = vst.msk [vmem:[%s809] sm:$0xf] %vm743, %v801
  %811 = vst.msk [vmem:[%s809 + $0x4] sm:$0xf] %vm743, %v802
  %812 = vst.msk [vmem:[%s809 + $0x8] sm:$0xf] %vm743, %v803
  %813 = vst.msk [vmem:[%s809 + $0xc] sm:$0xf] %vm743, %v804
  %v814 = vmul.f32 %v536, %v707
  %v815 = vmul.f32 %v539, %v707
  %v816 = vmul.f32 %v544, %v707
  %v817 = vmul.f32 %v547, %v707
  %v818 = vadd.f32 %v814, %v717
  %v819 = vadd.f32 %v815, %v717
  %v820 = vadd.f32 %v816, %v717
  %v821 = vadd.f32 %v817, %v717
  %v822 = vmax.f32 %v818, 0.0
  %v823 = vmax.f32 %v819, 0.0
  %v824 = vmax.f32 %v820, 0.0
  %v825 = vmax.f32 %v821, 0.0
  %v826 = vpack.c.bf16 %v823, %v822
  %v827 = vpack.c.bf16 %v825, %v824
  %v830 = vunpack.c.l.b16 %v826
  %v831 = vunpack.c.h.b16 %v826
  %v832 = vunpack.c.l.b16 %v827
  %v833 = vunpack.c.h.b16 %v827
  %v834 = vpack.c.b16 %v830, %v830
  %v835 = vpack.c.b16 %v831, %v831
  %v836 = vpack.c.b16 %v832, %v832
  %v837 = vpack.c.b16 %v833, %v833
  %s842 = scalar_lea.vmem %s8, 48
  %843 = vst.msk [vmem:[%s842] sm:$0xf] %vm743, %v834
  %844 = vst.msk [vmem:[%s842 + $0x4] sm:$0xf] %vm743, %v835
  %845 = vst.msk [vmem:[%s842 + $0x8] sm:$0xf] %vm743, %v836
  %846 = vst.msk [vmem:[%s842 + $0xc] sm:$0xf] %vm743, %v837
  // Predicated region
  $region34: #{vae_forward.12} parent=0 // pred_check
    _
  $region35: #{vae_forward.12} parent=0 // pred_check_branch
    %848 = sbr.rel (0) target = $region37
  $region36: #{vae_forward.12} parent=0 // pred_region
    _
  $region37: #{vae_forward.12} parent=0 // pred_fallthru
    _
  // Predicated region
  $region38: #{vae_forward.12} parent=0 // pred_check
    _
  $region39: #{vae_forward.12} parent=0 // pred_check_branch
    %850 = sbr.rel (0) target = $region41
  $region40: #{vae_forward.12} parent=0 // pred_region
    _
  $region41: #{vae_forward.12} parent=0 // pred_fallthru
    _

// kernel: vae_forward.13
$region0: #{vae_forward.13}
  #allocation0 [shape = 'u32[]', space=smem, size = 0x4, offset = 0x4, fixed_abs, tag = 'smem constant byte address 0x4 - core index']
  #allocation1 [shape = 'u32[144,128]{1,0:T(1,128)}', space=vmem, size = 0x12000, scoped, tag = 'internal scratch']
  %s0 = inlined_call_operand.vmem [shape: bf16[128,72], index: 0, kind: input, shape index: {}]
  %s1 = inlined_call_operand.vmem [shape: bf16[72,4], index: 1, kind: input, shape index: {}]
  %s2 = inlined_call_operand.vmem [shape: bf16[72,4], index: 2, kind: input, shape index: {}]
  %s3 = inlined_call_operand.vmem [shape: bf16[72,4], index: 3, kind: input, shape index: {}]
  %s4 = inlined_call_operand.vmem [shape: bf16[72,4], index: 4, kind: input, shape index: {}]
  %s5 = inlined_call_operand.vmem [shape: f32[1,4], index: 5, kind: input, shape index: {}]
  %s6 = inlined_call_operand.vmem [shape: f32[1,4], index: 6, kind: input, shape index: {}]
  %s7 = inlined_call_operand.vmem [shape: f32[1,4], index: 7, kind: input, shape index: {}]
  %s8 = inlined_call_operand.vmem [shape: bf16[4,3], index: 8, kind: input, shape index: {}]
  %s9 = inlined_call_operand.vmem [shape: f32[1,3], index: 9, kind: input, shape index: {}]
  %s10 = inlined_call_operand.vmem [shape: f32[4,128,3], index: 10, kind: output, shape index: {}]
  %s11 = sld [smem:[#allocation0]]
  $region50: #{vae_forward.13} parent=0
    _
  %s13 = ssub.s32 1, %s11
  %s14 = scalar_select 0, %s13, %s11
  // Predicated region
  $region2: #{vae_forward.13} parent=0 // pred_check
    _
  $region3: #{vae_forward.13} parent=0 // pred_check_branch
    %16 = sbr.rel (0) target = $region5
  $region4: #{vae_forward.13} parent=0 // pred_region
    _
  $region5: #{vae_forward.13} parent=0 // pred_fallthru
    _
  // Predicated region
  $region6: #{vae_forward.13} parent=0 // pred_check
    _
  $region7: #{vae_forward.13} parent=0 // pred_check_branch
    %18 = sbr.rel (0) target = $region9
  $region8: #{vae_forward.13} parent=0 // pred_region
    _
  $region9: #{vae_forward.13} parent=0 // pred_fallthru
    _
  // Predicated region
  $region10: #{vae_forward.13} parent=0 // pred_check
    _
  $region11: #{vae_forward.13} parent=0 // pred_check_branch
    %20 = sbr.rel (0) target = $region13
  $region12: #{vae_forward.13} parent=0 // pred_region
    _
  $region13: #{vae_forward.13} parent=0 // pred_fallthru
    _
  // Predicated region
  $region14: #{vae_forward.13} parent=0 // pred_check
    _
  $region15: #{vae_forward.13} parent=0 // pred_check_branch
    %22 = sbr.rel (0) target = $region17
  $region16: #{vae_forward.13} parent=0 // pred_region
    _
  $region17: #{vae_forward.13} parent=0 // pred_fallthru
    _
  // Predicated region
  $region18: #{vae_forward.13} parent=0 // pred_check
    _
  $region19: #{vae_forward.13} parent=0 // pred_check_branch
    %24 = sbr.rel (0) target = $region21
  $region20: #{vae_forward.13} parent=0 // pred_region
    _
  $region21: #{vae_forward.13} parent=0 // pred_fallthru
    _
  // Predicated region
  $region22: #{vae_forward.13} parent=0 // pred_check
    _
  $region23: #{vae_forward.13} parent=0 // pred_check_branch
    %26 = sbr.rel (0) target = $region25
  $region24: #{vae_forward.13} parent=0 // pred_region
    _
  $region25: #{vae_forward.13} parent=0 // pred_fallthru
    _
  // Predicated region
  $region26: #{vae_forward.13} parent=0 // pred_check
    _
  $region27: #{vae_forward.13} parent=0 // pred_check_branch
    %28 = sbr.rel (0) target = $region29
  $region28: #{vae_forward.13} parent=0 // pred_region
    _
  $region29: #{vae_forward.13} parent=0 // pred_fallthru
    _
  // Predicated region
  $region30: #{vae_forward.13} parent=0 // pred_check
    _
  $region31: #{vae_forward.13} parent=0 // pred_check_branch
    %30 = sbr.rel (0) target = $region33
  $region32: #{vae_forward.13} parent=0 // pred_region
    _
  $region33: #{vae_forward.13} parent=0 // pred_fallthru
    _
  // Predicated region
  $region34: #{vae_forward.13} parent=0 // pred_check
    _
  $region35: #{vae_forward.13} parent=0 // pred_check_branch
    %32 = sbr.rel (0) target = $region37
  $region36: #{vae_forward.13} parent=0 // pred_region
    _
  $region37: #{vae_forward.13} parent=0 // pred_fallthru
    _
  // Predicated region
  $region38: #{vae_forward.13} parent=0 // pred_check
    _
  $region39: #{vae_forward.13} parent=0 // pred_check_branch
    %34 = sbr.rel (0) target = $region41
  $region40: #{vae_forward.13} parent=0 // pred_region
    _
  $region41: #{vae_forward.13} parent=0 // pred_fallthru
    _
  %v36 = vld [vmem:[%s0] sm:$0xf]
  %v37 = vld [vmem:[%s0 + $0x4] sm:$0xf]
  %v38 = vld [vmem:[%s0 + $0x8] sm:$0xf]
  %v39 = vld [vmem:[%s0 + $0xc] sm:$0xf]
  %v40 = vld [vmem:[%s0 + $0x10] sm:$0xf]
  %v41 = vld [vmem:[%s0 + $0x14] sm:$0xf]
  %v42 = vld [vmem:[%s0 + $0x18] sm:$0xf]
  %v43 = vld [vmem:[%s0 + $0x1c] sm:$0xf]
  %v44 = vld [vmem:[%s0 + $0x20] sm:$0xf]
  %v45 = vld [vmem:[%s0 + $0x24] sm:$0xf]
  %v46 = vld [vmem:[%s0 + $0x28] sm:$0xf]
  %v47 = vld [vmem:[%s0 + $0x2c] sm:$0xf]
  %v48 = vld [vmem:[%s0 + $0x30] sm:$0xf]
  %v49 = vld [vmem:[%s0 + $0x34] sm:$0xf]
  %v50 = vld [vmem:[%s0 + $0x38] sm:$0xf]
  %v51 = vld [vmem:[%s0 + $0x3c] sm:$0xf]
  %v52 = vld [vmem:[%s5] sm:$0x1]
  %v53 = vld [vmem:[%s1] sm:$0xf]
  %v54 = vld [vmem:[%s1 + $0x4] sm:$0xf]
  %v55 = vld [vmem:[%s1 + $0x8] sm:$0xf]
  %v56 = vld [vmem:[%s1 + $0xc] sm:$0xf]
  %v57 = vld [vmem:[%s1 + $0x10] sm:$0xf]
  %v58 = vld [vmem:[%s1 + $0x14] sm:$0xf]
  %v59 = vld [vmem:[%s1 + $0x18] sm:$0xf]
  %v60 = vld [vmem:[%s1 + $0x1c] sm:$0xf]
  %v61 = vld [vmem:[%s1 + $0x20] sm:$0xf]
  %v63 = vlaneseq
  %v64 = vshrl.u32 %v63, 7
  %v65 = vsub.s32 0, %v64
  %v66 = vrot.slane %v52, %v65
  %v84 = vunpack.c.l.b16 %v36
  %v85 = vunpack.c.l.b16 %v37
  %v86 = vunpack.c.l.b16 %v38
  %v87 = vunpack.c.l.b16 %v39
  %v88 = vunpack.c.l.b16 %v40
  %v89 = vunpack.c.l.b16 %v41
  %v90 = vunpack.c.l.b16 %v42
  %v91 = vunpack.c.l.b16 %v43
  %v92 = vunpack.c.l.b16 %v44
  %v93 = vunpack.c.l.b16 %v45
  %v94 = vunpack.c.l.b16 %v46
  %v95 = vunpack.c.l.b16 %v47
  %v96 = vunpack.c.l.b16 %v48
  %v97 = vunpack.c.l.b16 %v49
  %v98 = vunpack.c.l.b16 %v50
  %v99 = vunpack.c.l.b16 %v51
  %v100 = vpack.c.b16 %v85, %v84
  %v101 = vpack.c.b16 %v87, %v86
  %v102 = vpack.c.b16 %v89, %v88
  %v103 = vpack.c.b16 %v91, %v90
  %v104 = vpack.c.b16 %v93, %v92
  %v105 = vpack.c.b16 %v95, %v94
  %v106 = vpack.c.b16 %v97, %v96
  %v107 = vpack.c.b16 %v99, %v98
  %v117 = vunpack.c.l.b16 %v53
  %v118 = vunpack.c.l.b16 %v54
  %v119 = vunpack.c.l.b16 %v55
  %v120 = vunpack.c.l.b16 %v56
  %v121 = vunpack.c.l.b16 %v57
  %v122 = vunpack.c.l.b16 %v58
  %v123 = vunpack.c.l.b16 %v59
  %v124 = vunpack.c.l.b16 %v60
  %v125 = vunpack.c.l.b16 %v61
  %v126 = vpack.c.b16 %v118, %v117
  %v127 = vpack.c.b16 %v120, %v119
  %v128 = vpack.c.b16 %v122, %v121
  %v129 = vpack.c.b16 %v124, %v123
  %v130 = vpack.c.b16 %v125, %v125
  %vm135 = vcmask 588800
  %v137 = vsel %vm135, %v100, 0
  %v140 = vsel %vm135, %v101, 0
  %v143 = vsel %vm135, %v102, 0
  %v146 = vsel %vm135, %v103, 0
  %v149 = vsel %vm135, %v104, 0
  %v152 = vsel %vm135, %v105, 0
  %v155 = vsel %vm135, %v106, 0
  %v158 = vsel %vm135, %v107, 0
  %vm160 = vcmask 1043456
  %v162 = vsel %vm160, %v130, 0
  %164 = vmatprep.subr.bf16.mxu0 0
  %165 = vmatpush1.bf16.msra.mxu0 %v126
  %166 = vmatprep.subr.bf16.mxu0 0
  %167 = vmatpush1.bf16.msra.mxu0 %v127
  %168 = vmatprep.subr.bf16.mxu0 0
  %169 = vmatpush1.bf16.msra.mxu0 %v128
  %170 = vmatprep.subr.bf16.mxu0 0
  %171 = vmatpush1.bf16.msra.mxu0 %v129
  %172 = vmatprep.subr.bf16.mxu0 0
  %173 = vmatpush1.bf16.msra.mxu0 %v162
  %174 = vmatprep.subr.bf16.mxu0 0
  %175 = vmatpush1.bf16.msra.mxu0 0
  %176 = vmatprep.subr.bf16.mxu0 0
  %177 = vmatpush1.bf16.msra.mxu0 0
  %178 = vmatprep.subr.bf16.mxu0 0
  %179 = vmatpush1.bf16.msra.mxu0 0
  %180 = vmatprep.subr.bf16.mxu0 0
  %181 = vmatpush1.bf16.msra.mxu0 0
  %182 = vmatprep.subr.bf16.mxu0 0
  %183 = vmatpush1.bf16.msra.mxu0 0
  %184 = vmatprep.subr.bf16.mxu0 0
  %185 = vmatpush1.bf16.msra.mxu0 0
  %186 = vmatprep.subr.bf16.mxu0 0
  %187 = vmatpush1.bf16.msra.mxu0 0
  %188 = vmatprep.subr.bf16.mxu0 0
  %189 = vmatpush1.bf16.msra.mxu0 0
  %190 = vmatprep.subr.bf16.mxu0 0
  %191 = vmatpush1.bf16.msra.mxu0 0
  %192 = vmatprep.subr.bf16.mxu0 0
  %193 = vmatpush1.bf16.msra.mxu0 0
  %194 = vmatprep.subr.bf16.mxu0 0
  %195 = vmatpush1.bf16.msra.mxu0 0
  %196 = vmatprep.mubr.bf16.mxu0 0
  %197 = vmatmul.mubr.bf16.gmra.mrb[0].mxu0 %v137
  %v198 = vpop.f32.mrb[0].mxu0
  %v199 = vadd.f32 %v66, %v198
  %v200 = vpop.f32.mrb[0].mxu0
  %v201 = vpop.f32.mrb[0].mxu0
  %v202 = vadd.f32 %v66, %v201
  %v203 = vpop.f32.mrb[0].mxu0
  %204 = vmatprep.mubr.bf16.mxu0 0
  %205 = vmatmul.mubr.bf16.gmra.mrb[0].mxu0 %v140
  %v206 = vpop.f32.mrb[0].mxu0
  %v207 = vadd.f32 %v66, %v206
  %v208 = vpop.f32.mrb[0].mxu0
  %v209 = vpop.f32.mrb[0].mxu0
  %v210 = vadd.f32 %v66, %v209
  %v211 = vpop.f32.mrb[0].mxu0
  %212 = vmatprep.mubr.bf16.mxu0 0
  %213 = vmatmul.mubr.bf16.gmra.mrb[0].mxu0 %v143
  %v214 = vpop.f32.mrb[0].mxu0
  %v215 = vadd.f32 %v66, %v214
  %v216 = vpop.f32.mrb[0].mxu0
  %v217 = vpop.f32.mrb[0].mxu0
  %v218 = vadd.f32 %v66, %v217
  %v219 = vpop.f32.mrb[0].mxu0
  %220 = vmatprep.mubr.bf16.mxu0 0
  %221 = vmatmul.mubr.bf16.gmra.mrb[0].mxu0 %v146
  %v222 = vpop.f32.mrb[0].mxu0
  %v223 = vadd.f32 %v66, %v222
  %v224 = vpop.f32.mrb[0].mxu0
  %v225 = vpop.f32.mrb[0].mxu0
  %v226 = vadd.f32 %v66, %v225
  %v227 = vpop.f32.mrb[0].mxu0
  %228 = vmatprep.mubr.bf16.mxu0 0
  %229 = vmatmul.mubr.bf16.gmra.mrb[0].mxu0 %v149
  %v230 = vpop.f32.mrb[0].mxu0
  %v231 = vadd.f32 %v66, %v230
  %v232 = vpop.f32.mrb[0].mxu0
  %v233 = vpop.f32.mrb[0].mxu0
  %v234 = vadd.f32 %v66, %v233
  %v235 = vpop.f32.mrb[0].mxu0
  %236 = vmatprep.mubr.bf16.mxu0 0
  %237 = vmatmul.mubr.bf16.gmra.mrb[0].mxu0 %v152
  %v238 = vpop.f32.mrb[0].mxu0
  %v239 = vadd.f32 %v66, %v238
  %v240 = vpop.f32.mrb[0].mxu0
  %v241 = vpop.f32.mrb[0].mxu0
  %v242 = vadd.f32 %v66, %v241
  %v243 = vpop.f32.mrb[0].mxu0
  %244 = vmatprep.mubr.bf16.mxu0 0
  %245 = vmatmul.mubr.bf16.gmra.mrb[0].mxu0 %v155
  %v246 = vpop.f32.mrb[0].mxu0
  %v247 = vadd.f32 %v66, %v246
  %v248 = vpop.f32.mrb[0].mxu0
  %v249 = vpop.f32.mrb[0].mxu0
  %v250 = vadd.f32 %v66, %v249
  %v251 = vpop.f32.mrb[0].mxu0
  %252 = vmatprep.mubr.bf16.mxu0 0
  %253 = vmatmul.mubr.bf16.gmra.mrb[0].mxu0 %v158
  %v254 = vpop.f32.mrb[0].mxu0
  %v255 = vadd.f32 %v66, %v254
  %v256 = vpop.f32.mrb[0].mxu0
  %v257 = vpop.f32.mrb[0].mxu0
  %v258 = vadd.f32 %v66, %v257
  %v259 = vpop.f32.mrb[0].mxu0
  %260 = vdwg.mxu0
  %v261 = vld [vmem:[%s2] sm:$0xf]
  %v262 = vld [vmem:[%s2 + $0x4] sm:$0xf]
  %v263 = vld [vmem:[%s2 + $0x8] sm:$0xf]
  %v264 = vld [vmem:[%s2 + $0xc] sm:$0xf]
  %v265 = vld [vmem:[%s2 + $0x10] sm:$0xf]
  %v266 = vld [vmem:[%s2 + $0x14] sm:$0xf]
  %v267 = vld [vmem:[%s2 + $0x18] sm:$0xf]
  %v268 = vld [vmem:[%s2 + $0x1c] sm:$0xf]
  %v269 = vld [vmem:[%s2 + $0x20] sm:$0xf]
  %v279 = vunpack.c.l.b16 %v261
  %v280 = vunpack.c.l.b16 %v262
  %v281 = vunpack.c.l.b16 %v263
  %v282 = vunpack.c.l.b16 %v264
  %v283 = vunpack.c.l.b16 %v265
  %v284 = vunpack.c.l.b16 %v266
  %v285 = vunpack.c.l.b16 %v267
  %v286 = vunpack.c.l.b16 %v268
  %v287 = vunpack.c.l.b16 %v269
  %v288 = vpack.c.b16 %v280, %v279
  %v289 = vpack.c.b16 %v282, %v281
  %v290 = vpack.c.b16 %v284, %v283
  %v291 = vpack.c.b16 %v286, %v285
  %v292 = vpack.c.b16 %v287, %v287
  %v298 = vsel %vm160, %v292, 0
  %300 = vmatprep.subr.bf16.mxu0 0
  %301 = vmatpush1.bf16.msra.mxu0 %v288
  %302 = vmatprep.subr.bf16.mxu0 0
  %303 = vmatpush1.bf16.msra.mxu0 %v289
  %304 = vmatprep.subr.bf16.mxu0 0
  %305 = vmatpush1.bf16.msra.mxu0 %v290
  %306 = vmatprep.subr.bf16.mxu0 0
  %307 = vmatpush1.bf16.msra.mxu0 %v291
  %308 = vmatprep.subr.bf16.mxu0 0
  %309 = vmatpush1.bf16.msra.mxu0 %v298
  %310 = vmatprep.subr.bf16.mxu0 0
  %311 = vmatpush1.bf16.msra.mxu0 0
  %312 = vmatprep.subr.bf16.mxu0 0
  %313 = vmatpush1.bf16.msra.mxu0 0
  %314 = vmatprep.subr.bf16.mxu0 0
  %315 = vmatpush1.bf16.msra.mxu0 0
  %316 = vmatprep.subr.bf16.mxu0 0
  %317 = vmatpush1.bf16.msra.mxu0 0
  %318 = vmatprep.subr.bf16.mxu0 0
  %319 = vmatpush1.bf16.msra.mxu0 0
  %320 = vmatprep.subr.bf16.mxu0 0
  %321 = vmatpush1.bf16.msra.mxu0 0
  %322 = vmatprep.subr.bf16.mxu0 0
  %323 = vmatpush1.bf16.msra.mxu0 0
  %324 = vmatprep.subr.bf16.mxu0 0
  %325 = vmatpush1.bf16.msra.mxu0 0
  %326 = vmatprep.subr.bf16.mxu0 0
  %327 = vmatpush1.bf16.msra.mxu0 0
  %328 = vmatprep.subr.bf16.mxu0 0
  %329 = vmatpush1.bf16.msra.mxu0 0
  %330 = vmatprep.subr.bf16.mxu0 0
  %331 = vmatpush1.bf16.msra.mxu0 0
  %332 = vmatprep.mubr.bf16.mxu0 0
  %333 = vmatmul.mubr.bf16.gmra.mrb[0].mxu0 %v137
  %v334 = vpop.f32.mrb[0].mxu0
  %v335 = vadd.f32 %v66, %v334
  %v336 = vpop.f32.mrb[0].mxu0
  %v337 = vpop.f32.mrb[0].mxu0
  %v338 = vadd.f32 %v66, %v337
  %v339 = vpop.f32.mrb[0].mxu0
  %340 = vmatprep.mubr.bf16.mxu0 0
  %341 = vmatmul.mubr.bf16.gmra.mrb[0].mxu0 %v140
  %v342 = vpop.f32.mrb[0].mxu0
  %v343 = vadd.f32 %v66, %v342
  %v344 = vpop.f32.mrb[0].mxu0
  %v345 = vpop.f32.mrb[0].mxu0
  %v346 = vadd.f32 %v66, %v345
  %v347 = vpop.f32.mrb[0].mxu0
  %348 = vmatprep.mubr.bf16.mxu0 0
  %349 = vmatmul.mubr.bf16.gmra.mrb[0].mxu0 %v143
  %v350 = vpop.f32.mrb[0].mxu0
  %v351 = vadd.f32 %v66, %v350
  %v352 = vpop.f32.mrb[0].mxu0
  %v353 = vpop.f32.mrb[0].mxu0
  %v354 = vadd.f32 %v66, %v353
  %v355 = vpop.f32.mrb[0].mxu0
  %356 = vmatprep.mubr.bf16.mxu0 0
  %357 = vmatmul.mubr.bf16.gmra.mrb[0].mxu0 %v146
  %v358 = vpop.f32.mrb[0].mxu0
  %v359 = vadd.f32 %v66, %v358
  %v360 = vpop.f32.mrb[0].mxu0
  %v361 = vpop.f32.mrb[0].mxu0
  %v362 = vadd.f32 %v66, %v361
  %v363 = vpop.f32.mrb[0].mxu0
  %364 = vmatprep.mubr.bf16.mxu0 0
  %365 = vmatmul.mubr.bf16.gmra.mrb[0].mxu0 %v149
  %v366 = vpop.f32.mrb[0].mxu0
  %v367 = vadd.f32 %v66, %v366
  %v368 = vpop.f32.mrb[0].mxu0
  %v369 = vpop.f32.mrb[0].mxu0
  %v370 = vadd.f32 %v66, %v369
  %v371 = vpop.f32.mrb[0].mxu0
  %372 = vmatprep.mubr.bf16.mxu0 0
  %373 = vmatmul.mubr.bf16.gmra.mrb[0].mxu0 %v152
  %v374 = vpop.f32.mrb[0].mxu0
  %v375 = vadd.f32 %v66, %v374
  %v376 = vpop.f32.mrb[0].mxu0
  %v377 = vpop.f32.mrb[0].mxu0
  %v378 = vadd.f32 %v66, %v377
  %v379 = vpop.f32.mrb[0].mxu0
  %380 = vmatprep.mubr.bf16.mxu0 0
  %381 = vmatmul.mubr.bf16.gmra.mrb[0].mxu0 %v155
  %v382 = vpop.f32.mrb[0].mxu0
  %v383 = vadd.f32 %v66, %v382
  %v384 = vpop.f32.mrb[0].mxu0
  %v385 = vpop.f32.mrb[0].mxu0
  %v386 = vadd.f32 %v66, %v385
  %v387 = vpop.f32.mrb[0].mxu0
  %388 = vmatprep.mubr.bf16.mxu0 0
  %389 = vmatmul.mubr.bf16.gmra.mrb[0].mxu0 %v158
  %v390 = vpop.f32.mrb[0].mxu0
  %v391 = vadd.f32 %v66, %v390
  %v392 = vpop.f32.mrb[0].mxu0
  %v393 = vpop.f32.mrb[0].mxu0
  %v394 = vadd.f32 %v66, %v393
  %v395 = vpop.f32.mrb[0].mxu0
  %396 = vdwg.mxu0
  %v397 = vld [vmem:[%s3] sm:$0xf]
  %v398 = vld [vmem:[%s3 + $0x4] sm:$0xf]
  %v399 = vld [vmem:[%s3 + $0x8] sm:$0xf]
  %v400 = vld [vmem:[%s3 + $0xc] sm:$0xf]
  %v401 = vld [vmem:[%s3 + $0x10] sm:$0xf]
  %v402 = vld [vmem:[%s3 + $0x14] sm:$0xf]
  %v403 = vld [vmem:[%s3 + $0x18] sm:$0xf]
  %v404 = vld [vmem:[%s3 + $0x1c] sm:$0xf]
  %v405 = vld [vmem:[%s3 + $0x20] sm:$0xf]
  %v415 = vunpack.c.l.b16 %v397
  %v416 = vunpack.c.l.b16 %v398
  %v417 = vunpack.c.l.b16 %v399
  %v418 = vunpack.c.l.b16 %v400
  %v419 = vunpack.c.l.b16 %v401
  %v420 = vunpack.c.l.b16 %v402
  %v421 = vunpack.c.l.b16 %v403
  %v422 = vunpack.c.l.b16 %v404
  %v423 = vunpack.c.l.b16 %v405
  %v424 = vpack.c.b16 %v416, %v415
  %v425 = vpack.c.b16 %v418, %v417
  %v426 = vpack.c.b16 %v420, %v419
  %v427 = vpack.c.b16 %v422, %v421
  %v428 = vpack.c.b16 %v423, %v423
  %v434 = vsel %vm160, %v428, 0
  %436 = vmatprep.subr.bf16.mxu0 0
  %437 = vmatpush1.bf16.msra.mxu0 %v424
  %438 = vmatprep.subr.bf16.mxu0 0
  %439 = vmatpush1.bf16.msra.mxu0 %v425
  %440 = vmatprep.subr.bf16.mxu0 0
  %441 = vmatpush1.bf16.msra.mxu0 %v426
  %442 = vmatprep.subr.bf16.mxu0 0
  %443 = vmatpush1.bf16.msra.mxu0 %v427
  %444 = vmatprep.subr.bf16.mxu0 0
  %445 = vmatpush1.bf16.msra.mxu0 %v434
  %446 = vmatprep.subr.bf16.mxu0 0
  %447 = vmatpush1.bf16.msra.mxu0 0
  %448 = vmatprep.subr.bf16.mxu0 0
  %449 = vmatpush1.bf16.msra.mxu0 0
  %450 = vmatprep.subr.bf16.mxu0 0
  %451 = vmatpush1.bf16.msra.mxu0 0
  %452 = vmatprep.subr.bf16.mxu0 0
  %453 = vmatpush1.bf16.msra.mxu0 0
  %454 = vmatprep.subr.bf16.mxu0 0
  %455 = vmatpush1.bf16.msra.mxu0 0
  %456 = vmatprep.subr.bf16.mxu0 0
  %457 = vmatpush1.bf16.msra.mxu0 0
  %458 = vmatprep.subr.bf16.mxu0 0
  %459 = vmatpush1.bf16.msra.mxu0 0
  %460 = vmatprep.subr.bf16.mxu0 0
  %461 = vmatpush1.bf16.msra.mxu0 0
  %462 = vmatprep.subr.bf16.mxu0 0
  %463 = vmatpush1.bf16.msra.mxu0 0
  %464 = vmatprep.subr.bf16.mxu0 0
  %465 = vmatpush1.bf16.msra.mxu0 0
  %466 = vmatprep.subr.bf16.mxu0 0
  %467 = vmatpush1.bf16.msra.mxu0 0
  %468 = vmatprep.mubr.bf16.mxu0 0
  %469 = vmatmul.mubr.bf16.gmra.mrb[0].mxu0 %v137
  %v470 = vpop.f32.mrb[0].mxu0
  %v471 = vadd.f32 %v66, %v470
  %v472 = vpop.f32.mrb[0].mxu0
  %v473 = vpop.f32.mrb[0].mxu0
  %v474 = vadd.f32 %v66, %v473
  %v475 = vpop.f32.mrb[0].mxu0
  %476 = vmatprep.mubr.bf16.mxu0 0
  %477 = vmatmul.mubr.bf16.gmra.mrb[0].mxu0 %v140
  %v478 = vpop.f32.mrb[0].mxu0
  %v479 = vadd.f32 %v66, %v478
  %v480 = vpop.f32.mrb[0].mxu0
  %v481 = vpop.f32.mrb[0].mxu0
  %v482 = vadd.f32 %v66, %v481
  %v483 = vpop.f32.mrb[0].mxu0
  %484 = vmatprep.mubr.bf16.mxu0 0
  %485 = vmatmul.mubr.bf16.gmra.mrb[0].mxu0 %v143
  %v486 = vpop.f32.mrb[0].mxu0
  %v487 = vadd.f32 %v66, %v486
  %v488 = vpop.f32.mrb[0].mxu0
  %v489 = vpop.f32.mrb[0].mxu0
  %v490 = vadd.f32 %v66, %v489
  %v491 = vpop.f32.mrb[0].mxu0
  %492 = vmatprep.mubr.bf16.mxu0 0
  %493 = vmatmul.mubr.bf16.gmra.mrb[0].mxu0 %v146
  %v494 = vpop.f32.mrb[0].mxu0
  %v495 = vadd.f32 %v66, %v494
  %v496 = vpop.f32.mrb[0].mxu0
  %v497 = vpop.f32.mrb[0].mxu0
  %v498 = vadd.f32 %v66, %v497
  %v499 = vpop.f32.mrb[0].mxu0
  %500 = vmatprep.mubr.bf16.mxu0 0
  %501 = vmatmul.mubr.bf16.gmra.mrb[0].mxu0 %v149
  %v502 = vpop.f32.mrb[0].mxu0
  %v503 = vadd.f32 %v66, %v502
  %v504 = vpop.f32.mrb[0].mxu0
  %v505 = vpop.f32.mrb[0].mxu0
  %v506 = vadd.f32 %v66, %v505
  %v507 = vpop.f32.mrb[0].mxu0
  %508 = vmatprep.mubr.bf16.mxu0 0
  %509 = vmatmul.mubr.bf16.gmra.mrb[0].mxu0 %v152
  %v510 = vpop.f32.mrb[0].mxu0
  %v511 = vadd.f32 %v66, %v510
  %v512 = vpop.f32.mrb[0].mxu0
  %v513 = vpop.f32.mrb[0].mxu0
  %v514 = vadd.f32 %v66, %v513
  %v515 = vpop.f32.mrb[0].mxu0
  %516 = vmatprep.mubr.bf16.mxu0 0
  %517 = vmatmul.mubr.bf16.gmra.mrb[0].mxu0 %v155
  %v518 = vpop.f32.mrb[0].mxu0
  %v519 = vadd.f32 %v66, %v518
  %v520 = vpop.f32.mrb[0].mxu0
  %v521 = vpop.f32.mrb[0].mxu0
  %v522 = vadd.f32 %v66, %v521
  %v523 = vpop.f32.mrb[0].mxu0
  %524 = vmatprep.mubr.bf16.mxu0 0
  %525 = vmatmul.mubr.bf16.gmra.mrb[0].mxu0 %v158
  %v526 = vpop.f32.mrb[0].mxu0
  %v527 = vadd.f32 %v66, %v526
  %v528 = vpop.f32.mrb[0].mxu0
  %v529 = vpop.f32.mrb[0].mxu0
  %v530 = vadd.f32 %v66, %v529
  %v531 = vpop.f32.mrb[0].mxu0
  %532 = vdwg.mxu0
  %v533 = vld [vmem:[%s4] sm:$0xf]
  %v534 = vld [vmem:[%s4 + $0x4] sm:$0xf]
  %v535 = vld [vmem:[%s4 + $0x8] sm:$0xf]
  %v536 = vld [vmem:[%s4 + $0xc] sm:$0xf]
  %v537 = vld [vmem:[%s4 + $0x10] sm:$0xf]
  %v538 = vld [vmem:[%s4 + $0x14] sm:$0xf]
  %v539 = vld [vmem:[%s4 + $0x18] sm:$0xf]
  %v540 = vld [vmem:[%s4 + $0x1c] sm:$0xf]
  %v541 = vld [vmem:[%s4 + $0x20] sm:$0xf]
  %v551 = vunpack.c.l.b16 %v533
  %v552 = vunpack.c.l.b16 %v534
  %v553 = vunpack.c.l.b16 %v535
  %v554 = vunpack.c.l.b16 %v536
  %v555 = vunpack.c.l.b16 %v537
  %v556 = vunpack.c.l.b16 %v538
  %v557 = vunpack.c.l.b16 %v539
  %v558 = vunpack.c.l.b16 %v540
  %v559 = vunpack.c.l.b16 %v541
  %v560 = vpack.c.b16 %v552, %v551
  %v561 = vpack.c.b16 %v554, %v553
  %v562 = vpack.c.b16 %v556, %v555
  %v563 = vpack.c.b16 %v558, %v557
  %v564 = vpack.c.b16 %v559, %v559
  %v570 = vsel %vm160, %v564, 0
  %572 = vmatprep.subr.bf16.mxu0 0
  %573 = vmatpush1.bf16.msra.mxu0 %v560
  %574 = vmatprep.subr.bf16.mxu0 0
  %575 = vmatpush1.bf16.msra.mxu0 %v561
  %576 = vmatprep.subr.bf16.mxu0 0
  %577 = vmatpush1.bf16.msra.mxu0 %v562
  %578 = vmatprep.subr.bf16.mxu0 0
  %579 = vmatpush1.bf16.msra.mxu0 %v563
  %580 = vmatprep.subr.bf16.mxu0 0
  %581 = vmatpush1.bf16.msra.mxu0 %v570
  %582 = vmatprep.subr.bf16.mxu0 0
  %583 = vmatpush1.bf16.msra.mxu0 0
  %584 = vmatprep.subr.bf16.mxu0 0
  %585 = vmatpush1.bf16.msra.mxu0 0
  %586 = vmatprep.subr.bf16.mxu0 0
  %587 = vmatpush1.bf16.msra.mxu0 0
  %588 = vmatprep.subr.bf16.mxu0 0
  %589 = vmatpush1.bf16.msra.mxu0 0
  %590 = vmatprep.subr.bf16.mxu0 0
  %591 = vmatpush1.bf16.msra.mxu0 0
  %592 = vmatprep.subr.bf16.mxu0 0
  %593 = vmatpush1.bf16.msra.mxu0 0
  %594 = vmatprep.subr.bf16.mxu0 0
  %595 = vmatpush1.bf16.msra.mxu0 0
  %596 = vmatprep.subr.bf16.mxu0 0
  %597 = vmatpush1.bf16.msra.mxu0 0
  %598 = vmatprep.subr.bf16.mxu0 0
  %599 = vmatpush1.bf16.msra.mxu0 0
  %600 = vmatprep.subr.bf16.mxu0 0
  %601 = vmatpush1.bf16.msra.mxu0 0
  %602 = vmatprep.subr.bf16.mxu0 0
  %603 = vmatpush1.bf16.msra.mxu0 0
  %604 = vmatprep.mubr.bf16.mxu0 0
  %605 = vmatmul.mubr.bf16.gmra.mrb[0].mxu0 %v137
  %v606 = vpop.f32.mrb[0].mxu0
  %v607 = vadd.f32 %v66, %v606
  %v608 = vpop.f32.mrb[0].mxu0
  %v609 = vpop.f32.mrb[0].mxu0
  %v610 = vadd.f32 %v66, %v609
  %v611 = vpop.f32.mrb[0].mxu0
  %612 = vmatprep.mubr.bf16.mxu0 0
  %613 = vmatmul.mubr.bf16.gmra.mrb[0].mxu0 %v140
  %v614 = vpop.f32.mrb[0].mxu0
  %v615 = vadd.f32 %v66, %v614
  %v616 = vpop.f32.mrb[0].mxu0
  %v617 = vpop.f32.mrb[0].mxu0
  %v618 = vadd.f32 %v66, %v617
  %v619 = vpop.f32.mrb[0].mxu0
  %620 = vmatprep.mubr.bf16.mxu0 0
  %621 = vmatmul.mubr.bf16.gmra.mrb[0].mxu0 %v143
  %v622 = vpop.f32.mrb[0].mxu0
  %v623 = vadd.f32 %v66, %v622
  %v624 = vpop.f32.mrb[0].mxu0
  %v625 = vpop.f32.mrb[0].mxu0
  %v626 = vadd.f32 %v66, %v625
  %v627 = vpop.f32.mrb[0].mxu0
  %628 = vmatprep.mubr.bf16.mxu0 0
  %629 = vmatmul.mubr.bf16.gmra.mrb[0].mxu0 %v146
  %v630 = vpop.f32.mrb[0].mxu0
  %v631 = vadd.f32 %v66, %v630
  %v632 = vpop.f32.mrb[0].mxu0
  %v633 = vpop.f32.mrb[0].mxu0
  %v634 = vadd.f32 %v66, %v633
  %v635 = vpop.f32.mrb[0].mxu0
  %636 = vmatprep.mubr.bf16.mxu0 0
  %637 = vmatmul.mubr.bf16.gmra.mrb[0].mxu0 %v149
  %v638 = vpop.f32.mrb[0].mxu0
  %v639 = vadd.f32 %v66, %v638
  %v640 = vpop.f32.mrb[0].mxu0
  %v641 = vpop.f32.mrb[0].mxu0
  %v642 = vadd.f32 %v66, %v641
  %v643 = vpop.f32.mrb[0].mxu0
  %644 = vmatprep.mubr.bf16.mxu0 0
  %645 = vmatmul.mubr.bf16.gmra.mrb[0].mxu0 %v152
  %v646 = vpop.f32.mrb[0].mxu0
  %v647 = vadd.f32 %v66, %v646
  %v648 = vpop.f32.mrb[0].mxu0
  %v649 = vpop.f32.mrb[0].mxu0
  %v650 = vadd.f32 %v66, %v649
  %v651 = vpop.f32.mrb[0].mxu0
  %652 = vmatprep.mubr.bf16.mxu0 0
  %653 = vmatmul.mubr.bf16.gmra.mrb[0].mxu0 %v155
  %v654 = vpop.f32.mrb[0].mxu0
  %v655 = vadd.f32 %v66, %v654
  %v656 = vpop.f32.mrb[0].mxu0
  %v657 = vpop.f32.mrb[0].mxu0
  %v658 = vadd.f32 %v66, %v657
  %v659 = vpop.f32.mrb[0].mxu0
  %660 = vmatprep.mubr.bf16.mxu0 0
  %661 = vmatmul.mubr.bf16.gmra.mrb[0].mxu0 %v158
  %v662 = vpop.f32.mrb[0].mxu0
  %v663 = vadd.f32 %v66, %v662
  %v664 = vpop.f32.mrb[0].mxu0
  %v665 = vpop.f32.mrb[0].mxu0
  %v666 = vadd.f32 %v66, %v665
  %v667 = vpop.f32.mrb[0].mxu0
  %668 = vdwg.mxu0
  %vm669 = vcmask 31744
  %v670 = vsel %vm669, %v199, 0.0
  %v671 = vsel %vm669, %v202, 0.0
  %v672 = vadd.f32 %v670, %v671
  %v673 = vsel %vm669, %v207, 0.0
  %v674 = vadd.f32 %v672, %v673
  %v675 = vsel %vm669, %v210, 0.0
  %v676 = vadd.f32 %v674, %v675
  %v677 = vsel %vm669, %v215, 0.0
  %v678 = vadd.f32 %v676, %v677
  %v679 = vsel %vm669, %v218, 0.0
  %v680 = vadd.f32 %v678, %v679
  %v681 = vsel %vm669, %v223, 0.0
  %v682 = vadd.f32 %v680, %v681
  %v683 = vsel %vm669, %v226, 0.0
  %v684 = vadd.f32 %v682, %v683
  %v685 = vsel %vm669, %v231, 0.0
  %v686 = vadd.f32 %v684, %v685
  %v687 = vsel %vm669, %v234, 0.0
  %v688 = vadd.f32 %v686, %v687
  %v689 = vsel %vm669, %v239, 0.0
  %v690 = vadd.f32 %v688, %v689
  %v691 = vsel %vm669, %v242, 0.0
  %v692 = vadd.f32 %v690, %v691
  %v693 = vsel %vm669, %v247, 0.0
  %v694 = vadd.f32 %v692, %v693
  %v695 = vsel %vm669, %v250, 0.0
  %v696 = vadd.f32 %v694, %v695
  %v697 = vsel %vm669, %v255, 0.0
  %v698 = vadd.f32 %v696, %v697
  %v699 = vsel %vm669, %v258, 0.0
  %v700 = vadd.f32 %v698, %v699
  %v701 = vrot.slane %v700, 4
  %v702 = vadd.f32 %v700, %v701
  %v703 = vrot.slane %v702, 2
  %v704 = vadd.f32 %v702, %v703
  %v705 = vrot.slane %v704, 1
  %v706 = vadd.f32 %v704, %v705
  %v707 = vsel %vm669, %v335, 0.0
  %v708 = vsel %vm669, %v338, 0.0
  %v709 = vadd.f32 %v707, %v708
  %v710 = vsel %vm669, %v343, 0.0
  %v711 = vadd.f32 %v709, %v710
  %v712 = vsel %vm669, %v346, 0.0
  %v713 = vadd.f32 %v711, %v712
  %v714 = vsel %vm669, %v351, 0.0
  %v715 = vadd.f32 %v713, %v714
  %v716 = vsel %vm669, %v354, 0.0
  %v717 = vadd.f32 %v715, %v716
  %v718 = vsel %vm669, %v359, 0.0
  %v719 = vadd.f32 %v717, %v718
  %v720 = vsel %vm669, %v362, 0.0
  %v721 = vadd.f32 %v719, %v720
  %v722 = vsel %vm669, %v367, 0.0
  %v723 = vadd.f32 %v721, %v722
  %v724 = vsel %vm669, %v370, 0.0
  %v725 = vadd.f32 %v723, %v724
  %v726 = vsel %vm669, %v375, 0.0
  %v727 = vadd.f32 %v725, %v726
  %v728 = vsel %vm669, %v378, 0.0
  %v729 = vadd.f32 %v727, %v728
  %v730 = vsel %vm669, %v383, 0.0
  %v731 = vadd.f32 %v729, %v730
  %v732 = vsel %vm669, %v386, 0.0
  %v733 = vadd.f32 %v731, %v732
  %v734 = vsel %vm669, %v391, 0.0
  %v735 = vadd.f32 %v733, %v734
  %v736 = vsel %vm669, %v394, 0.0
  %v737 = vadd.f32 %v735, %v736
  %v738 = vrot.slane %v737, 4
  %v739 = vadd.f32 %v737, %v738
  %v740 = vrot.slane %v739, 2
  %v741 = vadd.f32 %v739, %v740
  %v742 = vrot.slane %v741, 1
  %v743 = vadd.f32 %v741, %v742
  %v744 = vadd.f32 %v706, %v743
  %v745 = vsel %vm669, %v471, 0.0
  %v746 = vsel %vm669, %v474, 0.0
  %v747 = vadd.f32 %v745, %v746
  %v748 = vsel %vm669, %v479, 0.0
  %v749 = vadd.f32 %v747, %v748
  %v750 = vsel %vm669, %v482, 0.0
  %v751 = vadd.f32 %v749, %v750
  %v752 = vsel %vm669, %v487, 0.0
  %v753 = vadd.f32 %v751, %v752
  %v754 = vsel %vm669, %v490, 0.0
  %v755 = vadd.f32 %v753, %v754
  %v756 = vsel %vm669, %v495, 0.0
  %v757 = vadd.f32 %v755, %v756
  %v758 = vsel %vm669, %v498, 0.0
  %v759 = vadd.f32 %v757, %v758
  %v760 = vsel %vm669, %v503, 0.0
  %v761 = vadd.f32 %v759, %v760
  %v762 = vsel %vm669, %v506, 0.0
  %v763 = vadd.f32 %v761, %v762
  %v764 = vsel %vm669, %v511, 0.0
  %v765 = vadd.f32 %v763, %v764
  %v766 = vsel %vm669, %v514, 0.0
  %v767 = vadd.f32 %v765, %v766
  %v768 = vsel %vm669, %v519, 0.0
  %v769 = vadd.f32 %v767, %v768
  %v770 = vsel %vm669, %v522, 0.0
  %v771 = vadd.f32 %v769, %v770
  %v772 = vsel %vm669, %v527, 0.0
  %v773 = vadd.f32 %v771, %v772
  %v774 = vsel %vm669, %v530, 0.0
  %v775 = vadd.f32 %v773, %v774
  %v776 = vrot.slane %v775, 4
  %v777 = vadd.f32 %v775, %v776
  %v778 = vrot.slane %v777, 2
  %v779 = vadd.f32 %v777, %v778
  %v780 = vrot.slane %v779, 1
  %v781 = vadd.f32 %v779, %v780
  %v782 = vadd.f32 %v744, %v781
  %v783 = vsel %vm669, %v607, 0.0
  %v784 = vsel %vm669, %v610, 0.0
  %v785 = vadd.f32 %v783, %v784
  %v786 = vsel %vm669, %v615, 0.0
  %v787 = vadd.f32 %v785, %v786
  %v788 = vsel %vm669, %v618, 0.0
  %v789 = vadd.f32 %v787, %v788
  %v790 = vsel %vm669, %v623, 0.0
  %v791 = vadd.f32 %v789, %v790
  %v792 = vsel %vm669, %v626, 0.0
  %v793 = vadd.f32 %v791, %v792
  %v794 = vsel %vm669, %v631, 0.0
  %v795 = vadd.f32 %v793, %v794
  %v796 = vsel %vm669, %v634, 0.0
  %v797 = vadd.f32 %v795, %v796
  %v798 = vsel %vm669, %v639, 0.0
  %v799 = vadd.f32 %v797, %v798
  %v800 = vsel %vm669, %v642, 0.0
  %v801 = vadd.f32 %v799, %v800
  %v802 = vsel %vm669, %v647, 0.0
  %v803 = vadd.f32 %v801, %v802
  %v804 = vsel %vm669, %v650, 0.0
  %v805 = vadd.f32 %v803, %v804
  %v806 = vsel %vm669, %v655, 0.0
  %v807 = vadd.f32 %v805, %v806
  %v808 = vsel %vm669, %v658, 0.0
  %v809 = vadd.f32 %v807, %v808
  %v810 = vsel %vm669, %v663, 0.0
  %v811 = vadd.f32 %v809, %v810
  %v812 = vsel %vm669, %v666, 0.0
  %v813 = vadd.f32 %v811, %v812
  %v814 = vrot.slane %v813, 4
  %v815 = vadd.f32 %v813, %v814
  %v816 = vrot.slane %v815, 2
  %v817 = vadd.f32 %v815, %v816
  %v818 = vrot.slane %v817, 1
  %v819 = vadd.f32 %v817, %v818
  %v820 = vadd.f32 %v782, %v819
  %v821 = vrcp.pop 512.0
  %v822 = vmul.f32 %v820, %v821
  %v823 = vsub.f32 %v199, %v822
  %v824 = vsub.f32 %v202, %v822
  %v825 = vsub.f32 %v207, %v822
  %v826 = vsub.f32 %v210, %v822
  %v827 = vsub.f32 %v215, %v822
  %v828 = vsub.f32 %v218, %v822
  %v829 = vsub.f32 %v223, %v822
  %v830 = vsub.f32 %v226, %v822
  %v831 = vsub.f32 %v231, %v822
  %v832 = vsub.f32 %v234, %v822
  %v833 = vsub.f32 %v239, %v822
  %v834 = vsub.f32 %v242, %v822
  %v835 = vsub.f32 %v247, %v822
  %v836 = vsub.f32 %v250, %v822
  %v837 = vsub.f32 %v255, %v822
  %v838 = vsub.f32 %v258, %v822
  %v839 = vmul.f32 %v823, %v823
  %v840 = vmul.f32 %v824, %v824
  %v841 = vmul.f32 %v825, %v825
  %v842 = vmul.f32 %v826, %v826
  %v843 = vmul.f32 %v827, %v827
  %v844 = vmul.f32 %v828, %v828
  %v845 = vmul.f32 %v829, %v829
  %v846 = vmul.f32 %v830, %v830
  %v847 = vmul.f32 %v831, %v831
  %v848 = vmul.f32 %v832, %v832
  %v849 = vmul.f32 %v833, %v833
  %v850 = vmul.f32 %v834, %v834
  %v851 = vmul.f32 %v835, %v835
  %v852 = vmul.f32 %v836, %v836
  %v853 = vmul.f32 %v837, %v837
  %v854 = vmul.f32 %v838, %v838
  %v855 = vsel %vm669, %v839, 0.0
  %v856 = vsel %vm669, %v840, 0.0
  %v857 = vadd.f32 %v855, %v856
  %v858 = vsel %vm669, %v841, 0.0
  %v859 = vadd.f32 %v857, %v858
  %v860 = vsel %vm669, %v842, 0.0
  %v861 = vadd.f32 %v859, %v860
  %v862 = vsel %vm669, %v843, 0.0
  %v863 = vadd.f32 %v861, %v862
  %v864 = vsel %vm669, %v844, 0.0
  %v865 = vadd.f32 %v863, %v864
  %v866 = vsel %vm669, %v845, 0.0
  %v867 = vadd.f32 %v865, %v866
  %v868 = vsel %vm669, %v846, 0.0
  %v869 = vadd.f32 %v867, %v868
  %v870 = vsel %vm669, %v847, 0.0
  %v871 = vadd.f32 %v869, %v870
  %v872 = vsel %vm669, %v848, 0.0
  %v873 = vadd.f32 %v871, %v872
  %v874 = vsel %vm669, %v849, 0.0
  %v875 = vadd.f32 %v873, %v874
  %v876 = vsel %vm669, %v850, 0.0
  %v877 = vadd.f32 %v875, %v876
  %v878 = vsel %vm669, %v851, 0.0
  %v879 = vadd.f32 %v877, %v878
  %v880 = vsel %vm669, %v852, 0.0
  %v881 = vadd.f32 %v879, %v880
  %v882 = vsel %vm669, %v853, 0.0
  %v883 = vadd.f32 %v881, %v882
  %v884 = vsel %vm669, %v854, 0.0
  %v885 = vadd.f32 %v883, %v884
  %v886 = vrot.slane %v885, 4
  %v887 = vadd.f32 %v885, %v886
  %v888 = vrot.slane %v887, 2
  %v889 = vadd.f32 %v887, %v888
  %v890 = vrot.slane %v889, 1
  %v891 = vadd.f32 %v889, %v890
  %v892 = vsub.f32 %v335, %v822
  %v893 = vsub.f32 %v338, %v822
  %v894 = vsub.f32 %v343, %v822
  %v895 = vsub.f32 %v346, %v822
  %v896 = vsub.f32 %v351, %v822
  %v897 = vsub.f32 %v354, %v822
  %v898 = vsub.f32 %v359, %v822
  %v899 = vsub.f32 %v362, %v822
  %v900 = vsub.f32 %v367, %v822
  %v901 = vsub.f32 %v370, %v822
  %v902 = vsub.f32 %v375, %v822
  %v903 = vsub.f32 %v378, %v822
  %v904 = vsub.f32 %v383, %v822
  %v905 = vsub.f32 %v386, %v822
  %v906 = vsub.f32 %v391, %v822
  %v907 = vsub.f32 %v394, %v822
  %v908 = vmul.f32 %v892, %v892
  %v909 = vmul.f32 %v893, %v893
  %v910 = vmul.f32 %v894, %v894
  %v911 = vmul.f32 %v895, %v895
  %v912 = vmul.f32 %v896, %v896
  %v913 = vmul.f32 %v897, %v897
  %v914 = vmul.f32 %v898, %v898
  %v915 = vmul.f32 %v899, %v899
  %v916 = vmul.f32 %v900, %v900
  %v917 = vmul.f32 %v901, %v901
  %v918 = vmul.f32 %v902, %v902
  %v919 = vmul.f32 %v903, %v903
  %v920 = vmul.f32 %v904, %v904
  %v921 = vmul.f32 %v905, %v905
  %v922 = vmul.f32 %v906, %v906
  %v923 = vmul.f32 %v907, %v907
  %v924 = vsel %vm669, %v908, 0.0
  %v925 = vsel %vm669, %v909, 0.0
  %v926 = vadd.f32 %v924, %v925
  %v927 = vsel %vm669, %v910, 0.0
  %v928 = vadd.f32 %v926, %v927
  %v929 = vsel %vm669, %v911, 0.0
  %v930 = vadd.f32 %v928, %v929
  %v931 = vsel %vm669, %v912, 0.0
  %v932 = vadd.f32 %v930, %v931
  %v933 = vsel %vm669, %v913, 0.0
  %v934 = vadd.f32 %v932, %v933
  %v935 = vsel %vm669, %v914, 0.0
  %v936 = vadd.f32 %v934, %v935
  %v937 = vsel %vm669, %v915, 0.0
  %v938 = vadd.f32 %v936, %v937
  %v939 = vsel %vm669, %v916, 0.0
  %v940 = vadd.f32 %v938, %v939
  %v941 = vsel %vm669, %v917, 0.0
  %v942 = vadd.f32 %v940, %v941
  %v943 = vsel %vm669, %v918, 0.0
  %v944 = vadd.f32 %v942, %v943
  %v945 = vsel %vm669, %v919, 0.0
  %v946 = vadd.f32 %v944, %v945
  %v947 = vsel %vm669, %v920, 0.0
  %v948 = vadd.f32 %v946, %v947
  %v949 = vsel %vm669, %v921, 0.0
  %v950 = vadd.f32 %v948, %v949
  %v951 = vsel %vm669, %v922, 0.0
  %v952 = vadd.f32 %v950, %v951
  %v953 = vsel %vm669, %v923, 0.0
  %v954 = vadd.f32 %v952, %v953
  %v955 = vrot.slane %v954, 4
  %v956 = vadd.f32 %v954, %v955
  %v957 = vrot.slane %v956, 2
  %v958 = vadd.f32 %v956, %v957
  %v959 = vrot.slane %v958, 1
  %v960 = vadd.f32 %v958, %v959
  %v961 = vadd.f32 %v891, %v960
  %v962 = vsub.f32 %v471, %v822
  %v963 = vsub.f32 %v474, %v822
  %v964 = vsub.f32 %v479, %v822
  %v965 = vsub.f32 %v482, %v822
  %v966 = vsub.f32 %v487, %v822
  %v967 = vsub.f32 %v490, %v822
  %v968 = vsub.f32 %v495, %v822
  %v969 = vsub.f32 %v498, %v822
  %v970 = vsub.f32 %v503, %v822
  %v971 = vsub.f32 %v506, %v822
  %v972 = vsub.f32 %v511, %v822
  %v973 = vsub.f32 %v514, %v822
  %v974 = vsub.f32 %v519, %v822
  %v975 = vsub.f32 %v522, %v822
  %v976 = vsub.f32 %v527, %v822
  %v977 = vsub.f32 %v530, %v822
  %v978 = vmul.f32 %v962, %v962
  %v979 = vmul.f32 %v963, %v963
  %v980 = vmul.f32 %v964, %v964
  %v981 = vmul.f32 %v965, %v965
  %v982 = vmul.f32 %v966, %v966
  %v983 = vmul.f32 %v967, %v967
  %v984 = vmul.f32 %v968, %v968
  %v985 = vmul.f32 %v969, %v969
  %v986 = vmul.f32 %v970, %v970
  %v987 = vmul.f32 %v971, %v971
  %v988 = vmul.f32 %v972, %v972
  %v989 = vmul.f32 %v973, %v973
  %v990 = vmul.f32 %v974, %v974
  %v991 = vmul.f32 %v975, %v975
  %v992 = vmul.f32 %v976, %v976
  %v993 = vmul.f32 %v977, %v977
  %v994 = vsel %vm669, %v978, 0.0
  %v995 = vsel %vm669, %v979, 0.0
  %v996 = vadd.f32 %v994, %v995
  %v997 = vsel %vm669, %v980, 0.0
  %v998 = vadd.f32 %v996, %v997
  %v999 = vsel %vm669, %v981, 0.0
  %v1000 = vadd.f32 %v998, %v999
  %v1001 = vsel %vm669, %v982, 0.0
  %v1002 = vadd.f32 %v1000, %v1001
  %v1003 = vsel %vm669, %v983, 0.0
  %v1004 = vadd.f32 %v1002, %v1003
  %v1005 = vsel %vm669, %v984, 0.0
  %v1006 = vadd.f32 %v1004, %v1005
  %v1007 = vsel %vm669, %v985, 0.0
  %v1008 = vadd.f32 %v1006, %v1007
  %v1009 = vsel %vm669, %v986, 0.0
  %v1010 = vadd.f32 %v1008, %v1009
  %v1011 = vsel %vm669, %v987, 0.0
  %v1012 = vadd.f32 %v1010, %v1011
  %v1013 = vsel %vm669, %v988, 0.0
  %v1014 = vadd.f32 %v1012, %v1013
  %v1015 = vsel %vm669, %v989, 0.0
  %v1016 = vadd.f32 %v1014, %v1015
  %v1017 = vsel %vm669, %v990, 0.0
  %v1018 = vadd.f32 %v1016, %v1017
  %v1019 = vsel %vm669, %v991, 0.0
  %v1020 = vadd.f32 %v1018, %v1019
  %v1021 = vsel %vm669, %v992, 0.0
  %v1022 = vadd.f32 %v1020, %v1021
  %v1023 = vsel %vm669, %v993, 0.0
  %v1024 = vadd.f32 %v1022, %v1023
  %v1025 = vrot.slane %v1024, 4
  %v1026 = vadd.f32 %v1024, %v1025
  %v1027 = vrot.slane %v1026, 2
  %v1028 = vadd.f32 %v1026, %v1027
  %v1029 = vrot.slane %v1028, 1
  %v1030 = vadd.f32 %v1028, %v1029
  %v1031 = vadd.f32 %v961, %v1030
  %v1032 = vsub.f32 %v607, %v822
  %v1033 = vsub.f32 %v610, %v822
  %v1034 = vsub.f32 %v615, %v822
  %v1035 = vsub.f32 %v618, %v822
  %v1036 = vsub.f32 %v623, %v822
  %v1037 = vsub.f32 %v626, %v822
  %v1038 = vsub.f32 %v631, %v822
  %v1039 = vsub.f32 %v634, %v822
  %v1040 = vsub.f32 %v639, %v822
  %v1041 = vsub.f32 %v642, %v822
  %v1042 = vsub.f32 %v647, %v822
  %v1043 = vsub.f32 %v650, %v822
  %v1044 = vsub.f32 %v655, %v822
  %v1045 = vsub.f32 %v658, %v822
  %v1046 = vsub.f32 %v663, %v822
  %v1047 = vsub.f32 %v666, %v822
  %v1048 = vmul.f32 %v1032, %v1032
  %v1049 = vmul.f32 %v1033, %v1033
  %v1050 = vmul.f32 %v1034, %v1034
  %v1051 = vmul.f32 %v1035, %v1035
  %v1052 = vmul.f32 %v1036, %v1036
  %v1053 = vmul.f32 %v1037, %v1037
  %v1054 = vmul.f32 %v1038, %v1038
  %v1055 = vmul.f32 %v1039, %v1039
  %v1056 = vmul.f32 %v1040, %v1040
  %v1057 = vmul.f32 %v1041, %v1041
  %v1058 = vmul.f32 %v1042, %v1042
  %v1059 = vmul.f32 %v1043, %v1043
  %v1060 = vmul.f32 %v1044, %v1044
  %v1061 = vmul.f32 %v1045, %v1045
  %v1062 = vmul.f32 %v1046, %v1046
  %v1063 = vmul.f32 %v1047, %v1047
  %v1064 = vsel %vm669, %v1048, 0.0
  %v1065 = vsel %vm669, %v1049, 0.0
  %v1066 = vadd.f32 %v1064, %v1065
  %v1067 = vsel %vm669, %v1050, 0.0
  %v1068 = vadd.f32 %v1066, %v1067
  %v1069 = vsel %vm669, %v1051, 0.0
  %v1070 = vadd.f32 %v1068, %v1069
  %v1071 = vsel %vm669, %v1052, 0.0
  %v1072 = vadd.f32 %v1070, %v1071
  %v1073 = vsel %vm669, %v1053, 0.0
  %v1074 = vadd.f32 %v1072, %v1073
  %v1075 = vsel %vm669, %v1054, 0.0
  %v1076 = vadd.f32 %v1074, %v1075
  %v1077 = vsel %vm669, %v1055, 0.0
  %v1078 = vadd.f32 %v1076, %v1077
  %v1079 = vsel %vm669, %v1056, 0.0
  %v1080 = vadd.f32 %v1078, %v1079
  %v1081 = vsel %vm669, %v1057, 0.0
  %v1082 = vadd.f32 %v1080, %v1081
  %v1083 = vsel %vm669, %v1058, 0.0
  %v1084 = vadd.f32 %v1082, %v1083
  %v1085 = vsel %vm669, %v1059, 0.0
  %v1086 = vadd.f32 %v1084, %v1085
  %v1087 = vsel %vm669, %v1060, 0.0
  %v1088 = vadd.f32 %v1086, %v1087
  %v1089 = vsel %vm669, %v1061, 0.0
  %v1090 = vadd.f32 %v1088, %v1089
  %v1091 = vsel %vm669, %v1062, 0.0
  %v1092 = vadd.f32 %v1090, %v1091
  %v1093 = vsel %vm669, %v1063, 0.0
  %v1094 = vadd.f32 %v1092, %v1093
  %v1095 = vrot.slane %v1094, 4
  %v1096 = vadd.f32 %v1094, %v1095
  %v1097 = vrot.slane %v1096, 2
  %v1098 = vadd.f32 %v1096, %v1097
  %v1099 = vrot.slane %v1098, 1
  %v1100 = vadd.f32 %v1098, %v1099
  %v1101 = vadd.f32 %v1031, %v1100
  %v1102 = vmul.f32 %v1101, %v821
  %v1103 = vld [vmem:[%s6] sm:$0x1]
  %v1104 = vadd.f32 %v1102, 1e-05
  %v1105 = vrsqrt.pop %v1104
  %v1106 = vmul.f32 %v1103, %v1105
  %v1107 = vld [vmem:[%s7] sm:$0x1]
  %v1108 = vmul.f32 %v822, %v1106
  %v1109 = vsub.f32 %v1107, %v1108
  %v1111 = vlaneseq
  %v1112 = vshrl.u32 %v1111, 7
  %v1113 = vsub.s32 0, %v1112
  %v1114 = vrot.slane %v1106, %v1113
  %v1116 = vmul.f32 %v199, %v1114
  %v1117 = vmul.f32 %v202, %v1114
  %v1118 = vmul.f32 %v207, %v1114
  %v1119 = vmul.f32 %v210, %v1114
  %v1120 = vmul.f32 %v215, %v1114
  %v1121 = vmul.f32 %v218, %v1114
  %v1122 = vmul.f32 %v223, %v1114
  %v1123 = vmul.f32 %v226, %v1114
  %v1124 = vmul.f32 %v231, %v1114
  %v1125 = vmul.f32 %v234, %v1114
  %v1126 = vmul.f32 %v239, %v1114
  %v1127 = vmul.f32 %v242, %v1114
  %v1128 = vmul.f32 %v247, %v1114
  %v1129 = vmul.f32 %v250, %v1114
  %v1130 = vmul.f32 %v255, %v1114
  %v1131 = vmul.f32 %v258, %v1114
  %v1133 = vlaneseq
  %v1134 = vshrl.u32 %v1133, 7
  %v1135 = vsub.s32 0, %v1134
  %v1136 = vrot.slane %v1109, %v1135
  %v1138 = vadd.f32 %v1116, %v1136
  %v1139 = vadd.f32 %v1117, %v1136
  %v1140 = vadd.f32 %v1118, %v1136
  %v1141 = vadd.f32 %v1119, %v1136
  %v1142 = vadd.f32 %v1120, %v1136
  %v1143 = vadd.f32 %v1121, %v1136
  %v1144 = vadd.f32 %v1122, %v1136
  %v1145 = vadd.f32 %v1123, %v1136
  %v1146 = vadd.f32 %v1124, %v1136
  %v1147 = vadd.f32 %v1125, %v1136
  %v1148 = vadd.f32 %v1126, %v1136
  %v1149 = vadd.f32 %v1127, %v1136
  %v1150 = vadd.f32 %v1128, %v1136
  %v1151 = vadd.f32 %v1129, %v1136
  %v1152 = vadd.f32 %v1130, %v1136
  %v1153 = vadd.f32 %v1131, %v1136
  %v1154 = vmax.f32 %v1138, 0.0
  %v1155 = vmax.f32 %v1139, 0.0
  %v1156 = vmax.f32 %v1140, 0.0
  %v1157 = vmax.f32 %v1141, 0.0
  %v1158 = vmax.f32 %v1142, 0.0
  %v1159 = vmax.f32 %v1143, 0.0
  %v1160 = vmax.f32 %v1144, 0.0
  %v1161 = vmax.f32 %v1145, 0.0
  %v1162 = vmax.f32 %v1146, 0.0
  %v1163 = vmax.f32 %v1147, 0.0
  %v1164 = vmax.f32 %v1148, 0.0
  %v1165 = vmax.f32 %v1149, 0.0
  %v1166 = vmax.f32 %v1150, 0.0
  %v1167 = vmax.f32 %v1151, 0.0
  %v1168 = vmax.f32 %v1152, 0.0
  %v1169 = vmax.f32 %v1153, 0.0
  %v1170 = vpack.c.bf16 %v1155, %v1154
  %v1171 = vpack.c.bf16 %v1157, %v1156
  %v1172 = vpack.c.bf16 %v1159, %v1158
  %v1173 = vpack.c.bf16 %v1161, %v1160
  %v1174 = vpack.c.bf16 %v1163, %v1162
  %v1175 = vpack.c.bf16 %v1165, %v1164
  %v1176 = vpack.c.bf16 %v1167, %v1166
  %v1177 = vpack.c.bf16 %v1169, %v1168
  %v1178 = vld [vmem:[%s8] sm:$0x3]
  %v1179 = vld [vmem:[%s9] sm:$0x1]
  %v1181 = vlaneseq
  %v1182 = vshrl.u32 %v1181, 7
  %v1183 = vsub.s32 0, %v1182
  %v1184 = vrot.slane %v1179, %v1183
  %v1187 = vsel %vm669, %v1170, 0
  %v1190 = vsel %vm669, %v1171, 0
  %v1193 = vsel %vm669, %v1172, 0
  %v1196 = vsel %vm669, %v1173, 0
  %v1199 = vsel %vm669, %v1174, 0
  %v1202 = vsel %vm669, %v1175, 0
  %v1205 = vsel %vm669, %v1176, 0
  %v1208 = vsel %vm669, %v1177, 0
  %vm1210 = vcmask 1041408
  %v1212 = vsel %vm1210, %v1178, 0
  %1214 = vmatprep.subr.bf16.mxu0 0
  %1215 = vmatpush1.bf16.msra.mxu0 %v1212
  %1216 = vmatprep.subr.bf16.mxu0 0
  %1217 = vmatpush1.bf16.msra.mxu0 0
  %1218 = vmatprep.subr.bf16.mxu0 0
  %1219 = vmatpush1.bf16.msra.mxu0 0
  %1220 = vmatprep.subr.bf16.mxu0 0
  %1221 = vmatpush1.bf16.msra.mxu0 0
  %1222 = vmatprep.subr.bf16.mxu0 0
  %1223 = vmatpush1.bf16.msra.mxu0 0
  %1224 = vmatprep.subr.bf16.mxu0 0
  %1225 = vmatpush1.bf16.msra.mxu0 0
  %1226 = vmatprep.subr.bf16.mxu0 0
  %1227 = vmatpush1.bf16.msra.mxu0 0
  %1228 = vmatprep.subr.bf16.mxu0 0
  %1229 = vmatpush1.bf16.msra.mxu0 0
  %1230 = vmatprep.subr.bf16.mxu0 0
  %1231 = vmatpush1.bf16.msra.mxu0 0
  %1232 = vmatprep.subr.bf16.mxu0 0
  %1233 = vmatpush1.bf16.msra.mxu0 0
  %1234 = vmatprep.subr.bf16.mxu0 0
  %1235 = vmatpush1.bf16.msra.mxu0 0
  %1236 = vmatprep.subr.bf16.mxu0 0
  %1237 = vmatpush1.bf16.msra.mxu0 0
  %1238 = vmatprep.subr.bf16.mxu0 0
  %1239 = vmatpush1.bf16.msra.mxu0 0
  %1240 = vmatprep.subr.bf16.mxu0 0
  %1241 = vmatpush1.bf16.msra.mxu0 0
  %1242 = vmatprep.subr.bf16.mxu0 0
  %1243 = vmatpush1.bf16.msra.mxu0 0
  %1244 = vmatprep.subr.bf16.mxu0 0
  %1245 = vmatpush1.bf16.msra.mxu0 0
  %1246 = vmatprep.mubr.bf16.mxu0 0
  %1247 = vmatmul.mubr.bf16.gmra.mrb[0].mxu0 %v1187
  %v1248 = vpop.f32.mrb[0].mxu0
  %v1249 = vadd.f32 %v1184, %v1248
  %v1250 = vpop.f32.mrb[0].mxu0
  %v1251 = vpop.f32.mrb[0].mxu0
  %v1252 = vadd.f32 %v1184, %v1251
  %v1253 = vpop.f32.mrb[0].mxu0
  %1254 = vmatprep.mubr.bf16.mxu0 0
  %1255 = vmatmul.mubr.bf16.gmra.mrb[0].mxu0 %v1190
  %v1256 = vpop.f32.mrb[0].mxu0
  %v1257 = vadd.f32 %v1184, %v1256
  %v1258 = vpop.f32.mrb[0].mxu0
  %v1259 = vpop.f32.mrb[0].mxu0
  %v1260 = vadd.f32 %v1184, %v1259
  %v1261 = vpop.f32.mrb[0].mxu0
  %1262 = vmatprep.mubr.bf16.mxu0 0
  %1263 = vmatmul.mubr.bf16.gmra.mrb[0].mxu0 %v1193
  %v1264 = vpop.f32.mrb[0].mxu0
  %v1265 = vadd.f32 %v1184, %v1264
  %v1266 = vpop.f32.mrb[0].mxu0
  %v1267 = vpop.f32.mrb[0].mxu0
  %v1268 = vadd.f32 %v1184, %v1267
  %v1269 = vpop.f32.mrb[0].mxu0
  %1270 = vmatprep.mubr.bf16.mxu0 0
  %1271 = vmatmul.mubr.bf16.gmra.mrb[0].mxu0 %v1196
  %v1272 = vpop.f32.mrb[0].mxu0
  %v1273 = vadd.f32 %v1184, %v1272
  %v1274 = vpop.f32.mrb[0].mxu0
  %v1275 = vpop.f32.mrb[0].mxu0
  %v1276 = vadd.f32 %v1184, %v1275
  %v1277 = vpop.f32.mrb[0].mxu0
  %1278 = vmatprep.mubr.bf16.mxu0 0
  %1279 = vmatmul.mubr.bf16.gmra.mrb[0].mxu0 %v1199
  %v1280 = vpop.f32.mrb[0].mxu0
  %v1281 = vadd.f32 %v1184, %v1280
  %v1282 = vpop.f32.mrb[0].mxu0
  %v1283 = vpop.f32.mrb[0].mxu0
  %v1284 = vadd.f32 %v1184, %v1283
  %v1285 = vpop.f32.mrb[0].mxu0
  %1286 = vmatprep.mubr.bf16.mxu0 0
  %1287 = vmatmul.mubr.bf16.gmra.mrb[0].mxu0 %v1202
  %v1288 = vpop.f32.mrb[0].mxu0
  %v1289 = vadd.f32 %v1184, %v1288
  %v1290 = vpop.f32.mrb[0].mxu0
  %v1291 = vpop.f32.mrb[0].mxu0
  %v1292 = vadd.f32 %v1184, %v1291
  %v1293 = vpop.f32.mrb[0].mxu0
  %1294 = vmatprep.mubr.bf16.mxu0 0
  %1295 = vmatmul.mubr.bf16.gmra.mrb[0].mxu0 %v1205
  %v1296 = vpop.f32.mrb[0].mxu0
  %v1297 = vadd.f32 %v1184, %v1296
  %v1298 = vpop.f32.mrb[0].mxu0
  %v1299 = vpop.f32.mrb[0].mxu0
  %v1300 = vadd.f32 %v1184, %v1299
  %v1301 = vpop.f32.mrb[0].mxu0
  %1302 = vmatprep.mubr.bf16.mxu0 0
  %1303 = vmatmul.mubr.bf16.gmra.mrb[0].mxu0 %v1208
  %v1304 = vpop.f32.mrb[0].mxu0
  %v1305 = vadd.f32 %v1184, %v1304
  %v1306 = vpop.f32.mrb[0].mxu0
  %v1307 = vpop.f32.mrb[0].mxu0
  %v1308 = vadd.f32 %v1184, %v1307
  %v1309 = vpop.f32.mrb[0].mxu0
  %1310 = vdwg.mxu0
  %v1311 = vtanh.pop %v1249
  %v1312 = vtanh.pop %v1252
  %v1313 = vtanh.pop %v1257
  %v1314 = vtanh.pop %v1260
  %v1315 = vtanh.pop %v1265
  %v1316 = vtanh.pop %v1268
  %v1317 = vtanh.pop %v1273
  %v1318 = vtanh.pop %v1276
  %v1319 = vtanh.pop %v1281
  %v1320 = vtanh.pop %v1284
  %v1321 = vtanh.pop %v1289
  %v1322 = vtanh.pop %v1292
  %v1323 = vtanh.pop %v1297
  %v1324 = vtanh.pop %v1300
  %v1325 = vtanh.pop %v1305
  %v1326 = vtanh.pop %v1308
  %vm1327 = vcmask 23552
  %1328 = vst.msk [vmem:[%s10] sm:$0xff] %vm1327, %v1311
  %1329 = vst.msk [vmem:[%s10 + $0x8] sm:$0xff] %vm1327, %v1312
  %1330 = vst.msk [vmem:[%s10 + $0x10] sm:$0xff] %vm1327, %v1313
  %1331 = vst.msk [vmem:[%s10 + $0x18] sm:$0xff] %vm1327, %v1314
  %1332 = vst.msk [vmem:[%s10 + $0x20] sm:$0xff] %vm1327, %v1315
  %1333 = vst.msk [vmem:[%s10 + $0x28] sm:$0xff] %vm1327, %v1316
  %1334 = vst.msk [vmem:[%s10 + $0x30] sm:$0xff] %vm1327, %v1317
  %1335 = vst.msk [vmem:[%s10 + $0x38] sm:$0xff] %vm1327, %v1318
  %1336 = vst.msk [vmem:[%s10 + $0x40] sm:$0xff] %vm1327, %v1319
  %1337 = vst.msk [vmem:[%s10 + $0x48] sm:$0xff] %vm1327, %v1320
  %1338 = vst.msk [vmem:[%s10 + $0x50] sm:$0xff] %vm1327, %v1321
  %1339 = vst.msk [vmem:[%s10 + $0x58] sm:$0xff] %vm1327, %v1322
  %1340 = vst.msk [vmem:[%s10 + $0x60] sm:$0xff] %vm1327, %v1323
  %1341 = vst.msk [vmem:[%s10 + $0x68] sm:$0xff] %vm1327, %v1324
  %1342 = vst.msk [vmem:[%s10 + $0x70] sm:$0xff] %vm1327, %v1325
  %1343 = vst.msk [vmem:[%s10 + $0x78] sm:$0xff] %vm1327, %v1326
  %v1344 = vmul.f32 %v335, %v1114
  %v1345 = vmul.f32 %v338, %v1114
  %v1346 = vmul.f32 %v343, %v1114
  %v1347 = vmul.f32 %v346, %v1114
  %v1348 = vmul.f32 %v351, %v1114
  %v1349 = vmul.f32 %v354, %v1114
  %v1350 = vmul.f32 %v359, %v1114
  %v1351 = vmul.f32 %v362, %v1114
  %v1352 = vmul.f32 %v367, %v1114
  %v1353 = vmul.f32 %v370, %v1114
  %v1354 = vmul.f32 %v375, %v1114
  %v1355 = vmul.f32 %v378, %v1114
  %v1356 = vmul.f32 %v383, %v1114
  %v1357 = vmul.f32 %v386, %v1114
  %v1358 = vmul.f32 %v391, %v1114
  %v1359 = vmul.f32 %v394, %v1114
  %v1360 = vadd.f32 %v1344, %v1136
  %v1361 = vadd.f32 %v1345, %v1136
  %v1362 = vadd.f32 %v1346, %v1136
  %v1363 = vadd.f32 %v1347, %v1136
  %v1364 = vadd.f32 %v1348, %v1136
  %v1365 = vadd.f32 %v1349, %v1136
  %v1366 = vadd.f32 %v1350, %v1136
  %v1367 = vadd.f32 %v1351, %v1136
  %v1368 = vadd.f32 %v1352, %v1136
  %v1369 = vadd.f32 %v1353, %v1136
  %v1370 = vadd.f32 %v1354, %v1136
  %v1371 = vadd.f32 %v1355, %v1136
  %v1372 = vadd.f32 %v1356, %v1136
  %v1373 = vadd.f32 %v1357, %v1136
  %v1374 = vadd.f32 %v1358, %v1136
  %v1375 = vadd.f32 %v1359, %v1136
  %v1376 = vmax.f32 %v1360, 0.0
  %v1377 = vmax.f32 %v1361, 0.0
  %v1378 = vmax.f32 %v1362, 0.0
  %v1379 = vmax.f32 %v1363, 0.0
  %v1380 = vmax.f32 %v1364, 0.0
  %v1381 = vmax.f32 %v1365, 0.0
  %v1382 = vmax.f32 %v1366, 0.0
  %v1383 = vmax.f32 %v1367, 0.0
  %v1384 = vmax.f32 %v1368, 0.0
  %v1385 = vmax.f32 %v1369, 0.0
  %v1386 = vmax.f32 %v1370, 0.0
  %v1387 = vmax.f32 %v1371, 0.0
  %v1388 = vmax.f32 %v1372, 0.0
  %v1389 = vmax.f32 %v1373, 0.0
  %v1390 = vmax.f32 %v1374, 0.0
  %v1391 = vmax.f32 %v1375, 0.0
  %v1392 = vpack.c.bf16 %v1377, %v1376
  %v1393 = vpack.c.bf16 %v1379, %v1378
  %v1394 = vpack.c.bf16 %v1381, %v1380
  %v1395 = vpack.c.bf16 %v1383, %v1382
  %v1396 = vpack.c.bf16 %v1385, %v1384
  %v1397 = vpack.c.bf16 %v1387, %v1386
  %v1398 = vpack.c.bf16 %v1389, %v1388
  %v1399 = vpack.c.bf16 %v1391, %v1390
  %v1400 = vld [vmem:[%s8] sm:$0x3]
  %v1401 = vld [vmem:[%s9] sm:$0x1]
  %v1403 = vlaneseq
  %v1404 = vshrl.u32 %v1403, 7
  %v1405 = vsub.s32 0, %v1404
  %v1406 = vrot.slane %v1401, %v1405
  %v1409 = vsel %vm669, %v1392, 0
  %v1412 = vsel %vm669, %v1393, 0
  %v1415 = vsel %vm669, %v1394, 0
  %v1418 = vsel %vm669, %v1395, 0
  %v1421 = vsel %vm669, %v1396, 0
  %v1424 = vsel %vm669, %v1397, 0
  %v1427 = vsel %vm669, %v1398, 0
  %v1430 = vsel %vm669, %v1399, 0
  %v1433 = vsel %vm1210, %v1400, 0
  %1435 = vmatprep.subr.bf16.mxu0 0
  %1436 = vmatpush1.bf16.msra.mxu0 %v1433
  %1437 = vmatprep.subr.bf16.mxu0 0
  %1438 = vmatpush1.bf16.msra.mxu0 0
  %1439 = vmatprep.subr.bf16.mxu0 0
  %1440 = vmatpush1.bf16.msra.mxu0 0
  %1441 = vmatprep.subr.bf16.mxu0 0
  %1442 = vmatpush1.bf16.msra.mxu0 0
  %1443 = vmatprep.subr.bf16.mxu0 0
  %1444 = vmatpush1.bf16.msra.mxu0 0
  %1445 = vmatprep.subr.bf16.mxu0 0
  %1446 = vmatpush1.bf16.msra.mxu0 0
  %1447 = vmatprep.subr.bf16.mxu0 0
  %1448 = vmatpush1.bf16.msra.mxu0 0
  %1449 = vmatprep.subr.bf16.mxu0 0
  %1450 = vmatpush1.bf16.msra.mxu0 0
  %1451 = vmatprep.subr.bf16.mxu0 0
  %1452 = vmatpush1.bf16.msra.mxu0 0
  %1453 = vmatprep.subr.bf16.mxu0 0
  %1454 = vmatpush1.bf16.msra.mxu0 0
  %1455 = vmatprep.subr.bf16.mxu0 0
  %1456 = vmatpush1.bf16.msra.mxu0 0
  %1457 = vmatprep.subr.bf16.mxu0 0
  %1458 = vmatpush1.bf16.msra.mxu0 0
  %1459 = vmatprep.subr.bf16.mxu0 0
  %1460 = vmatpush1.bf16.msra.mxu0 0
  %1461 = vmatprep.subr.bf16.mxu0 0
  %1462 = vmatpush1.bf16.msra.mxu0 0
  %1463 = vmatprep.subr.bf16.mxu0 0
  %1464 = vmatpush1.bf16.msra.mxu0 0
  %1465 = vmatprep.subr.bf16.mxu0 0
  %1466 = vmatpush1.bf16.msra.mxu0 0
  %1467 = vmatprep.mubr.bf16.mxu0 0
  %1468 = vmatmul.mubr.bf16.gmra.mrb[0].mxu0 %v1409
  %v1469 = vpop.f32.mrb[0].mxu0
  %v1470 = vadd.f32 %v1406, %v1469
  %v1471 = vpop.f32.mrb[0].mxu0
  %v1472 = vpop.f32.mrb[0].mxu0
  %v1473 = vadd.f32 %v1406, %v1472
  %v1474 = vpop.f32.mrb[0].mxu0
  %1475 = vmatprep.mubr.bf16.mxu0 0
  %1476 = vmatmul.mubr.bf16.gmra.mrb[0].mxu0 %v1412
  %v1477 = vpop.f32.mrb[0].mxu0
  %v1478 = vadd.f32 %v1406, %v1477
  %v1479 = vpop.f32.mrb[0].mxu0
  %v1480 = vpop.f32.mrb[0].mxu0
  %v1481 = vadd.f32 %v1406, %v1480
  %v1482 = vpop.f32.mrb[0].mxu0
  %1483 = vmatprep.mubr.bf16.mxu0 0
  %1484 = vmatmul.mubr.bf16.gmra.mrb[0].mxu0 %v1415
  %v1485 = vpop.f32.mrb[0].mxu0
  %v1486 = vadd.f32 %v1406, %v1485
  %v1487 = vpop.f32.mrb[0].mxu0
  %v1488 = vpop.f32.mrb[0].mxu0
  %v1489 = vadd.f32 %v1406, %v1488
  %v1490 = vpop.f32.mrb[0].mxu0
  %1491 = vmatprep.mubr.bf16.mxu0 0
  %1492 = vmatmul.mubr.bf16.gmra.mrb[0].mxu0 %v1418
  %v1493 = vpop.f32.mrb[0].mxu0
  %v1494 = vadd.f32 %v1406, %v1493
  %v1495 = vpop.f32.mrb[0].mxu0
  %v1496 = vpop.f32.mrb[0].mxu0
  %v1497 = vadd.f32 %v1406, %v1496
  %v1498 = vpop.f32.mrb[0].mxu0
  %1499 = vmatprep.mubr.bf16.mxu0 0
  %1500 = vmatmul.mubr.bf16.gmra.mrb[0].mxu0 %v1421
  %v1501 = vpop.f32.mrb[0].mxu0
  %v1502 = vadd.f32 %v1406, %v1501
  %v1503 = vpop.f32.mrb[0].mxu0
  %v1504 = vpop.f32.mrb[0].mxu0
  %v1505 = vadd.f32 %v1406, %v1504
  %v1506 = vpop.f32.mrb[0].mxu0
  %1507 = vmatprep.mubr.bf16.mxu0 0
  %1508 = vmatmul.mubr.bf16.gmra.mrb[0].mxu0 %v1424
  %v1509 = vpop.f32.mrb[0].mxu0
  %v1510 = vadd.f32 %v1406, %v1509
  %v1511 = vpop.f32.mrb[0].mxu0
  %v1512 = vpop.f32.mrb[0].mxu0
  %v1513 = vadd.f32 %v1406, %v1512
  %v1514 = vpop.f32.mrb[0].mxu0
  %1515 = vmatprep.mubr.bf16.mxu0 0
  %1516 = vmatmul.mubr.bf16.gmra.mrb[0].mxu0 %v1427
  %v1517 = vpop.f32.mrb[0].mxu0
  %v1518 = vadd.f32 %v1406, %v1517
  %v1519 = vpop.f32.mrb[0].mxu0
  %v1520 = vpop.f32.mrb[0].mxu0
  %v1521 = vadd.f32 %v1406, %v1520
  %v1522 = vpop.f32.mrb[0].mxu0
  %1523 = vmatprep.mubr.bf16.mxu0 0
  %1524 = vmatmul.mubr.bf16.gmra.mrb[0].mxu0 %v1430
  %v1525 = vpop.f32.mrb[0].mxu0
  %v1526 = vadd.f32 %v1406, %v1525
  %v1527 = vpop.f32.mrb[0].mxu0
  %v1528 = vpop.f32.mrb[0].mxu0
  %v1529 = vadd.f32 %v1406, %v1528
  %v1530 = vpop.f32.mrb[0].mxu0
  %1531 = vdwg.mxu0
  %v1532 = vtanh.pop %v1470
  %v1533 = vtanh.pop %v1473
  %v1534 = vtanh.pop %v1478
  %v1535 = vtanh.pop %v1481
  %v1536 = vtanh.pop %v1486
  %v1537 = vtanh.pop %v1489
  %v1538 = vtanh.pop %v1494
  %v1539 = vtanh.pop %v1497
  %v1540 = vtanh.pop %v1502
  %v1541 = vtanh.pop %v1505
  %v1542 = vtanh.pop %v1510
  %v1543 = vtanh.pop %v1513
  %v1544 = vtanh.pop %v1518
  %v1545 = vtanh.pop %v1521
  %v1546 = vtanh.pop %v1526
  %v1547 = vtanh.pop %v1529
  %s1548 = scalar_lea.vmem %s10, 128
  %1549 = vst.msk [vmem:[%s1548] sm:$0xff] %vm1327, %v1532
  %1550 = vst.msk [vmem:[%s1548 + $0x8] sm:$0xff] %vm1327, %v1533
  %1551 = vst.msk [vmem:[%s1548 + $0x10] sm:$0xff] %vm1327, %v1534
  %1552 = vst.msk [vmem:[%s1548 + $0x18] sm:$0xff] %vm1327, %v1535
  %1553 = vst.msk [vmem:[%s1548 + $0x20] sm:$0xff] %vm1327, %v1536
  %1554 = vst.msk [vmem:[%s1548 + $0x28] sm:$0xff] %vm1327, %v1537
  %1555 = vst.msk [vmem:[%s1548 + $0x30] sm:$0xff] %vm1327, %v1538
  %1556 = vst.msk [vmem:[%s1548 + $0x38] sm:$0xff] %vm1327, %v1539
  %1557 = vst.msk [vmem:[%s1548 + $0x40] sm:$0xff] %vm1327, %v1540
  %1558 = vst.msk [vmem:[%s1548 + $0x48] sm:$0xff] %vm1327, %v1541
  %1559 = vst.msk [vmem:[%s1548 + $0x50] sm:$0xff] %vm1327, %v1542
  %1560 = vst.msk [vmem:[%s1548 + $0x58] sm:$0xff] %vm1327, %v1543
  %1561 = vst.msk [vmem:[%s1548 + $0x60] sm:$0xff] %vm1327, %v1544
  %1562 = vst.msk [vmem:[%s1548 + $0x68] sm:$0xff] %vm1327, %v1545
  %1563 = vst.msk [vmem:[%s1548 + $0x70] sm:$0xff] %vm1327, %v1546
  %1564 = vst.msk [vmem:[%s1548 + $0x78] sm:$0xff] %vm1327, %v1547
  %v1565 = vmul.f32 %v471, %v1114
  %v1566 = vmul.f32 %v474, %v1114
  %v1567 = vmul.f32 %v479, %v1114
  %v1568 = vmul.f32 %v482, %v1114
  %v1569 = vmul.f32 %v487, %v1114
  %v1570 = vmul.f32 %v490, %v1114
  %v1571 = vmul.f32 %v495, %v1114
  %v1572 = vmul.f32 %v498, %v1114
  %v1573 = vmul.f32 %v503, %v1114
  %v1574 = vmul.f32 %v506, %v1114
  %v1575 = vmul.f32 %v511, %v1114
  %v1576 = vmul.f32 %v514, %v1114
  %v1577 = vmul.f32 %v519, %v1114
  %v1578 = vmul.f32 %v522, %v1114
  %v1579 = vmul.f32 %v527, %v1114
  %v1580 = vmul.f32 %v530, %v1114
  %v1581 = vadd.f32 %v1565, %v1136
  %v1582 = vadd.f32 %v1566, %v1136
  %v1583 = vadd.f32 %v1567, %v1136
  %v1584 = vadd.f32 %v1568, %v1136
  %v1585 = vadd.f32 %v1569, %v1136
  %v1586 = vadd.f32 %v1570, %v1136
  %v1587 = vadd.f32 %v1571, %v1136
  %v1588 = vadd.f32 %v1572, %v1136
  %v1589 = vadd.f32 %v1573, %v1136
  %v1590 = vadd.f32 %v1574, %v1136
  %v1591 = vadd.f32 %v1575, %v1136
  %v1592 = vadd.f32 %v1576, %v1136
  %v1593 = vadd.f32 %v1577, %v1136
  %v1594 = vadd.f32 %v1578, %v1136
  %v1595 = vadd.f32 %v1579, %v1136
  %v1596 = vadd.f32 %v1580, %v1136
  %v1597 = vmax.f32 %v1581, 0.0
  %v1598 = vmax.f32 %v1582, 0.0
  %v1599 = vmax.f32 %v1583, 0.0
  %v1600 = vmax.f32 %v1584, 0.0
  %v1601 = vmax.f32 %v1585, 0.0
  %v1602 = vmax.f32 %v1586, 0.0
  %v1603 = vmax.f32 %v1587, 0.0
  %v1604 = vmax.f32 %v1588, 0.0
  %v1605 = vmax.f32 %v1589, 0.0
  %v1606 = vmax.f32 %v1590, 0.0
  %v1607 = vmax.f32 %v1591, 0.0
  %v1608 = vmax.f32 %v1592, 0.0
  %v1609 = vmax.f32 %v1593, 0.0
  %v1610 = vmax.f32 %v1594, 0.0
  %v1611 = vmax.f32 %v1595, 0.0
  %v1612 = vmax.f32 %v1596, 0.0
  %v1613 = vpack.c.bf16 %v1598, %v1597
  %v1614 = vpack.c.bf16 %v1600, %v1599
  %v1615 = vpack.c.bf16 %v1602, %v1601
  %v1616 = vpack.c.bf16 %v1604, %v1603
  %v1617 = vpack.c.bf16 %v1606, %v1605
  %v1618 = vpack.c.bf16 %v1608, %v1607
  %v1619 = vpack.c.bf16 %v1610, %v1609
  %v1620 = vpack.c.bf16 %v1612, %v1611
  %v1621 = vld [vmem:[%s8] sm:$0x3]
  %v1622 = vld [vmem:[%s9] sm:$0x1]
  %v1624 = vlaneseq
  %v1625 = vshrl.u32 %v1624, 7
  %v1626 = vsub.s32 0, %v1625
  %v1627 = vrot.slane %v1622, %v1626
  %v1630 = vsel %vm669, %v1613, 0
  %v1633 = vsel %vm669, %v1614, 0
  %v1636 = vsel %vm669, %v1615, 0
  %v1639 = vsel %vm669, %v1616, 0
  %v1642 = vsel %vm669, %v1617, 0
  %v1645 = vsel %vm669, %v1618, 0
  %v1648 = vsel %vm669, %v1619, 0
  %v1651 = vsel %vm669, %v1620, 0
  %v1654 = vsel %vm1210, %v1621, 0
  %1656 = vmatprep.subr.bf16.mxu0 0
  %1657 = vmatpush1.bf16.msra.mxu0 %v1654
  %1658 = vmatprep.subr.bf16.mxu0 0
  %1659 = vmatpush1.bf16.msra.mxu0 0
  %1660 = vmatprep.subr.bf16.mxu0 0
  %1661 = vmatpush1.bf16.msra.mxu0 0
  %1662 = vmatprep.subr.bf16.mxu0 0
  %1663 = vmatpush1.bf16.msra.mxu0 0
  %1664 = vmatprep.subr.bf16.mxu0 0
  %1665 = vmatpush1.bf16.msra.mxu0 0
  %1666 = vmatprep.subr.bf16.mxu0 0
  %1667 = vmatpush1.bf16.msra.mxu0 0
  %1668 = vmatprep.subr.bf16.mxu0 0
  %1669 = vmatpush1.bf16.msra.mxu0 0
  %1670 = vmatprep.subr.bf16.mxu0 0
  %1671 = vmatpush1.bf16.msra.mxu0 0
  %1672 = vmatprep.subr.bf16.mxu0 0
  %1673 = vmatpush1.bf16.msra.mxu0 0
  %1674 = vmatprep.subr.bf16.mxu0 0
  %1675 = vmatpush1.bf16.msra.mxu0 0
  %1676 = vmatprep.subr.bf16.mxu0 0
  %1677 = vmatpush1.bf16.msra.mxu0 0
  %1678 = vmatprep.subr.bf16.mxu0 0
  %1679 = vmatpush1.bf16.msra.mxu0 0
  %1680 = vmatprep.subr.bf16.mxu0 0
  %1681 = vmatpush1.bf16.msra.mxu0 0
  %1682 = vmatprep.subr.bf16.mxu0 0
  %1683 = vmatpush1.bf16.msra.mxu0 0
  %1684 = vmatprep.subr.bf16.mxu0 0
  %1685 = vmatpush1.bf16.msra.mxu0 0
  %1686 = vmatprep.subr.bf16.mxu0 0
  %1687 = vmatpush1.bf16.msra.mxu0 0
  %1688 = vmatprep.mubr.bf16.mxu0 0
  %1689 = vmatmul.mubr.bf16.gmra.mrb[0].mxu0 %v1630
  %v1690 = vpop.f32.mrb[0].mxu0
  %v1691 = vadd.f32 %v1627, %v1690
  %v1692 = vpop.f32.mrb[0].mxu0
  %v1693 = vpop.f32.mrb[0].mxu0
  %v1694 = vadd.f32 %v1627, %v1693
  %v1695 = vpop.f32.mrb[0].mxu0
  %1696 = vmatprep.mubr.bf16.mxu0 0
  %1697 = vmatmul.mubr.bf16.gmra.mrb[0].mxu0 %v1633
  %v1698 = vpop.f32.mrb[0].mxu0
  %v1699 = vadd.f32 %v1627, %v1698
  %v1700 = vpop.f32.mrb[0].mxu0
  %v1701 = vpop.f32.mrb[0].mxu0
  %v1702 = vadd.f32 %v1627, %v1701
  %v1703 = vpop.f32.mrb[0].mxu0
  %1704 = vmatprep.mubr.bf16.mxu0 0
  %1705 = vmatmul.mubr.bf16.gmra.mrb[0].mxu0 %v1636
  %v1706 = vpop.f32.mrb[0].mxu0
  %v1707 = vadd.f32 %v1627, %v1706
  %v1708 = vpop.f32.mrb[0].mxu0
  %v1709 = vpop.f32.mrb[0].mxu0
  %v1710 = vadd.f32 %v1627, %v1709
  %v1711 = vpop.f32.mrb[0].mxu0
  %1712 = vmatprep.mubr.bf16.mxu0 0
  %1713 = vmatmul.mubr.bf16.gmra.mrb[0].mxu0 %v1639
  %v1714 = vpop.f32.mrb[0].mxu0
  %v1715 = vadd.f32 %v1627, %v1714
  %v1716 = vpop.f32.mrb[0].mxu0
  %v1717 = vpop.f32.mrb[0].mxu0
  %v1718 = vadd.f32 %v1627, %v1717
  %v1719 = vpop.f32.mrb[0].mxu0
  %1720 = vmatprep.mubr.bf16.mxu0 0
  %1721 = vmatmul.mubr.bf16.gmra.mrb[0].mxu0 %v1642
  %v1722 = vpop.f32.mrb[0].mxu0
  %v1723 = vadd.f32 %v1627, %v1722
  %v1724 = vpop.f32.mrb[0].mxu0
  %v1725 = vpop.f32.mrb[0].mxu0
  %v1726 = vadd.f32 %v1627, %v1725
  %v1727 = vpop.f32.mrb[0].mxu0
  %1728 = vmatprep.mubr.bf16.mxu0 0
  %1729 = vmatmul.mubr.bf16.gmra.mrb[0].mxu0 %v1645
  %v1730 = vpop.f32.mrb[0].mxu0
  %v1731 = vadd.f32 %v1627, %v1730
  %v1732 = vpop.f32.mrb[0].mxu0
  %v1733 = vpop.f32.mrb[0].mxu0
  %v1734 = vadd.f32 %v1627, %v1733
  %v1735 = vpop.f32.mrb[0].mxu0
  %1736 = vmatprep.mubr.bf16.mxu0 0
  %1737 = vmatmul.mubr.bf16.gmra.mrb[0].mxu0 %v1648
  %v1738 = vpop.f32.mrb[0].mxu0
  %v1739 = vadd.f32 %v1627, %v1738
  %v1740 = vpop.f32.mrb[0].mxu0
  %v1741 = vpop.f32.mrb[0].mxu0
  %v1742 = vadd.f32 %v1627, %v1741
  %v1743 = vpop.f32.mrb[0].mxu0
  %1744 = vmatprep.mubr.bf16.mxu0 0
  %1745 = vmatmul.mubr.bf16.gmra.mrb[0].mxu0 %v1651
  %v1746 = vpop.f32.mrb[0].mxu0
  %v1747 = vadd.f32 %v1627, %v1746
  %v1748 = vpop.f32.mrb[0].mxu0
  %v1749 = vpop.f32.mrb[0].mxu0
  %v1750 = vadd.f32 %v1627, %v1749
  %v1751 = vpop.f32.mrb[0].mxu0
  %1752 = vdwg.mxu0
  %v1753 = vtanh.pop %v1691
  %v1754 = vtanh.pop %v1694
  %v1755 = vtanh.pop %v1699
  %v1756 = vtanh.pop %v1702
  %v1757 = vtanh.pop %v1707
  %v1758 = vtanh.pop %v1710
  %v1759 = vtanh.pop %v1715
  %v1760 = vtanh.pop %v1718
  %v1761 = vtanh.pop %v1723
  %v1762 = vtanh.pop %v1726
  %v1763 = vtanh.pop %v1731
  %v1764 = vtanh.pop %v1734
  %v1765 = vtanh.pop %v1739
  %v1766 = vtanh.pop %v1742
  %v1767 = vtanh.pop %v1747
  %v1768 = vtanh.pop %v1750
  %s1769 = scalar_lea.vmem %s10, 256
  %1770 = vst.msk [vmem:[%s1769] sm:$0xff] %vm1327, %v1753
  %1771 = vst.msk [vmem:[%s1769 + $0x8] sm:$0xff] %vm1327, %v1754
  %1772 = vst.msk [vmem:[%s1769 + $0x10] sm:$0xff] %vm1327, %v1755
  %1773 = vst.msk [vmem:[%s1769 + $0x18] sm:$0xff] %vm1327, %v1756
  %1774 = vst.msk [vmem:[%s1769 + $0x20] sm:$0xff] %vm1327, %v1757
  %1775 = vst.msk [vmem:[%s1769 + $0x28] sm:$0xff] %vm1327, %v1758
  %1776 = vst.msk [vmem:[%s1769 + $0x30] sm:$0xff] %vm1327, %v1759
  %1777 = vst.msk [vmem:[%s1769 + $0x38] sm:$0xff] %vm1327, %v1760
  %1778 = vst.msk [vmem:[%s1769 + $0x40] sm:$0xff] %vm1327, %v1761
  %1779 = vst.msk [vmem:[%s1769 + $0x48] sm:$0xff] %vm1327, %v1762
  %1780 = vst.msk [vmem:[%s1769 + $0x50] sm:$0xff] %vm1327, %v1763
  %1781 = vst.msk [vmem:[%s1769 + $0x58] sm:$0xff] %vm1327, %v1764
  %1782 = vst.msk [vmem:[%s1769 + $0x60] sm:$0xff] %vm1327, %v1765
  %1783 = vst.msk [vmem:[%s1769 + $0x68] sm:$0xff] %vm1327, %v1766
  %1784 = vst.msk [vmem:[%s1769 + $0x70] sm:$0xff] %vm1327, %v1767
  %1785 = vst.msk [vmem:[%s1769 + $0x78] sm:$0xff] %vm1327, %v1768
  %v1786 = vmul.f32 %v607, %v1114
  %v1787 = vmul.f32 %v610, %v1114
  %v1788 = vmul.f32 %v615, %v1114
  %v1789 = vmul.f32 %v618, %v1114
  %v1790 = vmul.f32 %v623, %v1114
  %v1791 = vmul.f32 %v626, %v1114
  %v1792 = vmul.f32 %v631, %v1114
  %v1793 = vmul.f32 %v634, %v1114
  %v1794 = vmul.f32 %v639, %v1114
  %v1795 = vmul.f32 %v642, %v1114
  %v1796 = vmul.f32 %v647, %v1114
  %v1797 = vmul.f32 %v650, %v1114
  %v1798 = vmul.f32 %v655, %v1114
  %v1799 = vmul.f32 %v658, %v1114
  %v1800 = vmul.f32 %v663, %v1114
  %v1801 = vmul.f32 %v666, %v1114
  %v1802 = vadd.f32 %v1786, %v1136
  %v1803 = vadd.f32 %v1787, %v1136
  %v1804 = vadd.f32 %v1788, %v1136
  %v1805 = vadd.f32 %v1789, %v1136
  %v1806 = vadd.f32 %v1790, %v1136
  %v1807 = vadd.f32 %v1791, %v1136
  %v1808 = vadd.f32 %v1792, %v1136
  %v1809 = vadd.f32 %v1793, %v1136
  %v1810 = vadd.f32 %v1794, %v1136
  %v1811 = vadd.f32 %v1795, %v1136
  %v1812 = vadd.f32 %v1796, %v1136
  %v1813 = vadd.f32 %v1797, %v1136
  %v1814 = vadd.f32 %v1798, %v1136
  %v1815 = vadd.f32 %v1799, %v1136
  %v1816 = vadd.f32 %v1800, %v1136
  %v1817 = vadd.f32 %v1801, %v1136
  %v1818 = vmax.f32 %v1802, 0.0
  %v1819 = vmax.f32 %v1803, 0.0
  %v1820 = vmax.f32 %v1804, 0.0
  %v1821 = vmax.f32 %v1805, 0.0
  %v1822 = vmax.f32 %v1806, 0.0
  %v1823 = vmax.f32 %v1807, 0.0
  %v1824 = vmax.f32 %v1808, 0.0
  %v1825 = vmax.f32 %v1809, 0.0
  %v1826 = vmax.f32 %v1810, 0.0
  %v1827 = vmax.f32 %v1811, 0.0
  %v1828 = vmax.f32 %v1812, 0.0
  %v1829 = vmax.f32 %v1813, 0.0
  %v1830 = vmax.f32 %v1814, 0.0
  %v1831 = vmax.f32 %v1815, 0.0
  %v1832 = vmax.f32 %v1816, 0.0
  %v1833 = vmax.f32 %v1817, 0.0
  %v1834 = vpack.c.bf16 %v1819, %v1818
  %v1835 = vpack.c.bf16 %v1821, %v1820
  %v1836 = vpack.c.bf16 %v1823, %v1822
  %v1837 = vpack.c.bf16 %v1825, %v1824
  %v1838 = vpack.c.bf16 %v1827, %v1826
  %v1839 = vpack.c.bf16 %v1829, %v1828
  %v1840 = vpack.c.bf16 %v1831, %v1830
  %v1841 = vpack.c.bf16 %v1833, %v1832
  %v1842 = vld [vmem:[%s8] sm:$0x3]
  %v1843 = vld [vmem:[%s9] sm:$0x1]
  %v1845 = vlaneseq
  %v1846 = vshrl.u32 %v1845, 7
  %v1847 = vsub.s32 0, %v1846
  %v1848 = vrot.slane %v1843, %v1847
  %v1851 = vsel %vm669, %v1834, 0
  %v1854 = vsel %vm669, %v1835, 0
  %v1857 = vsel %vm669, %v1836, 0
  %v1860 = vsel %vm669, %v1837, 0
  %v1863 = vsel %vm669, %v1838, 0
  %v1866 = vsel %vm669, %v1839, 0
  %v1869 = vsel %vm669, %v1840, 0
  %v1872 = vsel %vm669, %v1841, 0
  %v1875 = vsel %vm1210, %v1842, 0
  %1877 = vmatprep.subr.bf16.mxu0 0
  %1878 = vmatpush1.bf16.msra.mxu0 %v1875
  %1879 = vmatprep.subr.bf16.mxu0 0
  %1880 = vmatpush1.bf16.msra.mxu0 0
  %1881 = vmatprep.subr.bf16.mxu0 0
  %1882 = vmatpush1.bf16.msra.mxu0 0
  %1883 = vmatprep.subr.bf16.mxu0 0
  %1884 = vmatpush1.bf16.msra.mxu0 0
  %1885 = vmatprep.subr.bf16.mxu0 0
  %1886 = vmatpush1.bf16.msra.mxu0 0
  %1887 = vmatprep.subr.bf16.mxu0 0
  %1888 = vmatpush1.bf16.msra.mxu0 0
  %1889 = vmatprep.subr.bf16.mxu0 0
  %1890 = vmatpush1.bf16.msra.mxu0 0
  %1891 = vmatprep.subr.bf16.mxu0 0
  %1892 = vmatpush1.bf16.msra.mxu0 0
  %1893 = vmatprep.subr.bf16.mxu0 0
  %1894 = vmatpush1.bf16.msra.mxu0 0
  %1895 = vmatprep.subr.bf16.mxu0 0
  %1896 = vmatpush1.bf16.msra.mxu0 0
  %1897 = vmatprep.subr.bf16.mxu0 0
  %1898 = vmatpush1.bf16.msra.mxu0 0
  %1899 = vmatprep.subr.bf16.mxu0 0
  %1900 = vmatpush1.bf16.msra.mxu0 0
  %1901 = vmatprep.subr.bf16.mxu0 0
  %1902 = vmatpush1.bf16.msra.mxu0 0
  %1903 = vmatprep.subr.bf16.mxu0 0
  %1904 = vmatpush1.bf16.msra.mxu0 0
  %1905 = vmatprep.subr.bf16.mxu0 0
  %1906 = vmatpush1.bf16.msra.mxu0 0
  %1907 = vmatprep.subr.bf16.mxu0 0
  %1908 = vmatpush1.bf16.msra.mxu0 0
  %1909 = vmatprep.mubr.bf16.mxu0 0
  %1910 = vmatmul.mubr.bf16.gmra.mrb[0].mxu0 %v1851
  %v1911 = vpop.f32.mrb[0].mxu0
  %v1912 = vadd.f32 %v1848, %v1911
  %v1913 = vpop.f32.mrb[0].mxu0
  %v1914 = vpop.f32.mrb[0].mxu0
  %v1915 = vadd.f32 %v1848, %v1914
  %v1916 = vpop.f32.mrb[0].mxu0
  %1917 = vmatprep.mubr.bf16.mxu0 0
  %1918 = vmatmul.mubr.bf16.gmra.mrb[0].mxu0 %v1854
  %v1919 = vpop.f32.mrb[0].mxu0
  %v1920 = vadd.f32 %v1848, %v1919
  %v1921 = vpop.f32.mrb[0].mxu0
  %v1922 = vpop.f32.mrb[0].mxu0
  %v1923 = vadd.f32 %v1848, %v1922
  %v1924 = vpop.f32.mrb[0].mxu0
  %1925 = vmatprep.mubr.bf16.mxu0 0
  %1926 = vmatmul.mubr.bf16.gmra.mrb[0].mxu0 %v1857
  %v1927 = vpop.f32.mrb[0].mxu0
  %v1928 = vadd.f32 %v1848, %v1927
  %v1929 = vpop.f32.mrb[0].mxu0
  %v1930 = vpop.f32.mrb[0].mxu0
  %v1931 = vadd.f32 %v1848, %v1930
  %v1932 = vpop.f32.mrb[0].mxu0
  %1933 = vmatprep.mubr.bf16.mxu0 0
  %1934 = vmatmul.mubr.bf16.gmra.mrb[0].mxu0 %v1860
  %v1935 = vpop.f32.mrb[0].mxu0
  %v1936 = vadd.f32 %v1848, %v1935
  %v1937 = vpop.f32.mrb[0].mxu0
  %v1938 = vpop.f32.mrb[0].mxu0
  %v1939 = vadd.f32 %v1848, %v1938
  %v1940 = vpop.f32.mrb[0].mxu0
  %1941 = vmatprep.mubr.bf16.mxu0 0
  %1942 = vmatmul.mubr.bf16.gmra.mrb[0].mxu0 %v1863
  %v1943 = vpop.f32.mrb[0].mxu0
  %v1944 = vadd.f32 %v1848, %v1943
  %v1945 = vpop.f32.mrb[0].mxu0
  %v1946 = vpop.f32.mrb[0].mxu0
  %v1947 = vadd.f32 %v1848, %v1946
  %v1948 = vpop.f32.mrb[0].mxu0
  %1949 = vmatprep.mubr.bf16.mxu0 0
  %1950 = vmatmul.mubr.bf16.gmra.mrb[0].mxu0 %v1866
  %v1951 = vpop.f32.mrb[0].mxu0
  %v1952 = vadd.f32 %v1848, %v1951
  %v1953 = vpop.f32.mrb[0].mxu0
  %v1954 = vpop.f32.mrb[0].mxu0
  %v1955 = vadd.f32 %v1848, %v1954
  %v1956 = vpop.f32.mrb[0].mxu0
  %1957 = vmatprep.mubr.bf16.mxu0 0
  %1958 = vmatmul.mubr.bf16.gmra.mrb[0].mxu0 %v1869
  %v1959 = vpop.f32.mrb[0].mxu0
  %v1960 = vadd.f32 %v1848, %v1959
  %v1961 = vpop.f32.mrb[0].mxu0
  %v1962 = vpop.f32.mrb[0].mxu0
  %v1963 = vadd.f32 %v1848, %v1962
  %v1964 = vpop.f32.mrb[0].mxu0
  %1965 = vmatprep.mubr.bf16.mxu0 0
  %1966 = vmatmul.mubr.bf16.gmra.mrb[0].mxu0 %v1872
  %v1967 = vpop.f32.mrb[0].mxu0
  %v1968 = vadd.f32 %v1848, %v1967
  %v1969 = vpop.f32.mrb[0].mxu0
  %v1970 = vpop.f32.mrb[0].mxu0
  %v1971 = vadd.f32 %v1848, %v1970
  %v1972 = vpop.f32.mrb[0].mxu0
  %1973 = vdwg.mxu0
  %v1974 = vtanh.pop %v1912
  %v1975 = vtanh.pop %v1915
  %v1976 = vtanh.pop %v1920
  %v1977 = vtanh.pop %v1923
  %v1978 = vtanh.pop %v1928
  %v1979 = vtanh.pop %v1931
  %v1980 = vtanh.pop %v1936
  %v1981 = vtanh.pop %v1939
  %v1982 = vtanh.pop %v1944
  %v1983 = vtanh.pop %v1947
  %v1984 = vtanh.pop %v1952
  %v1985 = vtanh.pop %v1955
  %v1986 = vtanh.pop %v1960
  %v1987 = vtanh.pop %v1963
  %v1988 = vtanh.pop %v1968
  %v1989 = vtanh.pop %v1971
  %s1990 = scalar_lea.vmem %s10, 384
  %1991 = vst.msk [vmem:[%s1990] sm:$0xff] %vm1327, %v1974
  %1992 = vst.msk [vmem:[%s1990 + $0x8] sm:$0xff] %vm1327, %v1975
  %1993 = vst.msk [vmem:[%s1990 + $0x10] sm:$0xff] %vm1327, %v1976
  %1994 = vst.msk [vmem:[%s1990 + $0x18] sm:$0xff] %vm1327, %v1977
  %1995 = vst.msk [vmem:[%s1990 + $0x20] sm:$0xff] %vm1327, %v1978
  %1996 = vst.msk [vmem:[%s1990 + $0x28] sm:$0xff] %vm1327, %v1979
  %1997 = vst.msk [vmem:[%s1990 + $0x30] sm:$0xff] %vm1327, %v1980
  %1998 = vst.msk [vmem:[%s1990 + $0x38] sm:$0xff] %vm1327, %v1981
  %1999 = vst.msk [vmem:[%s1990 + $0x40] sm:$0xff] %vm1327, %v1982
  %2000 = vst.msk [vmem:[%s1990 + $0x48] sm:$0xff] %vm1327, %v1983
  %2001 = vst.msk [vmem:[%s1990 + $0x50] sm:$0xff] %vm1327, %v1984
  %2002 = vst.msk [vmem:[%s1990 + $0x58] sm:$0xff] %vm1327, %v1985
  %2003 = vst.msk [vmem:[%s1990 + $0x60] sm:$0xff] %vm1327, %v1986
  %2004 = vst.msk [vmem:[%s1990 + $0x68] sm:$0xff] %vm1327, %v1987
  %2005 = vst.msk [vmem:[%s1990 + $0x70] sm:$0xff] %vm1327, %v1988
  %2006 = vst.msk [vmem:[%s1990 + $0x78] sm:$0xff] %vm1327, %v1989
  // Predicated region
  $region42: #{vae_forward.13} parent=0 // pred_check
    _
  $region43: #{vae_forward.13} parent=0 // pred_check_branch
    %2008 = sbr.rel (0) target = $region45
  $region44: #{vae_forward.13} parent=0 // pred_region
    _
  $region45: #{vae_forward.13} parent=0 // pred_fallthru
    _
  // Predicated region
  $region46: #{vae_forward.13} parent=0 // pred_check
    _
  $region47: #{vae_forward.13} parent=0 // pred_check_branch
    %2010 = sbr.rel (0) target = $region49
  $region48: #{vae_forward.13} parent=0 // pred_region
    _
  $region49: #{vae_forward.13} parent=0 // pred_fallthru
    _

</llo_original>
